<compile_context>
chip_gen: v7x
topology: tpu7x:2x2x1
jax: 0.10.0
libtpu: 0.0.40
codegen_flags: <defaults>
</compile_context>

<pallas_src>
import functools

import jax
import jax.numpy as jnp
import numpy as np
from jax.experimental import pallas as pl
from jax.experimental.pallas import tpu as pltpu


# ----------------------------------------------------------------------------
# Fused kernel: cheby-conv1 + ReLU + pool4 + cheby-conv2 + ReLU + pool4
#               + flatten + fc1 + ReLU + dropout-mask + fc2
# ----------------------------------------------------------------------------
def _fused_forward_kernel(x_ref, L0_ref, L2_ref,
                          w1_ref, b1_ref, w2_ref, b2_ref,
                          wfc1_ref, bfc1_ref, mask_ref, wfc2_ref, bfc2_ref,
                          o_ref, *, B, K1, K2, F1, F2, pool):
    # x_ref    : (B, V, Fin)
    # L0_ref   : (V, V)            rescaled Laplacian, level 0
    # L2_ref   : (V//4, V//4)      rescaled Laplacian, level 2 (coarsened)
    # w1_ref   : (K1*B*Fin, B*F1)  batch-block-diagonal conv1 weight
    # w2_ref   : (K2*B*F1, B*F2)   batch-block-diagonal conv2 weight
    # b1_ref/b2_ref : (1, B*F)     biases tiled over batch
    # wfc1_ref : (FC1Fin, FC1_F), wfc2_ref : (FC1_F, FC2_F)
    # mask_ref : (B, FC1_F)        dropout mask (scaled 1/(1-d))
    # o_ref    : (B, FC2_F)

    def cheby_basis(L, X0, K):
        # Batch-folded Chebyshev recursion: X0 is (V, B*Fin); one shared chain.
        terms = [X0]
        if K > 1:
            X1 = jnp.dot(L, X0, preferred_element_type=jnp.float32)
            terms.append(X1)
            Xm2, Xm1 = X0, X1
            for _ in range(2, K):
                X2 = 2.0 * jnp.dot(L, Xm1,
                                   preferred_element_type=jnp.float32) - Xm2
                terms.append(X2)
                Xm2, Xm1 = Xm1, X2
        # (V, K*B*Fin), column layout = k-major, then batch, then fin.
        return jnp.concatenate(terms, axis=1)

    def max_pool_rows(y, p):
        # graph_max_pool(p): max over consecutive groups of p vertices (rows).
        v_out = y.shape[0] // p
        return jnp.concatenate(
            [jnp.max(y[v * p:(v + 1) * p, :], axis=0, keepdims=True)
             for v in range(v_out)], axis=0)

    # ---- layer 1 ------------------------------------------------------------
    x = x_ref[...]                                              # (B, V, Fin)
    x0 = jnp.concatenate([x[b] for b in range(B)], axis=1)      # (V, B*Fin)
    basis1 = cheby_basis(L0_ref[...], x0, K1)                   # (V, K1*B*Fin)
    y1 = jnp.dot(basis1, w1_ref[...], preferred_element_type=jnp.float32)
    y1 = jnp.maximum(y1 + b1_ref[...], 0.0)                     # (V, B*F1)
    h1 = max_pool_rows(y1, pool)                                # (V/4, B*F1)

    # ---- layer 2 ------------------------------------------------------------
    basis2 = cheby_basis(L2_ref[...], h1, K2)                   # (V/4, K2*B*F1)
    y2 = jnp.dot(basis2, w2_ref[...], preferred_element_type=jnp.float32)
    y2 = jnp.maximum(y2 + b2_ref[...], 0.0)                     # (V/4, B*F2)
    h2 = max_pool_rows(y2, pool)                                # (V/16, B*F2)

    # ---- flatten to (B, FC1Fin): x_fc[b, v*F2 + f] = h2[v, b*F2 + f] --------
    v3 = h2.shape[0]
    rows = []
    for b in range(B):
        rows.append(jnp.concatenate(
            [h2[v:v + 1, b * F2:(b + 1) * F2] for v in range(v3)], axis=1))
    x_fc = jnp.concatenate(rows, axis=0)                        # (B, FC1Fin)

    # ---- fc1 -> ReLU -> dropout mask -> fc2 ---------------------------------
    h = jnp.dot(x_fc, wfc1_ref[...], preferred_element_type=jnp.float32)
    h = jnp.maximum(h + bfc1_ref[...], 0.0)
    h = h * mask_ref[...]
    o_ref[...] = jnp.dot(h, wfc2_ref[...],
                         preferred_element_type=jnp.float32) + bfc2_ref[...]


def _full_spec(shape):
    nd = len(shape)
    return pl.BlockSpec(tuple(shape), lambda i, _nd=nd: (0,) * _nd)


def fused_forward(kp, x, L0, L2, mask):
    B, V, Fin = x.shape
    K1, F1 = kp["CL1_K"], kp["CL1_F"]
    K2, F2 = kp["CL2_K"], kp["CL2_F"]
    FC2F = kp["wfc2_t"].shape[1]
    args = (x, L0, L2,
            kp["w1_eff"], kp["b1_fold"], kp["w2_eff"], kp["b2_fold"],
            kp["wfc1_t"], kp["bfc1"], mask, kp["wfc2_t"], kp["bfc2"])
    kernel = functools.partial(_fused_forward_kernel, B=B, K1=K1, K2=K2,
                               F1=F1, F2=F2, pool=4)
    return pl.pallas_call(
        kernel,
        out_shape=jax.ShapeDtypeStruct((B, FC2F), jnp.float32),
        grid=(1,),
        in_specs=[_full_spec(a.shape) for a in args],
        out_specs=_full_spec((B, FC2F)),
        compiler_params=pltpu.CompilerParams(dimension_semantics=("arbitrary",)),
    )(*args)


# ----------------------------------------------------------------------------
# Parameters (deterministic, mirrors Graph_ConvNet_LeNet5.__init__)
# ----------------------------------------------------------------------------
def init_params(key, net_parameters):
    D, DFeat, CL1_F, CL1_K, CL2_F, CL2_K, FC1_F, FC2_F = net_parameters
    FC1Fin = CL2_F * (D // 16)
    ks = jax.random.split(key, 4)

    def uni(k, shape, fin, fout):
        scale = float(np.sqrt(2.0 / (fin + fout)))
        return jax.random.uniform(k, shape, jnp.float32, -scale, scale)

    return {
        "cl1_w": uni(ks[0], (CL1_F, CL1_K * DFeat), CL1_K, CL1_F),
        "cl1_b": jnp.zeros((CL1_F,), jnp.float32),
        "cl2_w": uni(ks[1], (CL2_F, CL2_K * CL1_F), CL2_K * CL1_F, CL2_F),
        "cl2_b": jnp.zeros((CL2_F,), jnp.float32),
        "fc1_w": uni(ks[2], (FC1_F, FC1Fin), FC1Fin, FC1_F),
        "fc1_b": jnp.zeros((FC1_F,), jnp.float32),
        "fc2_w": uni(ks[3], (FC2_F, FC1_F), FC1_F, FC2_F),
        "fc2_b": jnp.zeros((FC2_F,), jnp.float32),
        "CL1_K": CL1_K, "CL1_F": CL1_F, "CL2_K": CL2_K, "CL2_F": CL2_F,
        "FC1Fin": FC1Fin,
    }


def prepare_kernel_params(params, B):
    """One-time relayout of torch-layout parameters into kernel layouts."""
    K1, F1 = params["CL1_K"], params["CL1_F"]
    K2, F2 = params["CL2_K"], params["CL2_F"]
    Fin1 = params["cl1_w"].shape[1] // K1
    Fin2 = params["cl2_w"].shape[1] // K2          # == CL1_F

    def w_eff(W, K, Fin, Fout):
        # torch Linear weight (Fout, K*Fin) with input index fin*K + k.
        # Produce the batch-block-diagonal (K*B*Fin, B*Fout) projection matrix
        # matching the batch-folded basis layout k-major / b / fin.
        w_kf = jnp.transpose(W.T.reshape(Fin, K, Fout), (1, 0, 2))   # (K,Fin,Fout)
        eye = jnp.eye(B, dtype=W.dtype)
        w = w_kf[:, None, :, None, :] * eye[None, :, None, :, None]  # (K,B,Fin,B,Fout)
        return w.reshape(K * B * Fin, B * Fout)

    def fold_bias(b):
        return jnp.tile(b, B).reshape(1, B * b.shape[0])

    return {
        "w1_eff": w_eff(params["cl1_w"], K1, Fin1, F1),
        "b1_fold": fold_bias(params["cl1_b"]),
        "w2_eff": w_eff(params["cl2_w"], K2, Fin2, F2),
        "b2_fold": fold_bias(params["cl2_b"]),
        "wfc1_t": params["fc1_w"].T,
        "bfc1": params["fc1_b"].reshape(1, -1),
        "wfc2_t": params["fc2_w"].T,
        "bfc2": params["fc2_b"].reshape(1, -1),
        "CL1_K": K1, "CL1_F": F1, "CL2_K": K2, "CL2_F": F2,
        "FC1Fin": params["FC1Fin"],
    }


# ----------------------------------------------------------------------------
# Full forward (same signature shape as torch: forward(x, d, L, lmax))
# ----------------------------------------------------------------------------
def graph_convnet_forward(kernel_params, x, d, L, lmax, dropout_key):
    del lmax  # graph_conv_cheby ignores lmax; kept for API parity with torch.
    B = x.shape[0]
    f1 = kernel_params["wfc1_t"].shape[1]
    if d > 0.0:
        keep = jax.random.bernoulli(dropout_key, 1.0 - d, (B, f1))
        mask = keep.astype(jnp.float32) / (1.0 - d)
    else:
        mask = jnp.ones((B, f1), jnp.float32)
    return fused_forward(kernel_params, x, L[0], L[2], mask)


# ----------------------------------------------------------------------------
# Pure-JAX reference (literal transcription of the torch forward) for checking
# ----------------------------------------------------------------------------
def _cheby_ref(x, L, W, b, K):
    B, V, Fin = x.shape
    Fout = W.shape[0]
    x0 = jnp.transpose(x, (1, 2, 0)).reshape(V, Fin * B)
    terms = [x0]
    if K > 1:
        x1 = L @ x0
        terms.append(x1)
        for _ in range(2, K):
            x2 = 2.0 * (L @ x1) - x0
            terms.append(x2)
            x0, x1 = x1, x2
    xs = jnp.stack(terms, axis=0).reshape(K, V, Fin, B)
    xs = jnp.transpose(xs, (3, 1, 2, 0)).reshape(B * V, Fin * K)
    return (xs @ W.T + b).reshape(B, V, Fout)


def _pool_ref(x, p):
    B, V, F = x.shape
    return jnp.max(x.reshape(B, V // p, p, F), axis=2)


def reference_forward(params, x, d, L, lmax, dropout_key):
    p = params
    x = jax.nn.relu(_cheby_ref(x, L[0], p["cl1_w"], p["cl1_b"], p["CL1_K"]))
    x = _pool_ref(x, 4)
    x = jax.nn.relu(_cheby_ref(x, L[2], p["cl2_w"], p["cl2_b"], p["CL2_K"]))
    x = _pool_ref(x, 4)
    x = x.reshape(-1, p["FC1Fin"])
    x = jax.nn.relu(x @ p["fc1_w"].T + p["fc1_b"])
    if d > 0.0:
        keep = jax.random.bernoulli(dropout_key, 1.0 - d, x.shape)
        x = x * keep.astype(jnp.float32) / (1.0 - d)
    return x @ p["fc2_w"].T + p["fc2_b"]


def make_rescaled_laplacian(key, n):
    """Synthetic rescaled normalized Laplacian (eigenvalues in [-1, 1])."""
    a = jax.random.uniform(key, (n, n), jnp.float32)
    w = 0.5 * (a + a.T)
    w = w - jnp.diag(jnp.diag(w))
    d_inv_sqrt = 1.0 / jnp.sqrt(jnp.sum(w, axis=1))
    lap = jnp.eye(n, dtype=jnp.float32) - (d_inv_sqrt[:, None] * w) * d_inv_sqrt[None, :]
    return (lap - jnp.eye(n, dtype=jnp.float32)).astype(jnp.float32)


if __name__ == "__main__":
    # Shapes implied by the module's script: D=32 vertices, DFeat=2 features.
    D, DFeat = 32, 2
    CL1_F, CL1_K, CL2_F, CL2_K, FC1_F, FC2_F = 8, 25, 16, 25, 8, 2
    B = 2
    net_parameters = [D, DFeat, CL1_F, CL1_K, CL2_F, CL2_K, FC1_F, FC2_F]

    root = jax.random.PRNGKey(0)
    k_param, k_x, k_l0, k_l2, k_drop = jax.random.split(root, 5)

    params = init_params(k_param, net_parameters)
    kernel_params = prepare_kernel_params(params, B)     # one-time relayout

    x = jax.random.normal(k_x, (B, D, DFeat), jnp.float32)
    L = [make_rescaled_laplacian(k_l0, D),          # L[0]: level-0 graph (32 x 32)
         None,                                      # L[1]: unused by forward
         make_rescaled_laplacian(k_l2, D // 4)]     # L[2]: coarsened graph (8 x 8)
    lmax = [2.0, 2.0, 2.0]                          # unused by graph_conv_cheby
    d = 0.0                                         # dropout probability

    y = graph_convnet_forward(kernel_params, x, d, L, lmax, k_drop)
    y = jax.block_until_ready(y)

    y_ref = reference_forward(params, x, d, L, lmax, k_drop)
    assert y.shape == (B, FC2_F), y.shape
    assert jnp.allclose(y, y_ref, rtol=1e-4, atol=1e-4), (y, y_ref)
    print("KERNEL_OK")
</pallas_src>

<mosaic_0001>
module attributes {stable_mosaic.version = 11 : i64} {
  func.func @_fused_forward_kernel(%arg0: i32, %arg1: memref<2x32x2xf32, #tpu.memory_space<vmem>>, %arg2: memref<32x32xf32, #tpu.memory_space<vmem>>, %arg3: memref<8x8xf32, #tpu.memory_space<vmem>>, %arg4: memref<100x16xf32, #tpu.memory_space<vmem>>, %arg5: memref<1x16xf32, #tpu.memory_space<vmem>>, %arg6: memref<400x32xf32, #tpu.memory_space<vmem>>, %arg7: memref<1x32xf32, #tpu.memory_space<vmem>>, %arg8: memref<32x8xf32, #tpu.memory_space<vmem>>, %arg9: memref<1x8xf32, #tpu.memory_space<vmem>>, %arg10: memref<2x8xf32, #tpu.memory_space<vmem>>, %arg11: memref<8x2xf32, #tpu.memory_space<vmem>>, %arg12: memref<1x2xf32, #tpu.memory_space<vmem>>, %arg13: memref<2x2xf32, #tpu.memory_space<vmem>>) attributes {dimension_semantics = [#tpu.dimension_semantics<arbitrary>], iteration_bounds = array<i64: 1>, scalar_prefetch = 0 : i64, scratch_operands = 0 : i64, tpu.core_type = #tpu.core_type<tc>, window_params = [{pipeline_mode = #tpu.pipeline_mode<synchronous>, transform_indices = @transform_0, window_bounds = array<i64: 2, 32, 2>}, {pipeline_mode = #tpu.pipeline_mode<synchronous>, transform_indices = @transform_1, window_bounds = array<i64: 32, 32>}, {pipeline_mode = #tpu.pipeline_mode<synchronous>, transform_indices = @transform_2, window_bounds = array<i64: 8, 8>}, {pipeline_mode = #tpu.pipeline_mode<synchronous>, transform_indices = @transform_3, window_bounds = array<i64: 100, 16>}, {pipeline_mode = #tpu.pipeline_mode<synchronous>, transform_indices = @transform_4, window_bounds = array<i64: 1, 16>}, {pipeline_mode = #tpu.pipeline_mode<synchronous>, transform_indices = @transform_5, window_bounds = array<i64: 400, 32>}, {pipeline_mode = #tpu.pipeline_mode<synchronous>, transform_indices = @transform_6, window_bounds = array<i64: 1, 32>}, {pipeline_mode = #tpu.pipeline_mode<synchronous>, transform_indices = @transform_7, window_bounds = array<i64: 32, 8>}, {pipeline_mode = #tpu.pipeline_mode<synchronous>, transform_indices = @transform_8, window_bounds = array<i64: 1, 8>}, {pipeline_mode = #tpu.pipeline_mode<synchronous>, transform_indices = @transform_9, window_bounds = array<i64: 2, 8>}, {pipeline_mode = #tpu.pipeline_mode<synchronous>, transform_indices = @transform_10, window_bounds = array<i64: 8, 2>}, {pipeline_mode = #tpu.pipeline_mode<synchronous>, transform_indices = @transform_11, window_bounds = array<i64: 1, 2>}, {pipeline_mode = #tpu.pipeline_mode<synchronous>, transform_indices = @transform_12, window_bounds = array<i64: 2, 2>}]} {
    %c0 = arith.constant 0 : index
    %c0_0 = arith.constant 0 : index
    %c0_1 = arith.constant 0 : index
    %0 = vector.load %arg1[%c0, %c0_0, %c0_1] : memref<2x32x2xf32, #tpu.memory_space<vmem>>, vector<2x32x2xf32>
    %1 = vector.extract_strided_slice %0 {offsets = [0, 0, 0], sizes = [1, 32, 2], strides = [1, 1, 1]} : vector<2x32x2xf32> to vector<1x32x2xf32>
    %2 = vector.shape_cast %1 : vector<1x32x2xf32> to vector<32x2xf32>
    %3 = vector.extract_strided_slice %0 {offsets = [1, 0, 0], sizes = [1, 32, 2], strides = [1, 1, 1]} : vector<2x32x2xf32> to vector<1x32x2xf32>
    %4 = vector.shape_cast %3 : vector<1x32x2xf32> to vector<32x2xf32>
    %5 = tpu.concatenate %2, %4 in 1 : vector<32x2xf32>, vector<32x2xf32> -> vector<32x4xf32>
    %c0_2 = arith.constant 0 : index
    %c0_3 = arith.constant 0 : index
    %6 = vector.load %arg2[%c0_2, %c0_3] : memref<32x32xf32, #tpu.memory_space<vmem>>, vector<32x32xf32>
    %cst = arith.constant dense<0.000000e+00> : vector<32x4xf32>
    %7 = tpu.matmul %6, %5, %cst {dimension_numbers = #tpu.dot_dimension_numbers<[1], [0], [0], [1], [0, 0, 1, 1], [], []>} : vector<32x32xf32>, vector<32x4xf32>, vector<32x4xf32> -> vector<32x4xf32>
    %cst_4 = arith.constant dense<0.000000e+00> : vector<32x4xf32>
    %8 = tpu.matmul %6, %7, %cst_4 {dimension_numbers = #tpu.dot_dimension_numbers<[1], [0], [0], [1], [0, 0, 1, 1], [], []>} : vector<32x32xf32>, vector<32x4xf32>, vector<32x4xf32> -> vector<32x4xf32>
    %cst_5 = arith.constant 2.000000e+00 : f32
    %9 = vector.broadcast %cst_5 : f32 to vector<32x4xf32>
    %10 = arith.mulf %9, %8 : vector<32x4xf32>
    %11 = arith.subf %10, %5 : vector<32x4xf32>
    %cst_6 = arith.constant dense<0.000000e+00> : vector<32x4xf32>
    %12 = tpu.matmul %6, %11, %cst_6 {dimension_numbers = #tpu.dot_dimension_numbers<[1], [0], [0], [1], [0, 0, 1, 1], [], []>} : vector<32x32xf32>, vector<32x4xf32>, vector<32x4xf32> -> vector<32x4xf32>
    %cst_7 = arith.constant 2.000000e+00 : f32
    %13 = vector.broadcast %cst_7 : f32 to vector<32x4xf32>
    %14 = arith.mulf %13, %12 : vector<32x4xf32>
    %15 = arith.subf %14, %7 : vector<32x4xf32>
    %cst_8 = arith.constant dense<0.000000e+00> : vector<32x4xf32>
    %16 = tpu.matmul %6, %15, %cst_8 {dimension_numbers = #tpu.dot_dimension_numbers<[1], [0], [0], [1], [0, 0, 1, 1], [], []>} : vector<32x32xf32>, vector<32x4xf32>, vector<32x4xf32> -> vector<32x4xf32>
    %cst_9 = arith.constant 2.000000e+00 : f32
    %17 = vector.broadcast %cst_9 : f32 to vector<32x4xf32>
    %18 = arith.mulf %17, %16 : vector<32x4xf32>
    %19 = arith.subf %18, %11 : vector<32x4xf32>
    %cst_10 = arith.constant dense<0.000000e+00> : vector<32x4xf32>
    %20 = tpu.matmul %6, %19, %cst_10 {dimension_numbers = #tpu.dot_dimension_numbers<[1], [0], [0], [1], [0, 0, 1, 1], [], []>} : vector<32x32xf32>, vector<32x4xf32>, vector<32x4xf32> -> vector<32x4xf32>
    %cst_11 = arith.constant 2.000000e+00 : f32
    %21 = vector.broadcast %cst_11 : f32 to vector<32x4xf32>
    %22 = arith.mulf %21, %20 : vector<32x4xf32>
    %23 = arith.subf %22, %15 : vector<32x4xf32>
    %cst_12 = arith.constant dense<0.000000e+00> : vector<32x4xf32>
    %24 = tpu.matmul %6, %23, %cst_12 {dimension_numbers = #tpu.dot_dimension_numbers<[1], [0], [0], [1], [0, 0, 1, 1], [], []>} : vector<32x32xf32>, vector<32x4xf32>, vector<32x4xf32> -> vector<32x4xf32>
    %cst_13 = arith.constant 2.000000e+00 : f32
    %25 = vector.broadcast %cst_13 : f32 to vector<32x4xf32>
    %26 = arith.mulf %25, %24 : vector<32x4xf32>
    %27 = arith.subf %26, %19 : vector<32x4xf32>
    %cst_14 = arith.constant dense<0.000000e+00> : vector<32x4xf32>
    %28 = tpu.matmul %6, %27, %cst_14 {dimension_numbers = #tpu.dot_dimension_numbers<[1], [0], [0], [1], [0, 0, 1, 1], [], []>} : vector<32x32xf32>, vector<32x4xf32>, vector<32x4xf32> -> vector<32x4xf32>
    %cst_15 = arith.constant 2.000000e+00 : f32
    %29 = vector.broadcast %cst_15 : f32 to vector<32x4xf32>
    %30 = arith.mulf %29, %28 : vector<32x4xf32>
    %31 = arith.subf %30, %23 : vector<32x4xf32>
    %cst_16 = arith.constant dense<0.000000e+00> : vector<32x4xf32>
    %32 = tpu.matmul %6, %31, %cst_16 {dimension_numbers = #tpu.dot_dimension_numbers<[1], [0], [0], [1], [0, 0, 1, 1], [], []>} : vector<32x32xf32>, vector<32x4xf32>, vector<32x4xf32> -> vector<32x4xf32>
    %cst_17 = arith.constant 2.000000e+00 : f32
    %33 = vector.broadcast %cst_17 : f32 to vector<32x4xf32>
    %34 = arith.mulf %33, %32 : vector<32x4xf32>
    %35 = arith.subf %34, %27 : vector<32x4xf32>
    %cst_18 = arith.constant dense<0.000000e+00> : vector<32x4xf32>
    %36 = tpu.matmul %6, %35, %cst_18 {dimension_numbers = #tpu.dot_dimension_numbers<[1], [0], [0], [1], [0, 0, 1, 1], [], []>} : vector<32x32xf32>, vector<32x4xf32>, vector<32x4xf32> -> vector<32x4xf32>
    %cst_19 = arith.constant 2.000000e+00 : f32
    %37 = vector.broadcast %cst_19 : f32 to vector<32x4xf32>
    %38 = arith.mulf %37, %36 : vector<32x4xf32>
    %39 = arith.subf %38, %31 : vector<32x4xf32>
    %cst_20 = arith.constant dense<0.000000e+00> : vector<32x4xf32>
    %40 = tpu.matmul %6, %39, %cst_20 {dimension_numbers = #tpu.dot_dimension_numbers<[1], [0], [0], [1], [0, 0, 1, 1], [], []>} : vector<32x32xf32>, vector<32x4xf32>, vector<32x4xf32> -> vector<32x4xf32>
    %cst_21 = arith.constant 2.000000e+00 : f32
    %41 = vector.broadcast %cst_21 : f32 to vector<32x4xf32>
    %42 = arith.mulf %41, %40 : vector<32x4xf32>
    %43 = arith.subf %42, %35 : vector<32x4xf32>
    %cst_22 = arith.constant dense<0.000000e+00> : vector<32x4xf32>
    %44 = tpu.matmul %6, %43, %cst_22 {dimension_numbers = #tpu.dot_dimension_numbers<[1], [0], [0], [1], [0, 0, 1, 1], [], []>} : vector<32x32xf32>, vector<32x4xf32>, vector<32x4xf32> -> vector<32x4xf32>
    %cst_23 = arith.constant 2.000000e+00 : f32
    %45 = vector.broadcast %cst_23 : f32 to vector<32x4xf32>
    %46 = arith.mulf %45, %44 : vector<32x4xf32>
    %47 = arith.subf %46, %39 : vector<32x4xf32>
    %cst_24 = arith.constant dense<0.000000e+00> : vector<32x4xf32>
    %48 = tpu.matmul %6, %47, %cst_24 {dimension_numbers = #tpu.dot_dimension_numbers<[1], [0], [0], [1], [0, 0, 1, 1], [], []>} : vector<32x32xf32>, vector<32x4xf32>, vector<32x4xf32> -> vector<32x4xf32>
    %cst_25 = arith.constant 2.000000e+00 : f32
    %49 = vector.broadcast %cst_25 : f32 to vector<32x4xf32>
    %50 = arith.mulf %49, %48 : vector<32x4xf32>
    %51 = arith.subf %50, %43 : vector<32x4xf32>
    %cst_26 = arith.constant dense<0.000000e+00> : vector<32x4xf32>
    %52 = tpu.matmul %6, %51, %cst_26 {dimension_numbers = #tpu.dot_dimension_numbers<[1], [0], [0], [1], [0, 0, 1, 1], [], []>} : vector<32x32xf32>, vector<32x4xf32>, vector<32x4xf32> -> vector<32x4xf32>
    %cst_27 = arith.constant 2.000000e+00 : f32
    %53 = vector.broadcast %cst_27 : f32 to vector<32x4xf32>
    %54 = arith.mulf %53, %52 : vector<32x4xf32>
    %55 = arith.subf %54, %47 : vector<32x4xf32>
    %cst_28 = arith.constant dense<0.000000e+00> : vector<32x4xf32>
    %56 = tpu.matmul %6, %55, %cst_28 {dimension_numbers = #tpu.dot_dimension_numbers<[1], [0], [0], [1], [0, 0, 1, 1], [], []>} : vector<32x32xf32>, vector<32x4xf32>, vector<32x4xf32> -> vector<32x4xf32>
    %cst_29 = arith.constant 2.000000e+00 : f32
    %57 = vector.broadcast %cst_29 : f32 to vector<32x4xf32>
    %58 = arith.mulf %57, %56 : vector<32x4xf32>
    %59 = arith.subf %58, %51 : vector<32x4xf32>
    %cst_30 = arith.constant dense<0.000000e+00> : vector<32x4xf32>
    %60 = tpu.matmul %6, %59, %cst_30 {dimension_numbers = #tpu.dot_dimension_numbers<[1], [0], [0], [1], [0, 0, 1, 1], [], []>} : vector<32x32xf32>, vector<32x4xf32>, vector<32x4xf32> -> vector<32x4xf32>
    %cst_31 = arith.constant 2.000000e+00 : f32
    %61 = vector.broadcast %cst_31 : f32 to vector<32x4xf32>
    %62 = arith.mulf %61, %60 : vector<32x4xf32>
    %63 = arith.subf %62, %55 : vector<32x4xf32>
    %cst_32 = arith.constant dense<0.000000e+00> : vector<32x4xf32>
    %64 = tpu.matmul %6, %63, %cst_32 {dimension_numbers = #tpu.dot_dimension_numbers<[1], [0], [0], [1], [0, 0, 1, 1], [], []>} : vector<32x32xf32>, vector<32x4xf32>, vector<32x4xf32> -> vector<32x4xf32>
    %cst_33 = arith.constant 2.000000e+00 : f32
    %65 = vector.broadcast %cst_33 : f32 to vector<32x4xf32>
    %66 = arith.mulf %65, %64 : vector<32x4xf32>
    %67 = arith.subf %66, %59 : vector<32x4xf32>
    %cst_34 = arith.constant dense<0.000000e+00> : vector<32x4xf32>
    %68 = tpu.matmul %6, %67, %cst_34 {dimension_numbers = #tpu.dot_dimension_numbers<[1], [0], [0], [1], [0, 0, 1, 1], [], []>} : vector<32x32xf32>, vector<32x4xf32>, vector<32x4xf32> -> vector<32x4xf32>
    %cst_35 = arith.constant 2.000000e+00 : f32
    %69 = vector.broadcast %cst_35 : f32 to vector<32x4xf32>
    %70 = arith.mulf %69, %68 : vector<32x4xf32>
    %71 = arith.subf %70, %63 : vector<32x4xf32>
    %cst_36 = arith.constant dense<0.000000e+00> : vector<32x4xf32>
    %72 = tpu.matmul %6, %71, %cst_36 {dimension_numbers = #tpu.dot_dimension_numbers<[1], [0], [0], [1], [0, 0, 1, 1], [], []>} : vector<32x32xf32>, vector<32x4xf32>, vector<32x4xf32> -> vector<32x4xf32>
    %cst_37 = arith.constant 2.000000e+00 : f32
    %73 = vector.broadcast %cst_37 : f32 to vector<32x4xf32>
    %74 = arith.mulf %73, %72 : vector<32x4xf32>
    %75 = arith.subf %74, %67 : vector<32x4xf32>
    %cst_38 = arith.constant dense<0.000000e+00> : vector<32x4xf32>
    %76 = tpu.matmul %6, %75, %cst_38 {dimension_numbers = #tpu.dot_dimension_numbers<[1], [0], [0], [1], [0, 0, 1, 1], [], []>} : vector<32x32xf32>, vector<32x4xf32>, vector<32x4xf32> -> vector<32x4xf32>
    %cst_39 = arith.constant 2.000000e+00 : f32
    %77 = vector.broadcast %cst_39 : f32 to vector<32x4xf32>
    %78 = arith.mulf %77, %76 : vector<32x4xf32>
    %79 = arith.subf %78, %71 : vector<32x4xf32>
    %cst_40 = arith.constant dense<0.000000e+00> : vector<32x4xf32>
    %80 = tpu.matmul %6, %79, %cst_40 {dimension_numbers = #tpu.dot_dimension_numbers<[1], [0], [0], [1], [0, 0, 1, 1], [], []>} : vector<32x32xf32>, vector<32x4xf32>, vector<32x4xf32> -> vector<32x4xf32>
    %cst_41 = arith.constant 2.000000e+00 : f32
    %81 = vector.broadcast %cst_41 : f32 to vector<32x4xf32>
    %82 = arith.mulf %81, %80 : vector<32x4xf32>
    %83 = arith.subf %82, %75 : vector<32x4xf32>
    %cst_42 = arith.constant dense<0.000000e+00> : vector<32x4xf32>
    %84 = tpu.matmul %6, %83, %cst_42 {dimension_numbers = #tpu.dot_dimension_numbers<[1], [0], [0], [1], [0, 0, 1, 1], [], []>} : vector<32x32xf32>, vector<32x4xf32>, vector<32x4xf32> -> vector<32x4xf32>
    %cst_43 = arith.constant 2.000000e+00 : f32
    %85 = vector.broadcast %cst_43 : f32 to vector<32x4xf32>
    %86 = arith.mulf %85, %84 : vector<32x4xf32>
    %87 = arith.subf %86, %79 : vector<32x4xf32>
    %cst_44 = arith.constant dense<0.000000e+00> : vector<32x4xf32>
    %88 = tpu.matmul %6, %87, %cst_44 {dimension_numbers = #tpu.dot_dimension_numbers<[1], [0], [0], [1], [0, 0, 1, 1], [], []>} : vector<32x32xf32>, vector<32x4xf32>, vector<32x4xf32> -> vector<32x4xf32>
    %cst_45 = arith.constant 2.000000e+00 : f32
    %89 = vector.broadcast %cst_45 : f32 to vector<32x4xf32>
    %90 = arith.mulf %89, %88 : vector<32x4xf32>
    %91 = arith.subf %90, %83 : vector<32x4xf32>
    %cst_46 = arith.constant dense<0.000000e+00> : vector<32x4xf32>
    %92 = tpu.matmul %6, %91, %cst_46 {dimension_numbers = #tpu.dot_dimension_numbers<[1], [0], [0], [1], [0, 0, 1, 1], [], []>} : vector<32x32xf32>, vector<32x4xf32>, vector<32x4xf32> -> vector<32x4xf32>
    %cst_47 = arith.constant 2.000000e+00 : f32
    %93 = vector.broadcast %cst_47 : f32 to vector<32x4xf32>
    %94 = arith.mulf %93, %92 : vector<32x4xf32>
    %95 = arith.subf %94, %87 : vector<32x4xf32>
    %cst_48 = arith.constant dense<0.000000e+00> : vector<32x4xf32>
    %96 = tpu.matmul %6, %95, %cst_48 {dimension_numbers = #tpu.dot_dimension_numbers<[1], [0], [0], [1], [0, 0, 1, 1], [], []>} : vector<32x32xf32>, vector<32x4xf32>, vector<32x4xf32> -> vector<32x4xf32>
    %cst_49 = arith.constant 2.000000e+00 : f32
    %97 = vector.broadcast %cst_49 : f32 to vector<32x4xf32>
    %98 = arith.mulf %97, %96 : vector<32x4xf32>
    %99 = arith.subf %98, %91 : vector<32x4xf32>
    %100 = tpu.concatenate %5, %7, %11, %15, %19, %23, %27, %31, %35, %39, %43, %47, %51, %55, %59, %63 in 1 : vector<32x4xf32>, vector<32x4xf32>, vector<32x4xf32>, vector<32x4xf32>, vector<32x4xf32>, vector<32x4xf32>, vector<32x4xf32>, vector<32x4xf32>, vector<32x4xf32>, vector<32x4xf32>, vector<32x4xf32>, vector<32x4xf32>, vector<32x4xf32>, vector<32x4xf32>, vector<32x4xf32>, vector<32x4xf32> -> vector<32x64xf32>
    %101 = tpu.concatenate %67, %71, %75, %79, %83, %87, %91, %95, %99 in 1 : vector<32x4xf32>, vector<32x4xf32>, vector<32x4xf32>, vector<32x4xf32>, vector<32x4xf32>, vector<32x4xf32>, vector<32x4xf32>, vector<32x4xf32>, vector<32x4xf32> -> vector<32x36xf32>
    %102 = tpu.concatenate %100, %101 in 1 : vector<32x64xf32>, vector<32x36xf32> -> vector<32x100xf32>
    %c0_50 = arith.constant 0 : index
    %c0_51 = arith.constant 0 : index
    %103 = vector.load %arg4[%c0_50, %c0_51] : memref<100x16xf32, #tpu.memory_space<vmem>>, vector<100x16xf32>
    %cst_52 = arith.constant dense<0.000000e+00> : vector<32x16xf32>
    %104 = tpu.matmul %102, %103, %cst_52 {dimension_numbers = #tpu.dot_dimension_numbers<[1], [0], [0], [1], [0, 0, 1, 1], [], []>} : vector<32x100xf32>, vector<100x16xf32>, vector<32x16xf32> -> vector<32x16xf32>
    %c0_53 = arith.constant 0 : index
    %c0_54 = arith.constant 0 : index
    %105 = vector.load %arg5[%c0_53, %c0_54] : memref<1x16xf32, #tpu.memory_space<vmem>>, vector<1x16xf32>
    %106 = vector.broadcast %105 : vector<1x16xf32> to vector<32x16xf32>
    %107 = arith.addf %104, %106 : vector<32x16xf32>
    %cst_55 = arith.constant 0.000000e+00 : f32
    %108 = vector.broadcast %cst_55 : f32 to vector<32x16xf32>
    %109 = arith.maximumf %107, %108 : vector<32x16xf32>
    %110 = vector.extract_strided_slice %109 {offsets = [0, 0], sizes = [4, 16], strides = [1, 1]} : vector<32x16xf32> to vector<4x16xf32>
    %cst_56 = arith.constant dense<0xFF800000> : vector<16xf32>
    %111 = vector.multi_reduction <maximumf>, %110, %cst_56 [0] : vector<4x16xf32> to vector<16xf32>
    %112 = vector.shape_cast %111 : vector<16xf32> to vector<1x16xf32>
    %113 = vector.extract_strided_slice %109 {offsets = [4, 0], sizes = [4, 16], strides = [1, 1]} : vector<32x16xf32> to vector<4x16xf32>
    %cst_57 = arith.constant dense<0xFF800000> : vector<16xf32>
    %114 = vector.multi_reduction <maximumf>, %113, %cst_57 [0] : vector<4x16xf32> to vector<16xf32>
    %115 = vector.shape_cast %114 : vector<16xf32> to vector<1x16xf32>
    %116 = vector.extract_strided_slice %109 {offsets = [8, 0], sizes = [4, 16], strides = [1, 1]} : vector<32x16xf32> to vector<4x16xf32>
    %cst_58 = arith.constant dense<0xFF800000> : vector<16xf32>
    %117 = vector.multi_reduction <maximumf>, %116, %cst_58 [0] : vector<4x16xf32> to vector<16xf32>
    %118 = vector.shape_cast %117 : vector<16xf32> to vector<1x16xf32>
    %119 = vector.extract_strided_slice %109 {offsets = [12, 0], sizes = [4, 16], strides = [1, 1]} : vector<32x16xf32> to vector<4x16xf32>
    %cst_59 = arith.constant dense<0xFF800000> : vector<16xf32>
    %120 = vector.multi_reduction <maximumf>, %119, %cst_59 [0] : vector<4x16xf32> to vector<16xf32>
    %121 = vector.shape_cast %120 : vector<16xf32> to vector<1x16xf32>
    %122 = vector.extract_strided_slice %109 {offsets = [16, 0], sizes = [4, 16], strides = [1, 1]} : vector<32x16xf32> to vector<4x16xf32>
    %cst_60 = arith.constant dense<0xFF800000> : vector<16xf32>
    %123 = vector.multi_reduction <maximumf>, %122, %cst_60 [0] : vector<4x16xf32> to vector<16xf32>
    %124 = vector.shape_cast %123 : vector<16xf32> to vector<1x16xf32>
    %125 = vector.extract_strided_slice %109 {offsets = [20, 0], sizes = [4, 16], strides = [1, 1]} : vector<32x16xf32> to vector<4x16xf32>
    %cst_61 = arith.constant dense<0xFF800000> : vector<16xf32>
    %126 = vector.multi_reduction <maximumf>, %125, %cst_61 [0] : vector<4x16xf32> to vector<16xf32>
    %127 = vector.shape_cast %126 : vector<16xf32> to vector<1x16xf32>
    %128 = vector.extract_strided_slice %109 {offsets = [24, 0], sizes = [4, 16], strides = [1, 1]} : vector<32x16xf32> to vector<4x16xf32>
    %cst_62 = arith.constant dense<0xFF800000> : vector<16xf32>
    %129 = vector.multi_reduction <maximumf>, %128, %cst_62 [0] : vector<4x16xf32> to vector<16xf32>
    %130 = vector.shape_cast %129 : vector<16xf32> to vector<1x16xf32>
    %131 = vector.extract_strided_slice %109 {offsets = [28, 0], sizes = [4, 16], strides = [1, 1]} : vector<32x16xf32> to vector<4x16xf32>
    %cst_63 = arith.constant dense<0xFF800000> : vector<16xf32>
    %132 = vector.multi_reduction <maximumf>, %131, %cst_63 [0] : vector<4x16xf32> to vector<16xf32>
    %133 = vector.shape_cast %132 : vector<16xf32> to vector<1x16xf32>
    %134 = tpu.concatenate %112, %115, %118, %121, %124, %127, %130, %133 in 0 : vector<1x16xf32>, vector<1x16xf32>, vector<1x16xf32>, vector<1x16xf32>, vector<1x16xf32>, vector<1x16xf32>, vector<1x16xf32>, vector<1x16xf32> -> vector<8x16xf32>
    %c0_64 = arith.constant 0 : index
    %c0_65 = arith.constant 0 : index
    %135 = vector.load %arg3[%c0_64, %c0_65] : memref<8x8xf32, #tpu.memory_space<vmem>>, vector<8x8xf32>
    %cst_66 = arith.constant dense<0.000000e+00> : vector<8x16xf32>
    %136 = tpu.matmul %135, %134, %cst_66 {dimension_numbers = #tpu.dot_dimension_numbers<[1], [0], [0], [1], [0, 0, 1, 1], [], []>} : vector<8x8xf32>, vector<8x16xf32>, vector<8x16xf32> -> vector<8x16xf32>
    %cst_67 = arith.constant dense<0.000000e+00> : vector<8x16xf32>
    %137 = tpu.matmul %135, %136, %cst_67 {dimension_numbers = #tpu.dot_dimension_numbers<[1], [0], [0], [1], [0, 0, 1, 1], [], []>} : vector<8x8xf32>, vector<8x16xf32>, vector<8x16xf32> -> vector<8x16xf32>
    %cst_68 = arith.constant 2.000000e+00 : f32
    %138 = vector.broadcast %cst_68 : f32 to vector<8x16xf32>
    %139 = arith.mulf %138, %137 : vector<8x16xf32>
    %140 = arith.subf %139, %134 : vector<8x16xf32>
    %cst_69 = arith.constant dense<0.000000e+00> : vector<8x16xf32>
    %141 = tpu.matmul %135, %140, %cst_69 {dimension_numbers = #tpu.dot_dimension_numbers<[1], [0], [0], [1], [0, 0, 1, 1], [], []>} : vector<8x8xf32>, vector<8x16xf32>, vector<8x16xf32> -> vector<8x16xf32>
    %cst_70 = arith.constant 2.000000e+00 : f32
    %142 = vector.broadcast %cst_70 : f32 to vector<8x16xf32>
    %143 = arith.mulf %142, %141 : vector<8x16xf32>
    %144 = arith.subf %143, %136 : vector<8x16xf32>
    %cst_71 = arith.constant dense<0.000000e+00> : vector<8x16xf32>
    %145 = tpu.matmul %135, %144, %cst_71 {dimension_numbers = #tpu.dot_dimension_numbers<[1], [0], [0], [1], [0, 0, 1, 1], [], []>} : vector<8x8xf32>, vector<8x16xf32>, vector<8x16xf32> -> vector<8x16xf32>
    %cst_72 = arith.constant 2.000000e+00 : f32
    %146 = vector.broadcast %cst_72 : f32 to vector<8x16xf32>
    %147 = arith.mulf %146, %145 : vector<8x16xf32>
    %148 = arith.subf %147, %140 : vector<8x16xf32>
    %cst_73 = arith.constant dense<0.000000e+00> : vector<8x16xf32>
    %149 = tpu.matmul %135, %148, %cst_73 {dimension_numbers = #tpu.dot_dimension_numbers<[1], [0], [0], [1], [0, 0, 1, 1], [], []>} : vector<8x8xf32>, vector<8x16xf32>, vector<8x16xf32> -> vector<8x16xf32>
    %cst_74 = arith.constant 2.000000e+00 : f32
    %150 = vector.broadcast %cst_74 : f32 to vector<8x16xf32>
    %151 = arith.mulf %150, %149 : vector<8x16xf32>
    %152 = arith.subf %151, %144 : vector<8x16xf32>
    %cst_75 = arith.constant dense<0.000000e+00> : vector<8x16xf32>
    %153 = tpu.matmul %135, %152, %cst_75 {dimension_numbers = #tpu.dot_dimension_numbers<[1], [0], [0], [1], [0, 0, 1, 1], [], []>} : vector<8x8xf32>, vector<8x16xf32>, vector<8x16xf32> -> vector<8x16xf32>
    %cst_76 = arith.constant 2.000000e+00 : f32
    %154 = vector.broadcast %cst_76 : f32 to vector<8x16xf32>
    %155 = arith.mulf %154, %153 : vector<8x16xf32>
    %156 = arith.subf %155, %148 : vector<8x16xf32>
    %cst_77 = arith.constant dense<0.000000e+00> : vector<8x16xf32>
    %157 = tpu.matmul %135, %156, %cst_77 {dimension_numbers = #tpu.dot_dimension_numbers<[1], [0], [0], [1], [0, 0, 1, 1], [], []>} : vector<8x8xf32>, vector<8x16xf32>, vector<8x16xf32> -> vector<8x16xf32>
    %cst_78 = arith.constant 2.000000e+00 : f32
    %158 = vector.broadcast %cst_78 : f32 to vector<8x16xf32>
    %159 = arith.mulf %158, %157 : vector<8x16xf32>
    %160 = arith.subf %159, %152 : vector<8x16xf32>
    %cst_79 = arith.constant dense<0.000000e+00> : vector<8x16xf32>
    %161 = tpu.matmul %135, %160, %cst_79 {dimension_numbers = #tpu.dot_dimension_numbers<[1], [0], [0], [1], [0, 0, 1, 1], [], []>} : vector<8x8xf32>, vector<8x16xf32>, vector<8x16xf32> -> vector<8x16xf32>
    %cst_80 = arith.constant 2.000000e+00 : f32
    %162 = vector.broadcast %cst_80 : f32 to vector<8x16xf32>
    %163 = arith.mulf %162, %161 : vector<8x16xf32>
    %164 = arith.subf %163, %156 : vector<8x16xf32>
    %cst_81 = arith.constant dense<0.000000e+00> : vector<8x16xf32>
    %165 = tpu.matmul %135, %164, %cst_81 {dimension_numbers = #tpu.dot_dimension_numbers<[1], [0], [0], [1], [0, 0, 1, 1], [], []>} : vector<8x8xf32>, vector<8x16xf32>, vector<8x16xf32> -> vector<8x16xf32>
    %cst_82 = arith.constant 2.000000e+00 : f32
    %166 = vector.broadcast %cst_82 : f32 to vector<8x16xf32>
    %167 = arith.mulf %166, %165 : vector<8x16xf32>
    %168 = arith.subf %167, %160 : vector<8x16xf32>
    %cst_83 = arith.constant dense<0.000000e+00> : vector<8x16xf32>
    %169 = tpu.matmul %135, %168, %cst_83 {dimension_numbers = #tpu.dot_dimension_numbers<[1], [0], [0], [1], [0, 0, 1, 1], [], []>} : vector<8x8xf32>, vector<8x16xf32>, vector<8x16xf32> -> vector<8x16xf32>
    %cst_84 = arith.constant 2.000000e+00 : f32
    %170 = vector.broadcast %cst_84 : f32 to vector<8x16xf32>
    %171 = arith.mulf %170, %169 : vector<8x16xf32>
    %172 = arith.subf %171, %164 : vector<8x16xf32>
    %cst_85 = arith.constant dense<0.000000e+00> : vector<8x16xf32>
    %173 = tpu.matmul %135, %172, %cst_85 {dimension_numbers = #tpu.dot_dimension_numbers<[1], [0], [0], [1], [0, 0, 1, 1], [], []>} : vector<8x8xf32>, vector<8x16xf32>, vector<8x16xf32> -> vector<8x16xf32>
    %cst_86 = arith.constant 2.000000e+00 : f32
    %174 = vector.broadcast %cst_86 : f32 to vector<8x16xf32>
    %175 = arith.mulf %174, %173 : vector<8x16xf32>
    %176 = arith.subf %175, %168 : vector<8x16xf32>
    %cst_87 = arith.constant dense<0.000000e+00> : vector<8x16xf32>
    %177 = tpu.matmul %135, %176, %cst_87 {dimension_numbers = #tpu.dot_dimension_numbers<[1], [0], [0], [1], [0, 0, 1, 1], [], []>} : vector<8x8xf32>, vector<8x16xf32>, vector<8x16xf32> -> vector<8x16xf32>
    %cst_88 = arith.constant 2.000000e+00 : f32
    %178 = vector.broadcast %cst_88 : f32 to vector<8x16xf32>
    %179 = arith.mulf %178, %177 : vector<8x16xf32>
    %180 = arith.subf %179, %172 : vector<8x16xf32>
    %cst_89 = arith.constant dense<0.000000e+00> : vector<8x16xf32>
    %181 = tpu.matmul %135, %180, %cst_89 {dimension_numbers = #tpu.dot_dimension_numbers<[1], [0], [0], [1], [0, 0, 1, 1], [], []>} : vector<8x8xf32>, vector<8x16xf32>, vector<8x16xf32> -> vector<8x16xf32>
    %cst_90 = arith.constant 2.000000e+00 : f32
    %182 = vector.broadcast %cst_90 : f32 to vector<8x16xf32>
    %183 = arith.mulf %182, %181 : vector<8x16xf32>
    %184 = arith.subf %183, %176 : vector<8x16xf32>
    %cst_91 = arith.constant dense<0.000000e+00> : vector<8x16xf32>
    %185 = tpu.matmul %135, %184, %cst_91 {dimension_numbers = #tpu.dot_dimension_numbers<[1], [0], [0], [1], [0, 0, 1, 1], [], []>} : vector<8x8xf32>, vector<8x16xf32>, vector<8x16xf32> -> vector<8x16xf32>
    %cst_92 = arith.constant 2.000000e+00 : f32
    %186 = vector.broadcast %cst_92 : f32 to vector<8x16xf32>
    %187 = arith.mulf %186, %185 : vector<8x16xf32>
    %188 = arith.subf %187, %180 : vector<8x16xf32>
    %cst_93 = arith.constant dense<0.000000e+00> : vector<8x16xf32>
    %189 = tpu.matmul %135, %188, %cst_93 {dimension_numbers = #tpu.dot_dimension_numbers<[1], [0], [0], [1], [0, 0, 1, 1], [], []>} : vector<8x8xf32>, vector<8x16xf32>, vector<8x16xf32> -> vector<8x16xf32>
    %cst_94 = arith.constant 2.000000e+00 : f32
    %190 = vector.broadcast %cst_94 : f32 to vector<8x16xf32>
    %191 = arith.mulf %190, %189 : vector<8x16xf32>
    %192 = arith.subf %191, %184 : vector<8x16xf32>
    %cst_95 = arith.constant dense<0.000000e+00> : vector<8x16xf32>
    %193 = tpu.matmul %135, %192, %cst_95 {dimension_numbers = #tpu.dot_dimension_numbers<[1], [0], [0], [1], [0, 0, 1, 1], [], []>} : vector<8x8xf32>, vector<8x16xf32>, vector<8x16xf32> -> vector<8x16xf32>
    %cst_96 = arith.constant 2.000000e+00 : f32
    %194 = vector.broadcast %cst_96 : f32 to vector<8x16xf32>
    %195 = arith.mulf %194, %193 : vector<8x16xf32>
    %196 = arith.subf %195, %188 : vector<8x16xf32>
    %cst_97 = arith.constant dense<0.000000e+00> : vector<8x16xf32>
    %197 = tpu.matmul %135, %196, %cst_97 {dimension_numbers = #tpu.dot_dimension_numbers<[1], [0], [0], [1], [0, 0, 1, 1], [], []>} : vector<8x8xf32>, vector<8x16xf32>, vector<8x16xf32> -> vector<8x16xf32>
    %cst_98 = arith.constant 2.000000e+00 : f32
    %198 = vector.broadcast %cst_98 : f32 to vector<8x16xf32>
    %199 = arith.mulf %198, %197 : vector<8x16xf32>
    %200 = arith.subf %199, %192 : vector<8x16xf32>
    %cst_99 = arith.constant dense<0.000000e+00> : vector<8x16xf32>
    %201 = tpu.matmul %135, %200, %cst_99 {dimension_numbers = #tpu.dot_dimension_numbers<[1], [0], [0], [1], [0, 0, 1, 1], [], []>} : vector<8x8xf32>, vector<8x16xf32>, vector<8x16xf32> -> vector<8x16xf32>
    %cst_100 = arith.constant 2.000000e+00 : f32
    %202 = vector.broadcast %cst_100 : f32 to vector<8x16xf32>
    %203 = arith.mulf %202, %201 : vector<8x16xf32>
    %204 = arith.subf %203, %196 : vector<8x16xf32>
    %cst_101 = arith.constant dense<0.000000e+00> : vector<8x16xf32>
    %205 = tpu.matmul %135, %204, %cst_101 {dimension_numbers = #tpu.dot_dimension_numbers<[1], [0], [0], [1], [0, 0, 1, 1], [], []>} : vector<8x8xf32>, vector<8x16xf32>, vector<8x16xf32> -> vector<8x16xf32>
    %cst_102 = arith.constant 2.000000e+00 : f32
    %206 = vector.broadcast %cst_102 : f32 to vector<8x16xf32>
    %207 = arith.mulf %206, %205 : vector<8x16xf32>
    %208 = arith.subf %207, %200 : vector<8x16xf32>
    %cst_103 = arith.constant dense<0.000000e+00> : vector<8x16xf32>
    %209 = tpu.matmul %135, %208, %cst_103 {dimension_numbers = #tpu.dot_dimension_numbers<[1], [0], [0], [1], [0, 0, 1, 1], [], []>} : vector<8x8xf32>, vector<8x16xf32>, vector<8x16xf32> -> vector<8x16xf32>
    %cst_104 = arith.constant 2.000000e+00 : f32
    %210 = vector.broadcast %cst_104 : f32 to vector<8x16xf32>
    %211 = arith.mulf %210, %209 : vector<8x16xf32>
    %212 = arith.subf %211, %204 : vector<8x16xf32>
    %cst_105 = arith.constant dense<0.000000e+00> : vector<8x16xf32>
    %213 = tpu.matmul %135, %212, %cst_105 {dimension_numbers = #tpu.dot_dimension_numbers<[1], [0], [0], [1], [0, 0, 1, 1], [], []>} : vector<8x8xf32>, vector<8x16xf32>, vector<8x16xf32> -> vector<8x16xf32>
    %cst_106 = arith.constant 2.000000e+00 : f32
    %214 = vector.broadcast %cst_106 : f32 to vector<8x16xf32>
    %215 = arith.mulf %214, %213 : vector<8x16xf32>
    %216 = arith.subf %215, %208 : vector<8x16xf32>
    %cst_107 = arith.constant dense<0.000000e+00> : vector<8x16xf32>
    %217 = tpu.matmul %135, %216, %cst_107 {dimension_numbers = #tpu.dot_dimension_numbers<[1], [0], [0], [1], [0, 0, 1, 1], [], []>} : vector<8x8xf32>, vector<8x16xf32>, vector<8x16xf32> -> vector<8x16xf32>
    %cst_108 = arith.constant 2.000000e+00 : f32
    %218 = vector.broadcast %cst_108 : f32 to vector<8x16xf32>
    %219 = arith.mulf %218, %217 : vector<8x16xf32>
    %220 = arith.subf %219, %212 : vector<8x16xf32>
    %cst_109 = arith.constant dense<0.000000e+00> : vector<8x16xf32>
    %221 = tpu.matmul %135, %220, %cst_109 {dimension_numbers = #tpu.dot_dimension_numbers<[1], [0], [0], [1], [0, 0, 1, 1], [], []>} : vector<8x8xf32>, vector<8x16xf32>, vector<8x16xf32> -> vector<8x16xf32>
    %cst_110 = arith.constant 2.000000e+00 : f32
    %222 = vector.broadcast %cst_110 : f32 to vector<8x16xf32>
    %223 = arith.mulf %222, %221 : vector<8x16xf32>
    %224 = arith.subf %223, %216 : vector<8x16xf32>
    %cst_111 = arith.constant dense<0.000000e+00> : vector<8x16xf32>
    %225 = tpu.matmul %135, %224, %cst_111 {dimension_numbers = #tpu.dot_dimension_numbers<[1], [0], [0], [1], [0, 0, 1, 1], [], []>} : vector<8x8xf32>, vector<8x16xf32>, vector<8x16xf32> -> vector<8x16xf32>
    %cst_112 = arith.constant 2.000000e+00 : f32
    %226 = vector.broadcast %cst_112 : f32 to vector<8x16xf32>
    %227 = arith.mulf %226, %225 : vector<8x16xf32>
    %228 = arith.subf %227, %220 : vector<8x16xf32>
    %229 = tpu.concatenate %134, %136, %140, %144, %148, %152, %156, %160, %164, %168, %172, %176, %180, %184, %188, %192 in 1 : vector<8x16xf32>, vector<8x16xf32>, vector<8x16xf32>, vector<8x16xf32>, vector<8x16xf32>, vector<8x16xf32>, vector<8x16xf32>, vector<8x16xf32>, vector<8x16xf32>, vector<8x16xf32>, vector<8x16xf32>, vector<8x16xf32>, vector<8x16xf32>, vector<8x16xf32>, vector<8x16xf32>, vector<8x16xf32> -> vector<8x256xf32>
    %230 = tpu.concatenate %196, %200, %204, %208, %212, %216, %220, %224, %228 in 1 : vector<8x16xf32>, vector<8x16xf32>, vector<8x16xf32>, vector<8x16xf32>, vector<8x16xf32>, vector<8x16xf32>, vector<8x16xf32>, vector<8x16xf32>, vector<8x16xf32> -> vector<8x144xf32>
    %231 = tpu.concatenate %229, %230 in 1 : vector<8x256xf32>, vector<8x144xf32> -> vector<8x400xf32>
    %c0_113 = arith.constant 0 : index
    %c0_114 = arith.constant 0 : index
    %232 = vector.load %arg6[%c0_113, %c0_114] : memref<400x32xf32, #tpu.memory_space<vmem>>, vector<400x32xf32>
    %cst_115 = arith.constant dense<0.000000e+00> : vector<8x32xf32>
    %233 = tpu.matmul %231, %232, %cst_115 {dimension_numbers = #tpu.dot_dimension_numbers<[1], [0], [0], [1], [0, 0, 1, 1], [], []>} : vector<8x400xf32>, vector<400x32xf32>, vector<8x32xf32> -> vector<8x32xf32>
    %c0_116 = arith.constant 0 : index
    %c0_117 = arith.constant 0 : index
    %234 = vector.load %arg7[%c0_116, %c0_117] : memref<1x32xf32, #tpu.memory_space<vmem>>, vector<1x32xf32>
    %235 = vector.broadcast %234 : vector<1x32xf32> to vector<8x32xf32>
    %236 = arith.addf %233, %235 : vector<8x32xf32>
    %cst_118 = arith.constant 0.000000e+00 : f32
    %237 = vector.broadcast %cst_118 : f32 to vector<8x32xf32>
    %238 = arith.maximumf %236, %237 : vector<8x32xf32>
    %239 = vector.extract_strided_slice %238 {offsets = [0, 0], sizes = [4, 32], strides = [1, 1]} : vector<8x32xf32> to vector<4x32xf32>
    %cst_119 = arith.constant dense<0xFF800000> : vector<32xf32>
    %240 = vector.multi_reduction <maximumf>, %239, %cst_119 [0] : vector<4x32xf32> to vector<32xf32>
    %241 = vector.shape_cast %240 : vector<32xf32> to vector<1x32xf32>
    %242 = vector.extract_strided_slice %238 {offsets = [4, 0], sizes = [4, 32], strides = [1, 1]} : vector<8x32xf32> to vector<4x32xf32>
    %cst_120 = arith.constant dense<0xFF800000> : vector<32xf32>
    %243 = vector.multi_reduction <maximumf>, %242, %cst_120 [0] : vector<4x32xf32> to vector<32xf32>
    %244 = vector.shape_cast %243 : vector<32xf32> to vector<1x32xf32>
    %245 = tpu.concatenate %241, %244 in 0 : vector<1x32xf32>, vector<1x32xf32> -> vector<2x32xf32>
    %246 = vector.extract_strided_slice %245 {offsets = [0, 0], sizes = [1, 16], strides = [1, 1]} : vector<2x32xf32> to vector<1x16xf32>
    %247 = vector.extract_strided_slice %245 {offsets = [1, 0], sizes = [1, 16], strides = [1, 1]} : vector<2x32xf32> to vector<1x16xf32>
    %248 = tpu.concatenate %246, %247 in 1 : vector<1x16xf32>, vector<1x16xf32> -> vector<1x32xf32>
    %249 = vector.extract_strided_slice %245 {offsets = [0, 16], sizes = [1, 16], strides = [1, 1]} : vector<2x32xf32> to vector<1x16xf32>
    %250 = vector.extract_strided_slice %245 {offsets = [1, 16], sizes = [1, 16], strides = [1, 1]} : vector<2x32xf32> to vector<1x16xf32>
    %251 = tpu.concatenate %249, %250 in 1 : vector<1x16xf32>, vector<1x16xf32> -> vector<1x32xf32>
    %252 = tpu.concatenate %248, %251 in 0 : vector<1x32xf32>, vector<1x32xf32> -> vector<2x32xf32>
    %c0_121 = arith.constant 0 : index
    %c0_122 = arith.constant 0 : index
    %253 = vector.load %arg8[%c0_121, %c0_122] : memref<32x8xf32, #tpu.memory_space<vmem>>, vector<32x8xf32>
    %cst_123 = arith.constant dense<0.000000e+00> : vector<2x8xf32>
    %254 = tpu.matmul %252, %253, %cst_123 {dimension_numbers = #tpu.dot_dimension_numbers<[1], [0], [0], [1], [0, 0, 1, 1], [], []>} : vector<2x32xf32>, vector<32x8xf32>, vector<2x8xf32> -> vector<2x8xf32>
    %c0_124 = arith.constant 0 : index
    %c0_125 = arith.constant 0 : index
    %255 = vector.load %arg9[%c0_124, %c0_125] : memref<1x8xf32, #tpu.memory_space<vmem>>, vector<1x8xf32>
    %256 = vector.broadcast %255 : vector<1x8xf32> to vector<2x8xf32>
    %257 = arith.addf %254, %256 : vector<2x8xf32>
    %cst_126 = arith.constant 0.000000e+00 : f32
    %258 = vector.broadcast %cst_126 : f32 to vector<2x8xf32>
    %259 = arith.maximumf %257, %258 : vector<2x8xf32>
    %c0_127 = arith.constant 0 : index
    %c0_128 = arith.constant 0 : index
    %260 = vector.load %arg10[%c0_127, %c0_128] : memref<2x8xf32, #tpu.memory_space<vmem>>, vector<2x8xf32>
    %261 = arith.mulf %259, %260 : vector<2x8xf32>
    %c0_129 = arith.constant 0 : index
    %c0_130 = arith.constant 0 : index
    %262 = vector.load %arg11[%c0_129, %c0_130] : memref<8x2xf32, #tpu.memory_space<vmem>>, vector<8x2xf32>
    %cst_131 = arith.constant dense<0.000000e+00> : vector<2x2xf32>
    %263 = tpu.matmul %261, %262, %cst_131 {dimension_numbers = #tpu.dot_dimension_numbers<[1], [0], [0], [1], [0, 0, 1, 1], [], []>} : vector<2x8xf32>, vector<8x2xf32>, vector<2x2xf32> -> vector<2x2xf32>
    %c0_132 = arith.constant 0 : index
    %c0_133 = arith.constant 0 : index
    %264 = vector.load %arg12[%c0_132, %c0_133] : memref<1x2xf32, #tpu.memory_space<vmem>>, vector<1x2xf32>
    %265 = vector.broadcast %264 : vector<1x2xf32> to vector<2x2xf32>
    %266 = arith.addf %263, %265 : vector<2x2xf32>
    %c0_134 = arith.constant 0 : index
    %c0_135 = arith.constant 0 : index
    %267 = vector.load %arg13[%c0_134, %c0_135] : memref<2x2xf32, #tpu.memory_space<vmem>>, vector<2x2xf32>
    tpu.vector_store %arg13[%c0_134, %c0_135], %266 {strides = array<i32>} : memref<2x2xf32, #tpu.memory_space<vmem>>, vector<2x2xf32>,
    return
  }
  func.func @transform_0(%arg0: i32) -> (i32, i32, i32) {
    %c0_i32 = arith.constant 0 : i32
    %c0_i32_0 = arith.constant 0 : i32
    %c0_i32_1 = arith.constant 0 : i32
    %c0_i32_2 = arith.constant 0 : i32
    return %c0_i32, %c0_i32_0, %c0_i32_1 : i32, i32, i32
  }
  func.func @transform_1(%arg0: i32) -> (i32, i32) {
    %c0_i32 = arith.constant 0 : i32
    %c0_i32_0 = arith.constant 0 : i32
    %c0_i32_1 = arith.constant 0 : i32
    return %c0_i32, %c0_i32_0 : i32, i32
  }
  func.func @transform_2(%arg0: i32) -> (i32, i32) {
    %c0_i32 = arith.constant 0 : i32
    %c0_i32_0 = arith.constant 0 : i32
    %c0_i32_1 = arith.constant 0 : i32
    return %c0_i32, %c0_i32_0 : i32, i32
  }
  func.func @transform_3(%arg0: i32) -> (i32, i32) {
    %c0_i32 = arith.constant 0 : i32
    %c0_i32_0 = arith.constant 0 : i32
    %c0_i32_1 = arith.constant 0 : i32
    return %c0_i32, %c0_i32_0 : i32, i32
  }
  func.func @transform_4(%arg0: i32) -> (i32, i32) {
    %c0_i32 = arith.constant 0 : i32
    %c0_i32_0 = arith.constant 0 : i32
    %c0_i32_1 = arith.constant 0 : i32
    return %c0_i32, %c0_i32_0 : i32, i32
  }
  func.func @transform_5(%arg0: i32) -> (i32, i32) {
    %c0_i32 = arith.constant 0 : i32
    %c0_i32_0 = arith.constant 0 : i32
    %c0_i32_1 = arith.constant 0 : i32
    return %c0_i32, %c0_i32_0 : i32, i32
  }
  func.func @transform_6(%arg0: i32) -> (i32, i32) {
    %c0_i32 = arith.constant 0 : i32
    %c0_i32_0 = arith.constant 0 : i32
    %c0_i32_1 = arith.constant 0 : i32
    return %c0_i32, %c0_i32_0 : i32, i32
  }
  func.func @transform_7(%arg0: i32) -> (i32, i32) {
    %c0_i32 = arith.constant 0 : i32
    %c0_i32_0 = arith.constant 0 : i32
    %c0_i32_1 = arith.constant 0 : i32
    return %c0_i32, %c0_i32_0 : i32, i32
  }
  func.func @transform_8(%arg0: i32) -> (i32, i32) {
    %c0_i32 = arith.constant 0 : i32
    %c0_i32_0 = arith.constant 0 : i32
    %c0_i32_1 = arith.constant 0 : i32
    return %c0_i32, %c0_i32_0 : i32, i32
  }
  func.func @transform_9(%arg0: i32) -> (i32, i32) {
    %c0_i32 = arith.constant 0 : i32
    %c0_i32_0 = arith.constant 0 : i32
    %c0_i32_1 = arith.constant 0 : i32
    return %c0_i32, %c0_i32_0 : i32, i32
  }
  func.func @transform_10(%arg0: i32) -> (i32, i32) {
    %c0_i32 = arith.constant 0 : i32
    %c0_i32_0 = arith.constant 0 : i32
    %c0_i32_1 = arith.constant 0 : i32
    return %c0_i32, %c0_i32_0 : i32, i32
  }
  func.func @transform_11(%arg0: i32) -> (i32, i32) {
    %c0_i32 = arith.constant 0 : i32
    %c0_i32_0 = arith.constant 0 : i32
    %c0_i32_1 = arith.constant 0 : i32
    return %c0_i32, %c0_i32_0 : i32, i32
  }
  func.func @transform_12(%arg0: i32) -> (i32, i32) {
    %c0_i32 = arith.constant 0 : i32
    %c0_i32_0 = arith.constant 0 : i32
    %c0_i32_1 = arith.constant 0 : i32
    return %c0_i32, %c0_i32_0 : i32, i32
  }
}

</mosaic_0001>

<llo_original>
// kernel: tpu_custom_call.1
$region0: #{tpu_custom_call.1}
  #allocation0 [shape = 'u32[]', space=smem, size = 0x4, offset = 0x4, fixed_abs, tag = 'smem constant byte address 0x4 - core index']
  #allocation1 [shape = 'u32[144,128]{1,0:T(1,128)}', space=vmem, size = 0x12000, scoped, tag = 'internal scratch']
  %s0 = inlined_call_operand.vmem [shape: f32[2,32,2], index: 0, kind: input, shape index: {}]
  %s1 = inlined_call_operand.vmem [shape: f32[32,32], index: 1, kind: input, shape index: {}]
  %s2 = inlined_call_operand.vmem [shape: f32[8,8], index: 2, kind: input, shape index: {}]
  %s3 = inlined_call_operand.vmem [shape: f32[100,16], index: 3, kind: input, shape index: {}]
  %s4 = inlined_call_operand.vmem [shape: f32[1,16], index: 4, kind: input, shape index: {}]
  %s5 = inlined_call_operand.vmem [shape: f32[400,32], index: 5, kind: input, shape index: {}]
  %s6 = inlined_call_operand.vmem [shape: f32[1,32], index: 6, kind: input, shape index: {}]
  %s7 = inlined_call_operand.vmem [shape: f32[32,8], index: 7, kind: input, shape index: {}]
  %s8 = inlined_call_operand.vmem [shape: f32[1,8], index: 8, kind: input, shape index: {}]
  %s9 = inlined_call_operand.vmem [shape: f32[2,8], index: 9, kind: input, shape index: {}]
  %s10 = inlined_call_operand.vmem [shape: f32[8,2], index: 10, kind: input, shape index: {}]
  %s11 = inlined_call_operand.vmem [shape: f32[1,2], index: 11, kind: input, shape index: {}]
  %s12 = inlined_call_operand.hbm [shape: f32[2,2], index: 12, kind: output, shape index: {}]
  %s13 = sld [smem:[#allocation0]]
  $region58: #{tpu_custom_call.1} parent=0
    _
  %s15 = ssub.s32 1, %s13
  %s16 = scalar_select 0, %s15, %s13
  $region1: #{tpu_custom_call.1} parent=0
    #allocation2 [shape = 'u8[1024]{0}', space=vmem, size = 0x400, scoped, tag = 'output window, operand 0, single buffered']
    #allocation3 [shape = 's32[1]{0}', space=sflag, size = 0x4, scoped, tag = 'scoped memory for tpu_custom_call.1']
    %17 = vsyncpa [#allocation3], 0
    // Predicated region
    $region2: #{tpu_custom_call.1} parent=1 // pred_check
      _
    $region3: #{tpu_custom_call.1} parent=1 // pred_check_branch
      %19 = sbr.rel (0) target = $region5
    $region4: #{tpu_custom_call.1} parent=1 // pred_region
      _
    $region5: #{tpu_custom_call.1} parent=1 // pred_fallthru
      _
    // Predicated region
    $region6: #{tpu_custom_call.1} parent=1 // pred_check
      _
    $region7: #{tpu_custom_call.1} parent=1 // pred_check_branch
      %21 = sbr.rel (0) target = $region9
    $region8: #{tpu_custom_call.1} parent=1 // pred_region
      _
    $region9: #{tpu_custom_call.1} parent=1 // pred_fallthru
      _
    // Predicated region
    $region10: #{tpu_custom_call.1} parent=1 // pred_check
      _
    $region11: #{tpu_custom_call.1} parent=1 // pred_check_branch
      %23 = sbr.rel (0) target = $region13
    $region12: #{tpu_custom_call.1} parent=1 // pred_region
      _
    $region13: #{tpu_custom_call.1} parent=1 // pred_fallthru
      _
    // Predicated region
    $region14: #{tpu_custom_call.1} parent=1 // pred_check
      _
    $region15: #{tpu_custom_call.1} parent=1 // pred_check_branch
      %25 = sbr.rel (0) target = $region17
    $region16: #{tpu_custom_call.1} parent=1 // pred_region
      _
    $region17: #{tpu_custom_call.1} parent=1 // pred_fallthru
      _
    // Predicated region
    $region18: #{tpu_custom_call.1} parent=1 // pred_check
      _
    $region19: #{tpu_custom_call.1} parent=1 // pred_check_branch
      %27 = sbr.rel (0) target = $region21
    $region20: #{tpu_custom_call.1} parent=1 // pred_region
      _
    $region21: #{tpu_custom_call.1} parent=1 // pred_fallthru
      _
    // Predicated region
    $region22: #{tpu_custom_call.1} parent=1 // pred_check
      _
    $region23: #{tpu_custom_call.1} parent=1 // pred_check_branch
      %29 = sbr.rel (0) target = $region25
    $region24: #{tpu_custom_call.1} parent=1 // pred_region
      _
    $region25: #{tpu_custom_call.1} parent=1 // pred_fallthru
      _
    // Predicated region
    $region26: #{tpu_custom_call.1} parent=1 // pred_check
      _
    $region27: #{tpu_custom_call.1} parent=1 // pred_check_branch
      %31 = sbr.rel (0) target = $region29
    $region28: #{tpu_custom_call.1} parent=1 // pred_region
      _
    $region29: #{tpu_custom_call.1} parent=1 // pred_fallthru
      _
    // Predicated region
    $region30: #{tpu_custom_call.1} parent=1 // pred_check
      _
    $region31: #{tpu_custom_call.1} parent=1 // pred_check_branch
      %33 = sbr.rel (0) target = $region33
    $region32: #{tpu_custom_call.1} parent=1 // pred_region
      _
    $region33: #{tpu_custom_call.1} parent=1 // pred_fallthru
      _
    // Predicated region
    $region34: #{tpu_custom_call.1} parent=1 // pred_check
      _
    $region35: #{tpu_custom_call.1} parent=1 // pred_check_branch
      %35 = sbr.rel (0) target = $region37
    $region36: #{tpu_custom_call.1} parent=1 // pred_region
      _
    $region37: #{tpu_custom_call.1} parent=1 // pred_fallthru
      _
    // Predicated region
    $region38: #{tpu_custom_call.1} parent=1 // pred_check
      _
    $region39: #{tpu_custom_call.1} parent=1 // pred_check_branch
      %37 = sbr.rel (0) target = $region41
    $region40: #{tpu_custom_call.1} parent=1 // pred_region
      _
    $region41: #{tpu_custom_call.1} parent=1 // pred_fallthru
      _
    // Predicated region
    $region42: #{tpu_custom_call.1} parent=1 // pred_check
      _
    $region43: #{tpu_custom_call.1} parent=1 // pred_check_branch
      %39 = sbr.rel (0) target = $region45
    $region44: #{tpu_custom_call.1} parent=1 // pred_region
      _
    $region45: #{tpu_custom_call.1} parent=1 // pred_fallthru
      _
    // Predicated region
    $region46: #{tpu_custom_call.1} parent=1 // pred_check
      _
    $region47: #{tpu_custom_call.1} parent=1 // pred_check_branch
      %41 = sbr.rel (0) target = $region49
    $region48: #{tpu_custom_call.1} parent=1 // pred_region
      _
    $region49: #{tpu_custom_call.1} parent=1 // pred_fallthru
      _
    %v42 = vld [vmem:[%s0] sm:$0xff]
    %v43 = vld [vmem:[%s0 + $0x8] sm:$0xff]
    %v44 = vld [vmem:[%s0 + $0x10] sm:$0xff]
    %v45 = vld [vmem:[%s0 + $0x18] sm:$0xff]
    %v46 = vld [vmem:[%s0 + $0x20] sm:$0xff]
    %v47 = vld [vmem:[%s0 + $0x28] sm:$0xff]
    %v48 = vld [vmem:[%s0 + $0x30] sm:$0xff]
    %v49 = vld [vmem:[%s0 + $0x38] sm:$0xff]
    %54 = vrot.lane.b32.xlu0 %v46, 2
    %v55 = vpop.permute.xlu0 %54
    %56 = vrot.lane.b32.xlu0 %v47, 2
    %v57 = vpop.permute.xlu0 %56
    %58 = vrot.lane.b32.xlu0 %v48, 2
    %v59 = vpop.permute.xlu0 %58
    %60 = vrot.lane.b32.xlu0 %v49, 2
    %v61 = vpop.permute.xlu0 %60
    %vm66 = vcmask 15360
    %v67 = vsel %vm66, %v42, %v55
    %v68 = vsel %vm66, %v43, %v57
    %v69 = vsel %vm66, %v44, %v59
    %v70 = vsel %vm66, %v45, %v61
    %v71 = vld [vmem:[%s1] sm:$0xff]
    %v72 = vld [vmem:[%s1 + $0x8] sm:$0xff]
    %v73 = vld [vmem:[%s1 + $0x10] sm:$0xff]
    %v74 = vld [vmem:[%s1 + $0x18] sm:$0xff]
    %vm75 = vcmask 261120
    %v77 = vsel %vm75, %v71, 0
    %v80 = vsel %vm75, %v72, 0
    %v83 = vsel %vm75, %v73, 0
    %v86 = vsel %vm75, %v74, 0
    %88 = vmatprep.subr.mxu0 0.0
    %89 = vmatpush1.msra.mxu0 %v67
    %90 = vmatprep.subr.mxu0 0.0
    %91 = vmatpush1.msra.mxu0 %v68
    %92 = vmatprep.subr.mxu0 0.0
    %93 = vmatpush1.msra.mxu0 %v69
    %94 = vmatprep.subr.mxu0 0.0
    %95 = vmatpush1.msra.mxu0 %v70
    %96 = vmatprep.subr.mxu0 0.0
    %97 = vmatpush1.msra.mxu0 0.0
    %98 = vmatprep.subr.mxu0 0.0
    %99 = vmatpush1.msra.mxu0 0.0
    %100 = vmatprep.subr.mxu0 0.0
    %101 = vmatpush1.msra.mxu0 0.0
    %102 = vmatprep.subr.mxu0 0.0
    %103 = vmatpush1.msra.mxu0 0.0
    %104 = vmatprep.subr.mxu0 0.0
    %105 = vmatpush1.msra.mxu0 0.0
    %106 = vmatprep.subr.mxu0 0.0
    %107 = vmatpush1.msra.mxu0 0.0
    %108 = vmatprep.subr.mxu0 0.0
    %109 = vmatpush1.msra.mxu0 0.0
    %110 = vmatprep.subr.mxu0 0.0
    %111 = vmatpush1.msra.mxu0 0.0
    %112 = vmatprep.subr.mxu0 0.0
    %113 = vmatpush1.msra.mxu0 0.0
    %114 = vmatprep.subr.mxu0 0.0
    %115 = vmatpush1.msra.mxu0 0.0
    %116 = vmatprep.subr.mxu0 0.0
    %117 = vmatpush1.msra.mxu0 0.0
    %118 = vmatprep.subr.mxu0 0.0
    %119 = vmatpush1.msra.mxu0 0.0
    %120 = vmatprep.subr.mxu0 0.0
    %121 = vmatpush1.msra.mxu0 0.0
    %122 = vmatprep.subr.mxu0 0.0
    %123 = vmatpush1.msra.mxu0 0.0
    %124 = vmatprep.subr.mxu0 0.0
    %125 = vmatpush1.msra.mxu0 0.0
    %126 = vmatprep.subr.mxu0 0.0
    %127 = vmatpush1.msra.mxu0 0.0
    %128 = vmatprep.subr.mxu0 0.0
    %129 = vmatpush1.msra.mxu0 0.0
    %130 = vmatprep.subr.mxu0 0.0
    %131 = vmatpush1.msra.mxu0 0.0
    %132 = vmatprep.subr.mxu0 0.0
    %133 = vmatpush1.msra.mxu0 0.0
    %134 = vmatprep.subr.mxu0 0.0
    %135 = vmatpush1.msra.mxu0 0.0
    %136 = vmatprep.subr.mxu0 0.0
    %137 = vmatpush1.msra.mxu0 0.0
    %138 = vmatprep.subr.mxu0 0.0
    %139 = vmatpush1.msra.mxu0 0.0
    %140 = vmatprep.subr.mxu0 0.0
    %141 = vmatpush1.msra.mxu0 0.0
    %142 = vmatprep.subr.mxu0 0.0
    %143 = vmatpush1.msra.mxu0 0.0
    %144 = vmatprep.subr.mxu0 0.0
    %145 = vmatpush1.msra.mxu0 0.0
    %146 = vmatprep.subr.mxu0 0.0
    %147 = vmatpush1.msra.mxu0 0.0
    %148 = vmatprep.subr.mxu0 0.0
    %149 = vmatpush1.msra.mxu0 0.0
    %150 = vmatprep.subr.mxu0 0.0
    %151 = vmatpush1.msra.mxu0 0.0
    %152 = vmatprep.mubr.f32.mxu0 0.0
    %153 = vmatmul.mubr.f32.gmra.mrb[0].mxu0 %v77
    %v154 = vpop.f32.mrb[0].mxu0
    %v155 = vadd.f32 0.0, %v154
    %v156 = vpop.f32.mrb[0].mxu0
    %157 = vmatprep.mubr.f32.mxu0 0.0
    %158 = vmatmul.mubr.f32.gmra.mrb[0].mxu0 %v80
    %v159 = vpop.f32.mrb[0].mxu0
    %v160 = vadd.f32 0.0, %v159
    %v161 = vpop.f32.mrb[0].mxu0
    %162 = vmatprep.mubr.f32.mxu0 0.0
    %163 = vmatmul.mubr.f32.gmra.mrb[0].mxu0 %v83
    %v164 = vpop.f32.mrb[0].mxu0
    %v165 = vadd.f32 0.0, %v164
    %v166 = vpop.f32.mrb[0].mxu0
    %167 = vmatprep.mubr.f32.mxu0 0.0
    %168 = vmatmul.mubr.f32.gmra.mrb[0].mxu0 %v86
    %v169 = vpop.f32.mrb[0].mxu0
    %v170 = vadd.f32 0.0, %v169
    %v171 = vpop.f32.mrb[0].mxu0
    %172 = vdwg.mxu0
    %173 = vmatprep.subr.mxu0 0.0
    %174 = vmatpush1.msra.mxu0 %v155
    %175 = vmatprep.subr.mxu0 0.0
    %176 = vmatpush1.msra.mxu0 %v160
    %177 = vmatprep.subr.mxu0 0.0
    %178 = vmatpush1.msra.mxu0 %v165
    %179 = vmatprep.subr.mxu0 0.0
    %180 = vmatpush1.msra.mxu0 %v170
    %181 = vmatprep.subr.mxu0 0.0
    %182 = vmatpush1.msra.mxu0 0.0
    %183 = vmatprep.subr.mxu0 0.0
    %184 = vmatpush1.msra.mxu0 0.0
    %185 = vmatprep.subr.mxu0 0.0
    %186 = vmatpush1.msra.mxu0 0.0
    %187 = vmatprep.subr.mxu0 0.0
    %188 = vmatpush1.msra.mxu0 0.0
    %189 = vmatprep.subr.mxu0 0.0
    %190 = vmatpush1.msra.mxu0 0.0
    %191 = vmatprep.subr.mxu0 0.0
    %192 = vmatpush1.msra.mxu0 0.0
    %193 = vmatprep.subr.mxu0 0.0
    %194 = vmatpush1.msra.mxu0 0.0
    %195 = vmatprep.subr.mxu0 0.0
    %196 = vmatpush1.msra.mxu0 0.0
    %197 = vmatprep.subr.mxu0 0.0
    %198 = vmatpush1.msra.mxu0 0.0
    %199 = vmatprep.subr.mxu0 0.0
    %200 = vmatpush1.msra.mxu0 0.0
    %201 = vmatprep.subr.mxu0 0.0
    %202 = vmatpush1.msra.mxu0 0.0
    %203 = vmatprep.subr.mxu0 0.0
    %204 = vmatpush1.msra.mxu0 0.0
    %205 = vmatprep.subr.mxu0 0.0
    %206 = vmatpush1.msra.mxu0 0.0
    %207 = vmatprep.subr.mxu0 0.0
    %208 = vmatpush1.msra.mxu0 0.0
    %209 = vmatprep.subr.mxu0 0.0
    %210 = vmatpush1.msra.mxu0 0.0
    %211 = vmatprep.subr.mxu0 0.0
    %212 = vmatpush1.msra.mxu0 0.0
    %213 = vmatprep.subr.mxu0 0.0
    %214 = vmatpush1.msra.mxu0 0.0
    %215 = vmatprep.subr.mxu0 0.0
    %216 = vmatpush1.msra.mxu0 0.0
    %217 = vmatprep.subr.mxu0 0.0
    %218 = vmatpush1.msra.mxu0 0.0
    %219 = vmatprep.subr.mxu0 0.0
    %220 = vmatpush1.msra.mxu0 0.0
    %221 = vmatprep.subr.mxu0 0.0
    %222 = vmatpush1.msra.mxu0 0.0
    %223 = vmatprep.subr.mxu0 0.0
    %224 = vmatpush1.msra.mxu0 0.0
    %225 = vmatprep.subr.mxu0 0.0
    %226 = vmatpush1.msra.mxu0 0.0
    %227 = vmatprep.subr.mxu0 0.0
    %228 = vmatpush1.msra.mxu0 0.0
    %229 = vmatprep.subr.mxu0 0.0
    %230 = vmatpush1.msra.mxu0 0.0
    %231 = vmatprep.subr.mxu0 0.0
    %232 = vmatpush1.msra.mxu0 0.0
    %233 = vmatprep.subr.mxu0 0.0
    %234 = vmatpush1.msra.mxu0 0.0
    %235 = vmatprep.subr.mxu0 0.0
    %236 = vmatpush1.msra.mxu0 0.0
    %237 = vmatprep.mubr.f32.mxu0 0.0
    %238 = vmatmul.mubr.f32.gmra.mrb[0].mxu0 %v77
    %v239 = vpop.f32.mrb[0].mxu0
    %v240 = vadd.f32 0.0, %v239
    %v241 = vpop.f32.mrb[0].mxu0
    %242 = vmatprep.mubr.f32.mxu0 0.0
    %243 = vmatmul.mubr.f32.gmra.mrb[0].mxu0 %v80
    %v244 = vpop.f32.mrb[0].mxu0
    %v245 = vadd.f32 0.0, %v244
    %v246 = vpop.f32.mrb[0].mxu0
    %247 = vmatprep.mubr.f32.mxu0 0.0
    %248 = vmatmul.mubr.f32.gmra.mrb[0].mxu0 %v83
    %v249 = vpop.f32.mrb[0].mxu0
    %v250 = vadd.f32 0.0, %v249
    %v251 = vpop.f32.mrb[0].mxu0
    %252 = vmatprep.mubr.f32.mxu0 0.0
    %253 = vmatmul.mubr.f32.gmra.mrb[0].mxu0 %v86
    %v254 = vpop.f32.mrb[0].mxu0
    %v255 = vadd.f32 0.0, %v254
    %v256 = vpop.f32.mrb[0].mxu0
    %257 = vdwg.mxu0
    %v258 = vmul.f32 %v240, 2.0
    %v259 = vmul.f32 %v245, 2.0
    %v260 = vmul.f32 %v250, 2.0
    %v261 = vmul.f32 %v255, 2.0
    %v262 = vsub.f32 %v258, %v67
    %v263 = vsub.f32 %v259, %v68
    %v264 = vsub.f32 %v260, %v69
    %v265 = vsub.f32 %v261, %v70
    %266 = vmatprep.subr.mxu0 0.0
    %267 = vmatpush1.msra.mxu0 %v262
    %268 = vmatprep.subr.mxu0 0.0
    %269 = vmatpush1.msra.mxu0 %v263
    %270 = vmatprep.subr.mxu0 0.0
    %271 = vmatpush1.msra.mxu0 %v264
    %272 = vmatprep.subr.mxu0 0.0
    %273 = vmatpush1.msra.mxu0 %v265
    %274 = vmatprep.subr.mxu0 0.0
    %275 = vmatpush1.msra.mxu0 0.0
    %276 = vmatprep.subr.mxu0 0.0
    %277 = vmatpush1.msra.mxu0 0.0
    %278 = vmatprep.subr.mxu0 0.0
    %279 = vmatpush1.msra.mxu0 0.0
    %280 = vmatprep.subr.mxu0 0.0
    %281 = vmatpush1.msra.mxu0 0.0
    %282 = vmatprep.subr.mxu0 0.0
    %283 = vmatpush1.msra.mxu0 0.0
    %284 = vmatprep.subr.mxu0 0.0
    %285 = vmatpush1.msra.mxu0 0.0
    %286 = vmatprep.subr.mxu0 0.0
    %287 = vmatpush1.msra.mxu0 0.0
    %288 = vmatprep.subr.mxu0 0.0
    %289 = vmatpush1.msra.mxu0 0.0
    %290 = vmatprep.subr.mxu0 0.0
    %291 = vmatpush1.msra.mxu0 0.0
    %292 = vmatprep.subr.mxu0 0.0
    %293 = vmatpush1.msra.mxu0 0.0
    %294 = vmatprep.subr.mxu0 0.0
    %295 = vmatpush1.msra.mxu0 0.0
    %296 = vmatprep.subr.mxu0 0.0
    %297 = vmatpush1.msra.mxu0 0.0
    %298 = vmatprep.subr.mxu0 0.0
    %299 = vmatpush1.msra.mxu0 0.0
    %300 = vmatprep.subr.mxu0 0.0
    %301 = vmatpush1.msra.mxu0 0.0
    %302 = vmatprep.subr.mxu0 0.0
    %303 = vmatpush1.msra.mxu0 0.0
    %304 = vmatprep.subr.mxu0 0.0
    %305 = vmatpush1.msra.mxu0 0.0
    %306 = vmatprep.subr.mxu0 0.0
    %307 = vmatpush1.msra.mxu0 0.0
    %308 = vmatprep.subr.mxu0 0.0
    %309 = vmatpush1.msra.mxu0 0.0
    %310 = vmatprep.subr.mxu0 0.0
    %311 = vmatpush1.msra.mxu0 0.0
    %312 = vmatprep.subr.mxu0 0.0
    %313 = vmatpush1.msra.mxu0 0.0
    %314 = vmatprep.subr.mxu0 0.0
    %315 = vmatpush1.msra.mxu0 0.0
    %316 = vmatprep.subr.mxu0 0.0
    %317 = vmatpush1.msra.mxu0 0.0
    %318 = vmatprep.subr.mxu0 0.0
    %319 = vmatpush1.msra.mxu0 0.0
    %320 = vmatprep.subr.mxu0 0.0
    %321 = vmatpush1.msra.mxu0 0.0
    %322 = vmatprep.subr.mxu0 0.0
    %323 = vmatpush1.msra.mxu0 0.0
    %324 = vmatprep.subr.mxu0 0.0
    %325 = vmatpush1.msra.mxu0 0.0
    %326 = vmatprep.subr.mxu0 0.0
    %327 = vmatpush1.msra.mxu0 0.0
    %328 = vmatprep.subr.mxu0 0.0
    %329 = vmatpush1.msra.mxu0 0.0
    %330 = vmatprep.mubr.f32.mxu0 0.0
    %331 = vmatmul.mubr.f32.gmra.mrb[0].mxu0 %v77
    %v332 = vpop.f32.mrb[0].mxu0
    %v333 = vadd.f32 0.0, %v332
    %v334 = vpop.f32.mrb[0].mxu0
    %335 = vmatprep.mubr.f32.mxu0 0.0
    %336 = vmatmul.mubr.f32.gmra.mrb[0].mxu0 %v80
    %v337 = vpop.f32.mrb[0].mxu0
    %v338 = vadd.f32 0.0, %v337
    %v339 = vpop.f32.mrb[0].mxu0
    %340 = vmatprep.mubr.f32.mxu0 0.0
    %341 = vmatmul.mubr.f32.gmra.mrb[0].mxu0 %v83
    %v342 = vpop.f32.mrb[0].mxu0
    %v343 = vadd.f32 0.0, %v342
    %v344 = vpop.f32.mrb[0].mxu0
    %345 = vmatprep.mubr.f32.mxu0 0.0
    %346 = vmatmul.mubr.f32.gmra.mrb[0].mxu0 %v86
    %v347 = vpop.f32.mrb[0].mxu0
    %v348 = vadd.f32 0.0, %v347
    %v349 = vpop.f32.mrb[0].mxu0
    %350 = vdwg.mxu0
    %v351 = vmul.f32 %v333, 2.0
    %v352 = vmul.f32 %v338, 2.0
    %v353 = vmul.f32 %v343, 2.0
    %v354 = vmul.f32 %v348, 2.0
    %v355 = vsub.f32 %v351, %v155
    %v356 = vsub.f32 %v352, %v160
    %v357 = vsub.f32 %v353, %v165
    %v358 = vsub.f32 %v354, %v170
    %359 = vmatprep.subr.mxu0 0.0
    %360 = vmatpush1.msra.mxu0 %v355
    %361 = vmatprep.subr.mxu0 0.0
    %362 = vmatpush1.msra.mxu0 %v356
    %363 = vmatprep.subr.mxu0 0.0
    %364 = vmatpush1.msra.mxu0 %v357
    %365 = vmatprep.subr.mxu0 0.0
    %366 = vmatpush1.msra.mxu0 %v358
    %367 = vmatprep.subr.mxu0 0.0
    %368 = vmatpush1.msra.mxu0 0.0
    %369 = vmatprep.subr.mxu0 0.0
    %370 = vmatpush1.msra.mxu0 0.0
    %371 = vmatprep.subr.mxu0 0.0
    %372 = vmatpush1.msra.mxu0 0.0
    %373 = vmatprep.subr.mxu0 0.0
    %374 = vmatpush1.msra.mxu0 0.0
    %375 = vmatprep.subr.mxu0 0.0
    %376 = vmatpush1.msra.mxu0 0.0
    %377 = vmatprep.subr.mxu0 0.0
    %378 = vmatpush1.msra.mxu0 0.0
    %379 = vmatprep.subr.mxu0 0.0
    %380 = vmatpush1.msra.mxu0 0.0
    %381 = vmatprep.subr.mxu0 0.0
    %382 = vmatpush1.msra.mxu0 0.0
    %383 = vmatprep.subr.mxu0 0.0
    %384 = vmatpush1.msra.mxu0 0.0
    %385 = vmatprep.subr.mxu0 0.0
    %386 = vmatpush1.msra.mxu0 0.0
    %387 = vmatprep.subr.mxu0 0.0
    %388 = vmatpush1.msra.mxu0 0.0
    %389 = vmatprep.subr.mxu0 0.0
    %390 = vmatpush1.msra.mxu0 0.0
    %391 = vmatprep.subr.mxu0 0.0
    %392 = vmatpush1.msra.mxu0 0.0
    %393 = vmatprep.subr.mxu0 0.0
    %394 = vmatpush1.msra.mxu0 0.0
    %395 = vmatprep.subr.mxu0 0.0
    %396 = vmatpush1.msra.mxu0 0.0
    %397 = vmatprep.subr.mxu0 0.0
    %398 = vmatpush1.msra.mxu0 0.0
    %399 = vmatprep.subr.mxu0 0.0
    %400 = vmatpush1.msra.mxu0 0.0
    %401 = vmatprep.subr.mxu0 0.0
    %402 = vmatpush1.msra.mxu0 0.0
    %403 = vmatprep.subr.mxu0 0.0
    %404 = vmatpush1.msra.mxu0 0.0
    %405 = vmatprep.subr.mxu0 0.0
    %406 = vmatpush1.msra.mxu0 0.0
    %407 = vmatprep.subr.mxu0 0.0
    %408 = vmatpush1.msra.mxu0 0.0
    %409 = vmatprep.subr.mxu0 0.0
    %410 = vmatpush1.msra.mxu0 0.0
    %411 = vmatprep.subr.mxu0 0.0
    %412 = vmatpush1.msra.mxu0 0.0
    %413 = vmatprep.subr.mxu0 0.0
    %414 = vmatpush1.msra.mxu0 0.0
    %415 = vmatprep.subr.mxu0 0.0
    %416 = vmatpush1.msra.mxu0 0.0
    %417 = vmatprep.subr.mxu0 0.0
    %418 = vmatpush1.msra.mxu0 0.0
    %419 = vmatprep.subr.mxu0 0.0
    %420 = vmatpush1.msra.mxu0 0.0
    %421 = vmatprep.subr.mxu0 0.0
    %422 = vmatpush1.msra.mxu0 0.0
    %423 = vmatprep.mubr.f32.mxu0 0.0
    %424 = vmatmul.mubr.f32.gmra.mrb[0].mxu0 %v77
    %v425 = vpop.f32.mrb[0].mxu0
    %v426 = vadd.f32 0.0, %v425
    %v427 = vpop.f32.mrb[0].mxu0
    %428 = vmatprep.mubr.f32.mxu0 0.0
    %429 = vmatmul.mubr.f32.gmra.mrb[0].mxu0 %v80
    %v430 = vpop.f32.mrb[0].mxu0
    %v431 = vadd.f32 0.0, %v430
    %v432 = vpop.f32.mrb[0].mxu0
    %433 = vmatprep.mubr.f32.mxu0 0.0
    %434 = vmatmul.mubr.f32.gmra.mrb[0].mxu0 %v83
    %v435 = vpop.f32.mrb[0].mxu0
    %v436 = vadd.f32 0.0, %v435
    %v437 = vpop.f32.mrb[0].mxu0
    %438 = vmatprep.mubr.f32.mxu0 0.0
    %439 = vmatmul.mubr.f32.gmra.mrb[0].mxu0 %v86
    %v440 = vpop.f32.mrb[0].mxu0
    %v441 = vadd.f32 0.0, %v440
    %v442 = vpop.f32.mrb[0].mxu0
    %443 = vdwg.mxu0
    %v444 = vmul.f32 %v426, 2.0
    %v445 = vmul.f32 %v431, 2.0
    %v446 = vmul.f32 %v436, 2.0
    %v447 = vmul.f32 %v441, 2.0
    %v448 = vsub.f32 %v444, %v262
    %v449 = vsub.f32 %v445, %v263
    %v450 = vsub.f32 %v446, %v264
    %v451 = vsub.f32 %v447, %v265
    %452 = vmatprep.subr.mxu0 0.0
    %453 = vmatpush1.msra.mxu0 %v448
    %454 = vmatprep.subr.mxu0 0.0
    %455 = vmatpush1.msra.mxu0 %v449
    %456 = vmatprep.subr.mxu0 0.0
    %457 = vmatpush1.msra.mxu0 %v450
    %458 = vmatprep.subr.mxu0 0.0
    %459 = vmatpush1.msra.mxu0 %v451
    %460 = vmatprep.subr.mxu0 0.0
    %461 = vmatpush1.msra.mxu0 0.0
    %462 = vmatprep.subr.mxu0 0.0
    %463 = vmatpush1.msra.mxu0 0.0
    %464 = vmatprep.subr.mxu0 0.0
    %465 = vmatpush1.msra.mxu0 0.0
    %466 = vmatprep.subr.mxu0 0.0
    %467 = vmatpush1.msra.mxu0 0.0
    %468 = vmatprep.subr.mxu0 0.0
    %469 = vmatpush1.msra.mxu0 0.0
    %470 = vmatprep.subr.mxu0 0.0
    %471 = vmatpush1.msra.mxu0 0.0
    %472 = vmatprep.subr.mxu0 0.0
    %473 = vmatpush1.msra.mxu0 0.0
    %474 = vmatprep.subr.mxu0 0.0
    %475 = vmatpush1.msra.mxu0 0.0
    %476 = vmatprep.subr.mxu0 0.0
    %477 = vmatpush1.msra.mxu0 0.0
    %478 = vmatprep.subr.mxu0 0.0
    %479 = vmatpush1.msra.mxu0 0.0
    %480 = vmatprep.subr.mxu0 0.0
    %481 = vmatpush1.msra.mxu0 0.0
    %482 = vmatprep.subr.mxu0 0.0
    %483 = vmatpush1.msra.mxu0 0.0
    %484 = vmatprep.subr.mxu0 0.0
    %485 = vmatpush1.msra.mxu0 0.0
    %486 = vmatprep.subr.mxu0 0.0
    %487 = vmatpush1.msra.mxu0 0.0
    %488 = vmatprep.subr.mxu0 0.0
    %489 = vmatpush1.msra.mxu0 0.0
    %490 = vmatprep.subr.mxu0 0.0
    %491 = vmatpush1.msra.mxu0 0.0
    %492 = vmatprep.subr.mxu0 0.0
    %493 = vmatpush1.msra.mxu0 0.0
    %494 = vmatprep.subr.mxu0 0.0
    %495 = vmatpush1.msra.mxu0 0.0
    %496 = vmatprep.subr.mxu0 0.0
    %497 = vmatpush1.msra.mxu0 0.0
    %498 = vmatprep.subr.mxu0 0.0
    %499 = vmatpush1.msra.mxu0 0.0
    %500 = vmatprep.subr.mxu0 0.0
    %501 = vmatpush1.msra.mxu0 0.0
    %502 = vmatprep.subr.mxu0 0.0
    %503 = vmatpush1.msra.mxu0 0.0
    %504 = vmatprep.subr.mxu0 0.0
    %505 = vmatpush1.msra.mxu0 0.0
    %506 = vmatprep.subr.mxu0 0.0
    %507 = vmatpush1.msra.mxu0 0.0
    %508 = vmatprep.subr.mxu0 0.0
    %509 = vmatpush1.msra.mxu0 0.0
    %510 = vmatprep.subr.mxu0 0.0
    %511 = vmatpush1.msra.mxu0 0.0
    %512 = vmatprep.subr.mxu0 0.0
    %513 = vmatpush1.msra.mxu0 0.0
    %514 = vmatprep.subr.mxu0 0.0
    %515 = vmatpush1.msra.mxu0 0.0
    %516 = vmatprep.mubr.f32.mxu0 0.0
    %517 = vmatmul.mubr.f32.gmra.mrb[0].mxu0 %v77
    %v518 = vpop.f32.mrb[0].mxu0
    %v519 = vadd.f32 0.0, %v518
    %v520 = vpop.f32.mrb[0].mxu0
    %521 = vmatprep.mubr.f32.mxu0 0.0
    %522 = vmatmul.mubr.f32.gmra.mrb[0].mxu0 %v80
    %v523 = vpop.f32.mrb[0].mxu0
    %v524 = vadd.f32 0.0, %v523
    %v525 = vpop.f32.mrb[0].mxu0
    %526 = vmatprep.mubr.f32.mxu0 0.0
    %527 = vmatmul.mubr.f32.gmra.mrb[0].mxu0 %v83
    %v528 = vpop.f32.mrb[0].mxu0
    %v529 = vadd.f32 0.0, %v528
    %v530 = vpop.f32.mrb[0].mxu0
    %531 = vmatprep.mubr.f32.mxu0 0.0
    %532 = vmatmul.mubr.f32.gmra.mrb[0].mxu0 %v86
    %v533 = vpop.f32.mrb[0].mxu0
    %v534 = vadd.f32 0.0, %v533
    %v535 = vpop.f32.mrb[0].mxu0
    %536 = vdwg.mxu0
    %v537 = vmul.f32 %v519, 2.0
    %v538 = vmul.f32 %v524, 2.0
    %v539 = vmul.f32 %v529, 2.0
    %v540 = vmul.f32 %v534, 2.0
    %v541 = vsub.f32 %v537, %v355
    %v542 = vsub.f32 %v538, %v356
    %v543 = vsub.f32 %v539, %v357
    %v544 = vsub.f32 %v540, %v358
    %545 = vmatprep.subr.mxu0 0.0
    %546 = vmatpush1.msra.mxu0 %v541
    %547 = vmatprep.subr.mxu0 0.0
    %548 = vmatpush1.msra.mxu0 %v542
    %549 = vmatprep.subr.mxu0 0.0
    %550 = vmatpush1.msra.mxu0 %v543
    %551 = vmatprep.subr.mxu0 0.0
    %552 = vmatpush1.msra.mxu0 %v544
    %553 = vmatprep.subr.mxu0 0.0
    %554 = vmatpush1.msra.mxu0 0.0
    %555 = vmatprep.subr.mxu0 0.0
    %556 = vmatpush1.msra.mxu0 0.0
    %557 = vmatprep.subr.mxu0 0.0
    %558 = vmatpush1.msra.mxu0 0.0
    %559 = vmatprep.subr.mxu0 0.0
    %560 = vmatpush1.msra.mxu0 0.0
    %561 = vmatprep.subr.mxu0 0.0
    %562 = vmatpush1.msra.mxu0 0.0
    %563 = vmatprep.subr.mxu0 0.0
    %564 = vmatpush1.msra.mxu0 0.0
    %565 = vmatprep.subr.mxu0 0.0
    %566 = vmatpush1.msra.mxu0 0.0
    %567 = vmatprep.subr.mxu0 0.0
    %568 = vmatpush1.msra.mxu0 0.0
    %569 = vmatprep.subr.mxu0 0.0
    %570 = vmatpush1.msra.mxu0 0.0
    %571 = vmatprep.subr.mxu0 0.0
    %572 = vmatpush1.msra.mxu0 0.0
    %573 = vmatprep.subr.mxu0 0.0
    %574 = vmatpush1.msra.mxu0 0.0
    %575 = vmatprep.subr.mxu0 0.0
    %576 = vmatpush1.msra.mxu0 0.0
    %577 = vmatprep.subr.mxu0 0.0
    %578 = vmatpush1.msra.mxu0 0.0
    %579 = vmatprep.subr.mxu0 0.0
    %580 = vmatpush1.msra.mxu0 0.0
    %581 = vmatprep.subr.mxu0 0.0
    %582 = vmatpush1.msra.mxu0 0.0
    %583 = vmatprep.subr.mxu0 0.0
    %584 = vmatpush1.msra.mxu0 0.0
    %585 = vmatprep.subr.mxu0 0.0
    %586 = vmatpush1.msra.mxu0 0.0
    %587 = vmatprep.subr.mxu0 0.0
    %588 = vmatpush1.msra.mxu0 0.0
    %589 = vmatprep.subr.mxu0 0.0
    %590 = vmatpush1.msra.mxu0 0.0
    %591 = vmatprep.subr.mxu0 0.0
    %592 = vmatpush1.msra.mxu0 0.0
    %593 = vmatprep.subr.mxu0 0.0
    %594 = vmatpush1.msra.mxu0 0.0
    %595 = vmatprep.subr.mxu0 0.0
    %596 = vmatpush1.msra.mxu0 0.0
    %597 = vmatprep.subr.mxu0 0.0
    %598 = vmatpush1.msra.mxu0 0.0
    %599 = vmatprep.subr.mxu0 0.0
    %600 = vmatpush1.msra.mxu0 0.0
    %601 = vmatprep.subr.mxu0 0.0
    %602 = vmatpush1.msra.mxu0 0.0
    %603 = vmatprep.subr.mxu0 0.0
    %604 = vmatpush1.msra.mxu0 0.0
    %605 = vmatprep.subr.mxu0 0.0
    %606 = vmatpush1.msra.mxu0 0.0
    %607 = vmatprep.subr.mxu0 0.0
    %608 = vmatpush1.msra.mxu0 0.0
    %609 = vmatprep.mubr.f32.mxu0 0.0
    %610 = vmatmul.mubr.f32.gmra.mrb[0].mxu0 %v77
    %v611 = vpop.f32.mrb[0].mxu0
    %v612 = vadd.f32 0.0, %v611
    %v613 = vpop.f32.mrb[0].mxu0
    %614 = vmatprep.mubr.f32.mxu0 0.0
    %615 = vmatmul.mubr.f32.gmra.mrb[0].mxu0 %v80
    %v616 = vpop.f32.mrb[0].mxu0
    %v617 = vadd.f32 0.0, %v616
    %v618 = vpop.f32.mrb[0].mxu0
    %619 = vmatprep.mubr.f32.mxu0 0.0
    %620 = vmatmul.mubr.f32.gmra.mrb[0].mxu0 %v83
    %v621 = vpop.f32.mrb[0].mxu0
    %v622 = vadd.f32 0.0, %v621
    %v623 = vpop.f32.mrb[0].mxu0
    %624 = vmatprep.mubr.f32.mxu0 0.0
    %625 = vmatmul.mubr.f32.gmra.mrb[0].mxu0 %v86
    %v626 = vpop.f32.mrb[0].mxu0
    %v627 = vadd.f32 0.0, %v626
    %v628 = vpop.f32.mrb[0].mxu0
    %629 = vdwg.mxu0
    %v630 = vmul.f32 %v612, 2.0
    %v631 = vmul.f32 %v617, 2.0
    %v632 = vmul.f32 %v622, 2.0
    %v633 = vmul.f32 %v627, 2.0
    %v634 = vsub.f32 %v630, %v448
    %v635 = vsub.f32 %v631, %v449
    %v636 = vsub.f32 %v632, %v450
    %v637 = vsub.f32 %v633, %v451
    %638 = vmatprep.subr.mxu0 0.0
    %639 = vmatpush1.msra.mxu0 %v634
    %640 = vmatprep.subr.mxu0 0.0
    %641 = vmatpush1.msra.mxu0 %v635
    %642 = vmatprep.subr.mxu0 0.0
    %643 = vmatpush1.msra.mxu0 %v636
    %644 = vmatprep.subr.mxu0 0.0
    %645 = vmatpush1.msra.mxu0 %v637
    %646 = vmatprep.subr.mxu0 0.0
    %647 = vmatpush1.msra.mxu0 0.0
    %648 = vmatprep.subr.mxu0 0.0
    %649 = vmatpush1.msra.mxu0 0.0
    %650 = vmatprep.subr.mxu0 0.0
    %651 = vmatpush1.msra.mxu0 0.0
    %652 = vmatprep.subr.mxu0 0.0
    %653 = vmatpush1.msra.mxu0 0.0
    %654 = vmatprep.subr.mxu0 0.0
    %655 = vmatpush1.msra.mxu0 0.0
    %656 = vmatprep.subr.mxu0 0.0
    %657 = vmatpush1.msra.mxu0 0.0
    %658 = vmatprep.subr.mxu0 0.0
    %659 = vmatpush1.msra.mxu0 0.0
    %660 = vmatprep.subr.mxu0 0.0
    %661 = vmatpush1.msra.mxu0 0.0
    %662 = vmatprep.subr.mxu0 0.0
    %663 = vmatpush1.msra.mxu0 0.0
    %664 = vmatprep.subr.mxu0 0.0
    %665 = vmatpush1.msra.mxu0 0.0
    %666 = vmatprep.subr.mxu0 0.0
    %667 = vmatpush1.msra.mxu0 0.0
    %668 = vmatprep.subr.mxu0 0.0
    %669 = vmatpush1.msra.mxu0 0.0
    %670 = vmatprep.subr.mxu0 0.0
    %671 = vmatpush1.msra.mxu0 0.0
    %672 = vmatprep.subr.mxu0 0.0
    %673 = vmatpush1.msra.mxu0 0.0
    %674 = vmatprep.subr.mxu0 0.0
    %675 = vmatpush1.msra.mxu0 0.0
    %676 = vmatprep.subr.mxu0 0.0
    %677 = vmatpush1.msra.mxu0 0.0
    %678 = vmatprep.subr.mxu0 0.0
    %679 = vmatpush1.msra.mxu0 0.0
    %680 = vmatprep.subr.mxu0 0.0
    %681 = vmatpush1.msra.mxu0 0.0
    %682 = vmatprep.subr.mxu0 0.0
    %683 = vmatpush1.msra.mxu0 0.0
    %684 = vmatprep.subr.mxu0 0.0
    %685 = vmatpush1.msra.mxu0 0.0
    %686 = vmatprep.subr.mxu0 0.0
    %687 = vmatpush1.msra.mxu0 0.0
    %688 = vmatprep.subr.mxu0 0.0
    %689 = vmatpush1.msra.mxu0 0.0
    %690 = vmatprep.subr.mxu0 0.0
    %691 = vmatpush1.msra.mxu0 0.0
    %692 = vmatprep.subr.mxu0 0.0
    %693 = vmatpush1.msra.mxu0 0.0
    %694 = vmatprep.subr.mxu0 0.0
    %695 = vmatpush1.msra.mxu0 0.0
    %696 = vmatprep.subr.mxu0 0.0
    %697 = vmatpush1.msra.mxu0 0.0
    %698 = vmatprep.subr.mxu0 0.0
    %699 = vmatpush1.msra.mxu0 0.0
    %700 = vmatprep.subr.mxu0 0.0
    %701 = vmatpush1.msra.mxu0 0.0
    %702 = vmatprep.mubr.f32.mxu0 0.0
    %703 = vmatmul.mubr.f32.gmra.mrb[0].mxu0 %v77
    %v704 = vpop.f32.mrb[0].mxu0
    %v705 = vadd.f32 0.0, %v704
    %v706 = vpop.f32.mrb[0].mxu0
    %707 = vmatprep.mubr.f32.mxu0 0.0
    %708 = vmatmul.mubr.f32.gmra.mrb[0].mxu0 %v80
    %v709 = vpop.f32.mrb[0].mxu0
    %v710 = vadd.f32 0.0, %v709
    %v711 = vpop.f32.mrb[0].mxu0
    %712 = vmatprep.mubr.f32.mxu0 0.0
    %713 = vmatmul.mubr.f32.gmra.mrb[0].mxu0 %v83
    %v714 = vpop.f32.mrb[0].mxu0
    %v715 = vadd.f32 0.0, %v714
    %v716 = vpop.f32.mrb[0].mxu0
    %717 = vmatprep.mubr.f32.mxu0 0.0
    %718 = vmatmul.mubr.f32.gmra.mrb[0].mxu0 %v86
    %v719 = vpop.f32.mrb[0].mxu0
    %v720 = vadd.f32 0.0, %v719
    %v721 = vpop.f32.mrb[0].mxu0
    %722 = vdwg.mxu0
    %v723 = vmul.f32 %v705, 2.0
    %v724 = vmul.f32 %v710, 2.0
    %v725 = vmul.f32 %v715, 2.0
    %v726 = vmul.f32 %v720, 2.0
    %v727 = vsub.f32 %v723, %v541
    %v728 = vsub.f32 %v724, %v542
    %v729 = vsub.f32 %v725, %v543
    %v730 = vsub.f32 %v726, %v544
    %731 = vmatprep.subr.mxu0 0.0
    %732 = vmatpush1.msra.mxu0 %v727
    %733 = vmatprep.subr.mxu0 0.0
    %734 = vmatpush1.msra.mxu0 %v728
    %735 = vmatprep.subr.mxu0 0.0
    %736 = vmatpush1.msra.mxu0 %v729
    %737 = vmatprep.subr.mxu0 0.0
    %738 = vmatpush1.msra.mxu0 %v730
    %739 = vmatprep.subr.mxu0 0.0
    %740 = vmatpush1.msra.mxu0 0.0
    %741 = vmatprep.subr.mxu0 0.0
    %742 = vmatpush1.msra.mxu0 0.0
    %743 = vmatprep.subr.mxu0 0.0
    %744 = vmatpush1.msra.mxu0 0.0
    %745 = vmatprep.subr.mxu0 0.0
    %746 = vmatpush1.msra.mxu0 0.0
    %747 = vmatprep.subr.mxu0 0.0
    %748 = vmatpush1.msra.mxu0 0.0
    %749 = vmatprep.subr.mxu0 0.0
    %750 = vmatpush1.msra.mxu0 0.0
    %751 = vmatprep.subr.mxu0 0.0
    %752 = vmatpush1.msra.mxu0 0.0
    %753 = vmatprep.subr.mxu0 0.0
    %754 = vmatpush1.msra.mxu0 0.0
    %755 = vmatprep.subr.mxu0 0.0
    %756 = vmatpush1.msra.mxu0 0.0
    %757 = vmatprep.subr.mxu0 0.0
    %758 = vmatpush1.msra.mxu0 0.0
    %759 = vmatprep.subr.mxu0 0.0
    %760 = vmatpush1.msra.mxu0 0.0
    %761 = vmatprep.subr.mxu0 0.0
    %762 = vmatpush1.msra.mxu0 0.0
    %763 = vmatprep.subr.mxu0 0.0
    %764 = vmatpush1.msra.mxu0 0.0
    %765 = vmatprep.subr.mxu0 0.0
    %766 = vmatpush1.msra.mxu0 0.0
    %767 = vmatprep.subr.mxu0 0.0
    %768 = vmatpush1.msra.mxu0 0.0
    %769 = vmatprep.subr.mxu0 0.0
    %770 = vmatpush1.msra.mxu0 0.0
    %771 = vmatprep.subr.mxu0 0.0
    %772 = vmatpush1.msra.mxu0 0.0
    %773 = vmatprep.subr.mxu0 0.0
    %774 = vmatpush1.msra.mxu0 0.0
    %775 = vmatprep.subr.mxu0 0.0
    %776 = vmatpush1.msra.mxu0 0.0
    %777 = vmatprep.subr.mxu0 0.0
    %778 = vmatpush1.msra.mxu0 0.0
    %779 = vmatprep.subr.mxu0 0.0
    %780 = vmatpush1.msra.mxu0 0.0
    %781 = vmatprep.subr.mxu0 0.0
    %782 = vmatpush1.msra.mxu0 0.0
    %783 = vmatprep.subr.mxu0 0.0
    %784 = vmatpush1.msra.mxu0 0.0
    %785 = vmatprep.subr.mxu0 0.0
    %786 = vmatpush1.msra.mxu0 0.0
    %787 = vmatprep.subr.mxu0 0.0
    %788 = vmatpush1.msra.mxu0 0.0
    %789 = vmatprep.subr.mxu0 0.0
    %790 = vmatpush1.msra.mxu0 0.0
    %791 = vmatprep.subr.mxu0 0.0
    %792 = vmatpush1.msra.mxu0 0.0
    %793 = vmatprep.subr.mxu0 0.0
    %794 = vmatpush1.msra.mxu0 0.0
    %795 = vmatprep.mubr.f32.mxu0 0.0
    %796 = vmatmul.mubr.f32.gmra.mrb[0].mxu0 %v77
    %v797 = vpop.f32.mrb[0].mxu0
    %v798 = vadd.f32 0.0, %v797
    %v799 = vpop.f32.mrb[0].mxu0
    %800 = vmatprep.mubr.f32.mxu0 0.0
    %801 = vmatmul.mubr.f32.gmra.mrb[0].mxu0 %v80
    %v802 = vpop.f32.mrb[0].mxu0
    %v803 = vadd.f32 0.0, %v802
    %v804 = vpop.f32.mrb[0].mxu0
    %805 = vmatprep.mubr.f32.mxu0 0.0
    %806 = vmatmul.mubr.f32.gmra.mrb[0].mxu0 %v83
    %v807 = vpop.f32.mrb[0].mxu0
    %v808 = vadd.f32 0.0, %v807
    %v809 = vpop.f32.mrb[0].mxu0
    %810 = vmatprep.mubr.f32.mxu0 0.0
    %811 = vmatmul.mubr.f32.gmra.mrb[0].mxu0 %v86
    %v812 = vpop.f32.mrb[0].mxu0
    %v813 = vadd.f32 0.0, %v812
    %v814 = vpop.f32.mrb[0].mxu0
    %815 = vdwg.mxu0
    %v816 = vmul.f32 %v798, 2.0
    %v817 = vmul.f32 %v803, 2.0
    %v818 = vmul.f32 %v808, 2.0
    %v819 = vmul.f32 %v813, 2.0
    %v820 = vsub.f32 %v816, %v634
    %v821 = vsub.f32 %v817, %v635
    %v822 = vsub.f32 %v818, %v636
    %v823 = vsub.f32 %v819, %v637
    %824 = vmatprep.subr.mxu0 0.0
    %825 = vmatpush1.msra.mxu0 %v820
    %826 = vmatprep.subr.mxu0 0.0
    %827 = vmatpush1.msra.mxu0 %v821
    %828 = vmatprep.subr.mxu0 0.0
    %829 = vmatpush1.msra.mxu0 %v822
    %830 = vmatprep.subr.mxu0 0.0
    %831 = vmatpush1.msra.mxu0 %v823
    %832 = vmatprep.subr.mxu0 0.0
    %833 = vmatpush1.msra.mxu0 0.0
    %834 = vmatprep.subr.mxu0 0.0
    %835 = vmatpush1.msra.mxu0 0.0
    %836 = vmatprep.subr.mxu0 0.0
    %837 = vmatpush1.msra.mxu0 0.0
    %838 = vmatprep.subr.mxu0 0.0
    %839 = vmatpush1.msra.mxu0 0.0
    %840 = vmatprep.subr.mxu0 0.0
    %841 = vmatpush1.msra.mxu0 0.0
    %842 = vmatprep.subr.mxu0 0.0
    %843 = vmatpush1.msra.mxu0 0.0
    %844 = vmatprep.subr.mxu0 0.0
    %845 = vmatpush1.msra.mxu0 0.0
    %846 = vmatprep.subr.mxu0 0.0
    %847 = vmatpush1.msra.mxu0 0.0
    %848 = vmatprep.subr.mxu0 0.0
    %849 = vmatpush1.msra.mxu0 0.0
    %850 = vmatprep.subr.mxu0 0.0
    %851 = vmatpush1.msra.mxu0 0.0
    %852 = vmatprep.subr.mxu0 0.0
    %853 = vmatpush1.msra.mxu0 0.0
    %854 = vmatprep.subr.mxu0 0.0
    %855 = vmatpush1.msra.mxu0 0.0
    %856 = vmatprep.subr.mxu0 0.0
    %857 = vmatpush1.msra.mxu0 0.0
    %858 = vmatprep.subr.mxu0 0.0
    %859 = vmatpush1.msra.mxu0 0.0
    %860 = vmatprep.subr.mxu0 0.0
    %861 = vmatpush1.msra.mxu0 0.0
    %862 = vmatprep.subr.mxu0 0.0
    %863 = vmatpush1.msra.mxu0 0.0
    %864 = vmatprep.subr.mxu0 0.0
    %865 = vmatpush1.msra.mxu0 0.0
    %866 = vmatprep.subr.mxu0 0.0
    %867 = vmatpush1.msra.mxu0 0.0
    %868 = vmatprep.subr.mxu0 0.0
    %869 = vmatpush1.msra.mxu0 0.0
    %870 = vmatprep.subr.mxu0 0.0
    %871 = vmatpush1.msra.mxu0 0.0
    %872 = vmatprep.subr.mxu0 0.0
    %873 = vmatpush1.msra.mxu0 0.0
    %874 = vmatprep.subr.mxu0 0.0
    %875 = vmatpush1.msra.mxu0 0.0
    %876 = vmatprep.subr.mxu0 0.0
    %877 = vmatpush1.msra.mxu0 0.0
    %878 = vmatprep.subr.mxu0 0.0
    %879 = vmatpush1.msra.mxu0 0.0
    %880 = vmatprep.subr.mxu0 0.0
    %881 = vmatpush1.msra.mxu0 0.0
    %882 = vmatprep.subr.mxu0 0.0
    %883 = vmatpush1.msra.mxu0 0.0
    %884 = vmatprep.subr.mxu0 0.0
    %885 = vmatpush1.msra.mxu0 0.0
    %886 = vmatprep.subr.mxu0 0.0
    %887 = vmatpush1.msra.mxu0 0.0
    %888 = vmatprep.mubr.f32.mxu0 0.0
    %889 = vmatmul.mubr.f32.gmra.mrb[0].mxu0 %v77
    %v890 = vpop.f32.mrb[0].mxu0
    %v891 = vadd.f32 0.0, %v890
    %v892 = vpop.f32.mrb[0].mxu0
    %893 = vmatprep.mubr.f32.mxu0 0.0
    %894 = vmatmul.mubr.f32.gmra.mrb[0].mxu0 %v80
    %v895 = vpop.f32.mrb[0].mxu0
    %v896 = vadd.f32 0.0, %v895
    %v897 = vpop.f32.mrb[0].mxu0
    %898 = vmatprep.mubr.f32.mxu0 0.0
    %899 = vmatmul.mubr.f32.gmra.mrb[0].mxu0 %v83
    %v900 = vpop.f32.mrb[0].mxu0
    %v901 = vadd.f32 0.0, %v900
    %v902 = vpop.f32.mrb[0].mxu0
    %903 = vmatprep.mubr.f32.mxu0 0.0
    %904 = vmatmul.mubr.f32.gmra.mrb[0].mxu0 %v86
    %v905 = vpop.f32.mrb[0].mxu0
    %v906 = vadd.f32 0.0, %v905
    %v907 = vpop.f32.mrb[0].mxu0
    %908 = vdwg.mxu0
    %v909 = vmul.f32 %v891, 2.0
    %v910 = vmul.f32 %v896, 2.0
    %v911 = vmul.f32 %v901, 2.0
    %v912 = vmul.f32 %v906, 2.0
    %v913 = vsub.f32 %v909, %v727
    %v914 = vsub.f32 %v910, %v728
    %v915 = vsub.f32 %v911, %v729
    %v916 = vsub.f32 %v912, %v730
    %917 = vmatprep.subr.mxu0 0.0
    %918 = vmatpush1.msra.mxu0 %v913
    %919 = vmatprep.subr.mxu0 0.0
    %920 = vmatpush1.msra.mxu0 %v914
    %921 = vmatprep.subr.mxu0 0.0
    %922 = vmatpush1.msra.mxu0 %v915
    %923 = vmatprep.subr.mxu0 0.0
    %924 = vmatpush1.msra.mxu0 %v916
    %925 = vmatprep.subr.mxu0 0.0
    %926 = vmatpush1.msra.mxu0 0.0
    %927 = vmatprep.subr.mxu0 0.0
    %928 = vmatpush1.msra.mxu0 0.0
    %929 = vmatprep.subr.mxu0 0.0
    %930 = vmatpush1.msra.mxu0 0.0
    %931 = vmatprep.subr.mxu0 0.0
    %932 = vmatpush1.msra.mxu0 0.0
    %933 = vmatprep.subr.mxu0 0.0
    %934 = vmatpush1.msra.mxu0 0.0
    %935 = vmatprep.subr.mxu0 0.0
    %936 = vmatpush1.msra.mxu0 0.0
    %937 = vmatprep.subr.mxu0 0.0
    %938 = vmatpush1.msra.mxu0 0.0
    %939 = vmatprep.subr.mxu0 0.0
    %940 = vmatpush1.msra.mxu0 0.0
    %941 = vmatprep.subr.mxu0 0.0
    %942 = vmatpush1.msra.mxu0 0.0
    %943 = vmatprep.subr.mxu0 0.0
    %944 = vmatpush1.msra.mxu0 0.0
    %945 = vmatprep.subr.mxu0 0.0
    %946 = vmatpush1.msra.mxu0 0.0
    %947 = vmatprep.subr.mxu0 0.0
    %948 = vmatpush1.msra.mxu0 0.0
    %949 = vmatprep.subr.mxu0 0.0
    %950 = vmatpush1.msra.mxu0 0.0
    %951 = vmatprep.subr.mxu0 0.0
    %952 = vmatpush1.msra.mxu0 0.0
    %953 = vmatprep.subr.mxu0 0.0
    %954 = vmatpush1.msra.mxu0 0.0
    %955 = vmatprep.subr.mxu0 0.0
    %956 = vmatpush1.msra.mxu0 0.0
    %957 = vmatprep.subr.mxu0 0.0
    %958 = vmatpush1.msra.mxu0 0.0
    %959 = vmatprep.subr.mxu0 0.0
    %960 = vmatpush1.msra.mxu0 0.0
    %961 = vmatprep.subr.mxu0 0.0
    %962 = vmatpush1.msra.mxu0 0.0
    %963 = vmatprep.subr.mxu0 0.0
    %964 = vmatpush1.msra.mxu0 0.0
    %965 = vmatprep.subr.mxu0 0.0
    %966 = vmatpush1.msra.mxu0 0.0
    %967 = vmatprep.subr.mxu0 0.0
    %968 = vmatpush1.msra.mxu0 0.0
    %969 = vmatprep.subr.mxu0 0.0
    %970 = vmatpush1.msra.mxu0 0.0
    %971 = vmatprep.subr.mxu0 0.0
    %972 = vmatpush1.msra.mxu0 0.0
    %973 = vmatprep.subr.mxu0 0.0
    %974 = vmatpush1.msra.mxu0 0.0
    %975 = vmatprep.subr.mxu0 0.0
    %976 = vmatpush1.msra.mxu0 0.0
    %977 = vmatprep.subr.mxu0 0.0
    %978 = vmatpush1.msra.mxu0 0.0
    %979 = vmatprep.subr.mxu0 0.0
    %980 = vmatpush1.msra.mxu0 0.0
    %981 = vmatprep.mubr.f32.mxu0 0.0
    %982 = vmatmul.mubr.f32.gmra.mrb[0].mxu0 %v77
    %v983 = vpop.f32.mrb[0].mxu0
    %v984 = vadd.f32 0.0, %v983
    %v985 = vpop.f32.mrb[0].mxu0
    %986 = vmatprep.mubr.f32.mxu0 0.0
    %987 = vmatmul.mubr.f32.gmra.mrb[0].mxu0 %v80
    %v988 = vpop.f32.mrb[0].mxu0
    %v989 = vadd.f32 0.0, %v988
    %v990 = vpop.f32.mrb[0].mxu0
    %991 = vmatprep.mubr.f32.mxu0 0.0
    %992 = vmatmul.mubr.f32.gmra.mrb[0].mxu0 %v83
    %v993 = vpop.f32.mrb[0].mxu0
    %v994 = vadd.f32 0.0, %v993
    %v995 = vpop.f32.mrb[0].mxu0
    %996 = vmatprep.mubr.f32.mxu0 0.0
    %997 = vmatmul.mubr.f32.gmra.mrb[0].mxu0 %v86
    %v998 = vpop.f32.mrb[0].mxu0
    %v999 = vadd.f32 0.0, %v998
    %v1000 = vpop.f32.mrb[0].mxu0
    %1001 = vdwg.mxu0
    %v1002 = vmul.f32 %v984, 2.0
    %v1003 = vmul.f32 %v989, 2.0
    %v1004 = vmul.f32 %v994, 2.0
    %v1005 = vmul.f32 %v999, 2.0
    %v1006 = vsub.f32 %v1002, %v820
    %v1007 = vsub.f32 %v1003, %v821
    %v1008 = vsub.f32 %v1004, %v822
    %v1009 = vsub.f32 %v1005, %v823
    %1010 = vmatprep.subr.mxu0 0.0
    %1011 = vmatpush1.msra.mxu0 %v1006
    %1012 = vmatprep.subr.mxu0 0.0
    %1013 = vmatpush1.msra.mxu0 %v1007
    %1014 = vmatprep.subr.mxu0 0.0
    %1015 = vmatpush1.msra.mxu0 %v1008
    %1016 = vmatprep.subr.mxu0 0.0
    %1017 = vmatpush1.msra.mxu0 %v1009
    %1018 = vmatprep.subr.mxu0 0.0
    %1019 = vmatpush1.msra.mxu0 0.0
    %1020 = vmatprep.subr.mxu0 0.0
    %1021 = vmatpush1.msra.mxu0 0.0
    %1022 = vmatprep.subr.mxu0 0.0
    %1023 = vmatpush1.msra.mxu0 0.0
    %1024 = vmatprep.subr.mxu0 0.0
    %1025 = vmatpush1.msra.mxu0 0.0
    %1026 = vmatprep.subr.mxu0 0.0
    %1027 = vmatpush1.msra.mxu0 0.0
    %1028 = vmatprep.subr.mxu0 0.0
    %1029 = vmatpush1.msra.mxu0 0.0
    %1030 = vmatprep.subr.mxu0 0.0
    %1031 = vmatpush1.msra.mxu0 0.0
    %1032 = vmatprep.subr.mxu0 0.0
    %1033 = vmatpush1.msra.mxu0 0.0
    %1034 = vmatprep.subr.mxu0 0.0
    %1035 = vmatpush1.msra.mxu0 0.0
    %1036 = vmatprep.subr.mxu0 0.0
    %1037 = vmatpush1.msra.mxu0 0.0
    %1038 = vmatprep.subr.mxu0 0.0
    %1039 = vmatpush1.msra.mxu0 0.0
    %1040 = vmatprep.subr.mxu0 0.0
    %1041 = vmatpush1.msra.mxu0 0.0
    %1042 = vmatprep.subr.mxu0 0.0
    %1043 = vmatpush1.msra.mxu0 0.0
    %1044 = vmatprep.subr.mxu0 0.0
    %1045 = vmatpush1.msra.mxu0 0.0
    %1046 = vmatprep.subr.mxu0 0.0
    %1047 = vmatpush1.msra.mxu0 0.0
    %1048 = vmatprep.subr.mxu0 0.0
    %1049 = vmatpush1.msra.mxu0 0.0
    %1050 = vmatprep.subr.mxu0 0.0
    %1051 = vmatpush1.msra.mxu0 0.0
    %1052 = vmatprep.subr.mxu0 0.0
    %1053 = vmatpush1.msra.mxu0 0.0
    %1054 = vmatprep.subr.mxu0 0.0
    %1055 = vmatpush1.msra.mxu0 0.0
    %1056 = vmatprep.subr.mxu0 0.0
    %1057 = vmatpush1.msra.mxu0 0.0
    %1058 = vmatprep.subr.mxu0 0.0
    %1059 = vmatpush1.msra.mxu0 0.0
    %1060 = vmatprep.subr.mxu0 0.0
    %1061 = vmatpush1.msra.mxu0 0.0
    %1062 = vmatprep.subr.mxu0 0.0
    %1063 = vmatpush1.msra.mxu0 0.0
    %1064 = vmatprep.subr.mxu0 0.0
    %1065 = vmatpush1.msra.mxu0 0.0
    %1066 = vmatprep.subr.mxu0 0.0
    %1067 = vmatpush1.msra.mxu0 0.0
    %1068 = vmatprep.subr.mxu0 0.0
    %1069 = vmatpush1.msra.mxu0 0.0
    %1070 = vmatprep.subr.mxu0 0.0
    %1071 = vmatpush1.msra.mxu0 0.0
    %1072 = vmatprep.subr.mxu0 0.0
    %1073 = vmatpush1.msra.mxu0 0.0
    %1074 = vmatprep.mubr.f32.mxu0 0.0
    %1075 = vmatmul.mubr.f32.gmra.mrb[0].mxu0 %v77
    %v1076 = vpop.f32.mrb[0].mxu0
    %v1077 = vadd.f32 0.0, %v1076
    %v1078 = vpop.f32.mrb[0].mxu0
    %1079 = vmatprep.mubr.f32.mxu0 0.0
    %1080 = vmatmul.mubr.f32.gmra.mrb[0].mxu0 %v80
    %v1081 = vpop.f32.mrb[0].mxu0
    %v1082 = vadd.f32 0.0, %v1081
    %v1083 = vpop.f32.mrb[0].mxu0
    %1084 = vmatprep.mubr.f32.mxu0 0.0
    %1085 = vmatmul.mubr.f32.gmra.mrb[0].mxu0 %v83
    %v1086 = vpop.f32.mrb[0].mxu0
    %v1087 = vadd.f32 0.0, %v1086
    %v1088 = vpop.f32.mrb[0].mxu0
    %1089 = vmatprep.mubr.f32.mxu0 0.0
    %1090 = vmatmul.mubr.f32.gmra.mrb[0].mxu0 %v86
    %v1091 = vpop.f32.mrb[0].mxu0
    %v1092 = vadd.f32 0.0, %v1091
    %v1093 = vpop.f32.mrb[0].mxu0
    %1094 = vdwg.mxu0
    %v1095 = vmul.f32 %v1077, 2.0
    %v1096 = vmul.f32 %v1082, 2.0
    %v1097 = vmul.f32 %v1087, 2.0
    %v1098 = vmul.f32 %v1092, 2.0
    %v1099 = vsub.f32 %v1095, %v913
    %v1100 = vsub.f32 %v1096, %v914
    %v1101 = vsub.f32 %v1097, %v915
    %v1102 = vsub.f32 %v1098, %v916
    %1103 = vmatprep.subr.mxu0 0.0
    %1104 = vmatpush1.msra.mxu0 %v1099
    %1105 = vmatprep.subr.mxu0 0.0
    %1106 = vmatpush1.msra.mxu0 %v1100
    %1107 = vmatprep.subr.mxu0 0.0
    %1108 = vmatpush1.msra.mxu0 %v1101
    %1109 = vmatprep.subr.mxu0 0.0
    %1110 = vmatpush1.msra.mxu0 %v1102
    %1111 = vmatprep.subr.mxu0 0.0
    %1112 = vmatpush1.msra.mxu0 0.0
    %1113 = vmatprep.subr.mxu0 0.0
    %1114 = vmatpush1.msra.mxu0 0.0
    %1115 = vmatprep.subr.mxu0 0.0
    %1116 = vmatpush1.msra.mxu0 0.0
    %1117 = vmatprep.subr.mxu0 0.0
    %1118 = vmatpush1.msra.mxu0 0.0
    %1119 = vmatprep.subr.mxu0 0.0
    %1120 = vmatpush1.msra.mxu0 0.0
    %1121 = vmatprep.subr.mxu0 0.0
    %1122 = vmatpush1.msra.mxu0 0.0
    %1123 = vmatprep.subr.mxu0 0.0
    %1124 = vmatpush1.msra.mxu0 0.0
    %1125 = vmatprep.subr.mxu0 0.0
    %1126 = vmatpush1.msra.mxu0 0.0
    %1127 = vmatprep.subr.mxu0 0.0
    %1128 = vmatpush1.msra.mxu0 0.0
    %1129 = vmatprep.subr.mxu0 0.0
    %1130 = vmatpush1.msra.mxu0 0.0
    %1131 = vmatprep.subr.mxu0 0.0
    %1132 = vmatpush1.msra.mxu0 0.0
    %1133 = vmatprep.subr.mxu0 0.0
    %1134 = vmatpush1.msra.mxu0 0.0
    %1135 = vmatprep.subr.mxu0 0.0
    %1136 = vmatpush1.msra.mxu0 0.0
    %1137 = vmatprep.subr.mxu0 0.0
    %1138 = vmatpush1.msra.mxu0 0.0
    %1139 = vmatprep.subr.mxu0 0.0
    %1140 = vmatpush1.msra.mxu0 0.0
    %1141 = vmatprep.subr.mxu0 0.0
    %1142 = vmatpush1.msra.mxu0 0.0
    %1143 = vmatprep.subr.mxu0 0.0
    %1144 = vmatpush1.msra.mxu0 0.0
    %1145 = vmatprep.subr.mxu0 0.0
    %1146 = vmatpush1.msra.mxu0 0.0
    %1147 = vmatprep.subr.mxu0 0.0
    %1148 = vmatpush1.msra.mxu0 0.0
    %1149 = vmatprep.subr.mxu0 0.0
    %1150 = vmatpush1.msra.mxu0 0.0
    %1151 = vmatprep.subr.mxu0 0.0
    %1152 = vmatpush1.msra.mxu0 0.0
    %1153 = vmatprep.subr.mxu0 0.0
    %1154 = vmatpush1.msra.mxu0 0.0
    %1155 = vmatprep.subr.mxu0 0.0
    %1156 = vmatpush1.msra.mxu0 0.0
    %1157 = vmatprep.subr.mxu0 0.0
    %1158 = vmatpush1.msra.mxu0 0.0
    %1159 = vmatprep.subr.mxu0 0.0
    %1160 = vmatpush1.msra.mxu0 0.0
    %1161 = vmatprep.subr.mxu0 0.0
    %1162 = vmatpush1.msra.mxu0 0.0
    %1163 = vmatprep.subr.mxu0 0.0
    %1164 = vmatpush1.msra.mxu0 0.0
    %1165 = vmatprep.subr.mxu0 0.0
    %1166 = vmatpush1.msra.mxu0 0.0
    %1167 = vmatprep.mubr.f32.mxu0 0.0
    %1168 = vmatmul.mubr.f32.gmra.mrb[0].mxu0 %v77
    %v1169 = vpop.f32.mrb[0].mxu0
    %v1170 = vadd.f32 0.0, %v1169
    %v1171 = vpop.f32.mrb[0].mxu0
    %1172 = vmatprep.mubr.f32.mxu0 0.0
    %1173 = vmatmul.mubr.f32.gmra.mrb[0].mxu0 %v80
    %v1174 = vpop.f32.mrb[0].mxu0
    %v1175 = vadd.f32 0.0, %v1174
    %v1176 = vpop.f32.mrb[0].mxu0
    %1177 = vmatprep.mubr.f32.mxu0 0.0
    %1178 = vmatmul.mubr.f32.gmra.mrb[0].mxu0 %v83
    %v1179 = vpop.f32.mrb[0].mxu0
    %v1180 = vadd.f32 0.0, %v1179
    %v1181 = vpop.f32.mrb[0].mxu0
    %1182 = vmatprep.mubr.f32.mxu0 0.0
    %1183 = vmatmul.mubr.f32.gmra.mrb[0].mxu0 %v86
    %v1184 = vpop.f32.mrb[0].mxu0
    %v1185 = vadd.f32 0.0, %v1184
    %v1186 = vpop.f32.mrb[0].mxu0
    %1187 = vdwg.mxu0
    %v1188 = vmul.f32 %v1170, 2.0
    %v1189 = vmul.f32 %v1175, 2.0
    %v1190 = vmul.f32 %v1180, 2.0
    %v1191 = vmul.f32 %v1185, 2.0
    %v1192 = vsub.f32 %v1188, %v1006
    %v1193 = vsub.f32 %v1189, %v1007
    %v1194 = vsub.f32 %v1190, %v1008
    %v1195 = vsub.f32 %v1191, %v1009
    %1196 = vmatprep.subr.mxu0 0.0
    %1197 = vmatpush1.msra.mxu0 %v1192
    %1198 = vmatprep.subr.mxu0 0.0
    %1199 = vmatpush1.msra.mxu0 %v1193
    %1200 = vmatprep.subr.mxu0 0.0
    %1201 = vmatpush1.msra.mxu0 %v1194
    %1202 = vmatprep.subr.mxu0 0.0
    %1203 = vmatpush1.msra.mxu0 %v1195
    %1204 = vmatprep.subr.mxu0 0.0
    %1205 = vmatpush1.msra.mxu0 0.0
    %1206 = vmatprep.subr.mxu0 0.0
    %1207 = vmatpush1.msra.mxu0 0.0
    %1208 = vmatprep.subr.mxu0 0.0
    %1209 = vmatpush1.msra.mxu0 0.0
    %1210 = vmatprep.subr.mxu0 0.0
    %1211 = vmatpush1.msra.mxu0 0.0
    %1212 = vmatprep.subr.mxu0 0.0
    %1213 = vmatpush1.msra.mxu0 0.0
    %1214 = vmatprep.subr.mxu0 0.0
    %1215 = vmatpush1.msra.mxu0 0.0
    %1216 = vmatprep.subr.mxu0 0.0
    %1217 = vmatpush1.msra.mxu0 0.0
    %1218 = vmatprep.subr.mxu0 0.0
    %1219 = vmatpush1.msra.mxu0 0.0
    %1220 = vmatprep.subr.mxu0 0.0
    %1221 = vmatpush1.msra.mxu0 0.0
    %1222 = vmatprep.subr.mxu0 0.0
    %1223 = vmatpush1.msra.mxu0 0.0
    %1224 = vmatprep.subr.mxu0 0.0
    %1225 = vmatpush1.msra.mxu0 0.0
    %1226 = vmatprep.subr.mxu0 0.0
    %1227 = vmatpush1.msra.mxu0 0.0
    %1228 = vmatprep.subr.mxu0 0.0
    %1229 = vmatpush1.msra.mxu0 0.0
    %1230 = vmatprep.subr.mxu0 0.0
    %1231 = vmatpush1.msra.mxu0 0.0
    %1232 = vmatprep.subr.mxu0 0.0
    %1233 = vmatpush1.msra.mxu0 0.0
    %1234 = vmatprep.subr.mxu0 0.0
    %1235 = vmatpush1.msra.mxu0 0.0
    %1236 = vmatprep.subr.mxu0 0.0
    %1237 = vmatpush1.msra.mxu0 0.0
    %1238 = vmatprep.subr.mxu0 0.0
    %1239 = vmatpush1.msra.mxu0 0.0
    %1240 = vmatprep.subr.mxu0 0.0
    %1241 = vmatpush1.msra.mxu0 0.0
    %1242 = vmatprep.subr.mxu0 0.0
    %1243 = vmatpush1.msra.mxu0 0.0
    %1244 = vmatprep.subr.mxu0 0.0
    %1245 = vmatpush1.msra.mxu0 0.0
    %1246 = vmatprep.subr.mxu0 0.0
    %1247 = vmatpush1.msra.mxu0 0.0
    %1248 = vmatprep.subr.mxu0 0.0
    %1249 = vmatpush1.msra.mxu0 0.0
    %1250 = vmatprep.subr.mxu0 0.0
    %1251 = vmatpush1.msra.mxu0 0.0
    %1252 = vmatprep.subr.mxu0 0.0
    %1253 = vmatpush1.msra.mxu0 0.0
    %1254 = vmatprep.subr.mxu0 0.0
    %1255 = vmatpush1.msra.mxu0 0.0
    %1256 = vmatprep.subr.mxu0 0.0
    %1257 = vmatpush1.msra.mxu0 0.0
    %1258 = vmatprep.subr.mxu0 0.0
    %1259 = vmatpush1.msra.mxu0 0.0
    %1260 = vmatprep.mubr.f32.mxu0 0.0
    %1261 = vmatmul.mubr.f32.gmra.mrb[0].mxu0 %v77
    %v1262 = vpop.f32.mrb[0].mxu0
    %v1263 = vadd.f32 0.0, %v1262
    %v1264 = vpop.f32.mrb[0].mxu0
    %1265 = vmatprep.mubr.f32.mxu0 0.0
    %1266 = vmatmul.mubr.f32.gmra.mrb[0].mxu0 %v80
    %v1267 = vpop.f32.mrb[0].mxu0
    %v1268 = vadd.f32 0.0, %v1267
    %v1269 = vpop.f32.mrb[0].mxu0
    %1270 = vmatprep.mubr.f32.mxu0 0.0
    %1271 = vmatmul.mubr.f32.gmra.mrb[0].mxu0 %v83
    %v1272 = vpop.f32.mrb[0].mxu0
    %v1273 = vadd.f32 0.0, %v1272
    %v1274 = vpop.f32.mrb[0].mxu0
    %1275 = vmatprep.mubr.f32.mxu0 0.0
    %1276 = vmatmul.mubr.f32.gmra.mrb[0].mxu0 %v86
    %v1277 = vpop.f32.mrb[0].mxu0
    %v1278 = vadd.f32 0.0, %v1277
    %v1279 = vpop.f32.mrb[0].mxu0
    %1280 = vdwg.mxu0
    %v1281 = vmul.f32 %v1263, 2.0
    %v1282 = vmul.f32 %v1268, 2.0
    %v1283 = vmul.f32 %v1273, 2.0
    %v1284 = vmul.f32 %v1278, 2.0
    %v1285 = vsub.f32 %v1281, %v1099
    %v1286 = vsub.f32 %v1282, %v1100
    %v1287 = vsub.f32 %v1283, %v1101
    %v1288 = vsub.f32 %v1284, %v1102
    %1289 = vmatprep.subr.mxu0 0.0
    %1290 = vmatpush1.msra.mxu0 %v1285
    %1291 = vmatprep.subr.mxu0 0.0
    %1292 = vmatpush1.msra.mxu0 %v1286
    %1293 = vmatprep.subr.mxu0 0.0
    %1294 = vmatpush1.msra.mxu0 %v1287
    %1295 = vmatprep.subr.mxu0 0.0
    %1296 = vmatpush1.msra.mxu0 %v1288
    %1297 = vmatprep.subr.mxu0 0.0
    %1298 = vmatpush1.msra.mxu0 0.0
    %1299 = vmatprep.subr.mxu0 0.0
    %1300 = vmatpush1.msra.mxu0 0.0
    %1301 = vmatprep.subr.mxu0 0.0
    %1302 = vmatpush1.msra.mxu0 0.0
    %1303 = vmatprep.subr.mxu0 0.0
    %1304 = vmatpush1.msra.mxu0 0.0
    %1305 = vmatprep.subr.mxu0 0.0
    %1306 = vmatpush1.msra.mxu0 0.0
    %1307 = vmatprep.subr.mxu0 0.0
    %1308 = vmatpush1.msra.mxu0 0.0
    %1309 = vmatprep.subr.mxu0 0.0
    %1310 = vmatpush1.msra.mxu0 0.0
    %1311 = vmatprep.subr.mxu0 0.0
    %1312 = vmatpush1.msra.mxu0 0.0
    %1313 = vmatprep.subr.mxu0 0.0
    %1314 = vmatpush1.msra.mxu0 0.0
    %1315 = vmatprep.subr.mxu0 0.0
    %1316 = vmatpush1.msra.mxu0 0.0
    %1317 = vmatprep.subr.mxu0 0.0
    %1318 = vmatpush1.msra.mxu0 0.0
    %1319 = vmatprep.subr.mxu0 0.0
    %1320 = vmatpush1.msra.mxu0 0.0
    %1321 = vmatprep.subr.mxu0 0.0
    %1322 = vmatpush1.msra.mxu0 0.0
    %1323 = vmatprep.subr.mxu0 0.0
    %1324 = vmatpush1.msra.mxu0 0.0
    %1325 = vmatprep.subr.mxu0 0.0
    %1326 = vmatpush1.msra.mxu0 0.0
    %1327 = vmatprep.subr.mxu0 0.0
    %1328 = vmatpush1.msra.mxu0 0.0
    %1329 = vmatprep.subr.mxu0 0.0
    %1330 = vmatpush1.msra.mxu0 0.0
    %1331 = vmatprep.subr.mxu0 0.0
    %1332 = vmatpush1.msra.mxu0 0.0
    %1333 = vmatprep.subr.mxu0 0.0
    %1334 = vmatpush1.msra.mxu0 0.0
    %1335 = vmatprep.subr.mxu0 0.0
    %1336 = vmatpush1.msra.mxu0 0.0
    %1337 = vmatprep.subr.mxu0 0.0
    %1338 = vmatpush1.msra.mxu0 0.0
    %1339 = vmatprep.subr.mxu0 0.0
    %1340 = vmatpush1.msra.mxu0 0.0
    %1341 = vmatprep.subr.mxu0 0.0
    %1342 = vmatpush1.msra.mxu0 0.0
    %1343 = vmatprep.subr.mxu0 0.0
    %1344 = vmatpush1.msra.mxu0 0.0
    %1345 = vmatprep.subr.mxu0 0.0
    %1346 = vmatpush1.msra.mxu0 0.0
    %1347 = vmatprep.subr.mxu0 0.0
    %1348 = vmatpush1.msra.mxu0 0.0
    %1349 = vmatprep.subr.mxu0 0.0
    %1350 = vmatpush1.msra.mxu0 0.0
    %1351 = vmatprep.subr.mxu0 0.0
    %1352 = vmatpush1.msra.mxu0 0.0
    %1353 = vmatprep.mubr.f32.mxu0 0.0
    %1354 = vmatmul.mubr.f32.gmra.mrb[0].mxu0 %v77
    %v1355 = vpop.f32.mrb[0].mxu0
    %v1356 = vadd.f32 0.0, %v1355
    %v1357 = vpop.f32.mrb[0].mxu0
    %1358 = vmatprep.mubr.f32.mxu0 0.0
    %1359 = vmatmul.mubr.f32.gmra.mrb[0].mxu0 %v80
    %v1360 = vpop.f32.mrb[0].mxu0
    %v1361 = vadd.f32 0.0, %v1360
    %v1362 = vpop.f32.mrb[0].mxu0
    %1363 = vmatprep.mubr.f32.mxu0 0.0
    %1364 = vmatmul.mubr.f32.gmra.mrb[0].mxu0 %v83
    %v1365 = vpop.f32.mrb[0].mxu0
    %v1366 = vadd.f32 0.0, %v1365
    %v1367 = vpop.f32.mrb[0].mxu0
    %1368 = vmatprep.mubr.f32.mxu0 0.0
    %1369 = vmatmul.mubr.f32.gmra.mrb[0].mxu0 %v86
    %v1370 = vpop.f32.mrb[0].mxu0
    %v1371 = vadd.f32 0.0, %v1370
    %v1372 = vpop.f32.mrb[0].mxu0
    %1373 = vdwg.mxu0
    %v1374 = vmul.f32 %v1356, 2.0
    %v1375 = vmul.f32 %v1361, 2.0
    %v1376 = vmul.f32 %v1366, 2.0
    %v1377 = vmul.f32 %v1371, 2.0
    %v1378 = vsub.f32 %v1374, %v1192
    %v1379 = vsub.f32 %v1375, %v1193
    %v1380 = vsub.f32 %v1376, %v1194
    %v1381 = vsub.f32 %v1377, %v1195
    %1382 = vmatprep.subr.mxu0 0.0
    %1383 = vmatpush1.msra.mxu0 %v1378
    %1384 = vmatprep.subr.mxu0 0.0
    %1385 = vmatpush1.msra.mxu0 %v1379
    %1386 = vmatprep.subr.mxu0 0.0
    %1387 = vmatpush1.msra.mxu0 %v1380
    %1388 = vmatprep.subr.mxu0 0.0
    %1389 = vmatpush1.msra.mxu0 %v1381
    %1390 = vmatprep.subr.mxu0 0.0
    %1391 = vmatpush1.msra.mxu0 0.0
    %1392 = vmatprep.subr.mxu0 0.0
    %1393 = vmatpush1.msra.mxu0 0.0
    %1394 = vmatprep.subr.mxu0 0.0
    %1395 = vmatpush1.msra.mxu0 0.0
    %1396 = vmatprep.subr.mxu0 0.0
    %1397 = vmatpush1.msra.mxu0 0.0
    %1398 = vmatprep.subr.mxu0 0.0
    %1399 = vmatpush1.msra.mxu0 0.0
    %1400 = vmatprep.subr.mxu0 0.0
    %1401 = vmatpush1.msra.mxu0 0.0
    %1402 = vmatprep.subr.mxu0 0.0
    %1403 = vmatpush1.msra.mxu0 0.0
    %1404 = vmatprep.subr.mxu0 0.0
    %1405 = vmatpush1.msra.mxu0 0.0
    %1406 = vmatprep.subr.mxu0 0.0
    %1407 = vmatpush1.msra.mxu0 0.0
    %1408 = vmatprep.subr.mxu0 0.0
    %1409 = vmatpush1.msra.mxu0 0.0
    %1410 = vmatprep.subr.mxu0 0.0
    %1411 = vmatpush1.msra.mxu0 0.0
    %1412 = vmatprep.subr.mxu0 0.0
    %1413 = vmatpush1.msra.mxu0 0.0
    %1414 = vmatprep.subr.mxu0 0.0
    %1415 = vmatpush1.msra.mxu0 0.0
    %1416 = vmatprep.subr.mxu0 0.0
    %1417 = vmatpush1.msra.mxu0 0.0
    %1418 = vmatprep.subr.mxu0 0.0
    %1419 = vmatpush1.msra.mxu0 0.0
    %1420 = vmatprep.subr.mxu0 0.0
    %1421 = vmatpush1.msra.mxu0 0.0
    %1422 = vmatprep.subr.mxu0 0.0
    %1423 = vmatpush1.msra.mxu0 0.0
    %1424 = vmatprep.subr.mxu0 0.0
    %1425 = vmatpush1.msra.mxu0 0.0
    %1426 = vmatprep.subr.mxu0 0.0
    %1427 = vmatpush1.msra.mxu0 0.0
    %1428 = vmatprep.subr.mxu0 0.0
    %1429 = vmatpush1.msra.mxu0 0.0
    %1430 = vmatprep.subr.mxu0 0.0
    %1431 = vmatpush1.msra.mxu0 0.0
    %1432 = vmatprep.subr.mxu0 0.0
    %1433 = vmatpush1.msra.mxu0 0.0
    %1434 = vmatprep.subr.mxu0 0.0
    %1435 = vmatpush1.msra.mxu0 0.0
    %1436 = vmatprep.subr.mxu0 0.0
    %1437 = vmatpush1.msra.mxu0 0.0
    %1438 = vmatprep.subr.mxu0 0.0
    %1439 = vmatpush1.msra.mxu0 0.0
    %1440 = vmatprep.subr.mxu0 0.0
    %1441 = vmatpush1.msra.mxu0 0.0
    %1442 = vmatprep.subr.mxu0 0.0
    %1443 = vmatpush1.msra.mxu0 0.0
    %1444 = vmatprep.subr.mxu0 0.0
    %1445 = vmatpush1.msra.mxu0 0.0
    %1446 = vmatprep.mubr.f32.mxu0 0.0
    %1447 = vmatmul.mubr.f32.gmra.mrb[0].mxu0 %v77
    %v1448 = vpop.f32.mrb[0].mxu0
    %v1449 = vadd.f32 0.0, %v1448
    %v1450 = vpop.f32.mrb[0].mxu0
    %1451 = vmatprep.mubr.f32.mxu0 0.0
    %1452 = vmatmul.mubr.f32.gmra.mrb[0].mxu0 %v80
    %v1453 = vpop.f32.mrb[0].mxu0
    %v1454 = vadd.f32 0.0, %v1453
    %v1455 = vpop.f32.mrb[0].mxu0
    %1456 = vmatprep.mubr.f32.mxu0 0.0
    %1457 = vmatmul.mubr.f32.gmra.mrb[0].mxu0 %v83
    %v1458 = vpop.f32.mrb[0].mxu0
    %v1459 = vadd.f32 0.0, %v1458
    %v1460 = vpop.f32.mrb[0].mxu0
    %1461 = vmatprep.mubr.f32.mxu0 0.0
    %1462 = vmatmul.mubr.f32.gmra.mrb[0].mxu0 %v86
    %v1463 = vpop.f32.mrb[0].mxu0
    %v1464 = vadd.f32 0.0, %v1463
    %v1465 = vpop.f32.mrb[0].mxu0
    %1466 = vdwg.mxu0
    %v1467 = vmul.f32 %v1449, 2.0
    %v1468 = vmul.f32 %v1454, 2.0
    %v1469 = vmul.f32 %v1459, 2.0
    %v1470 = vmul.f32 %v1464, 2.0
    %v1471 = vsub.f32 %v1467, %v1285
    %v1472 = vsub.f32 %v1468, %v1286
    %v1473 = vsub.f32 %v1469, %v1287
    %v1474 = vsub.f32 %v1470, %v1288
    %1475 = vmatprep.subr.mxu0 0.0
    %1476 = vmatpush1.msra.mxu0 %v1471
    %1477 = vmatprep.subr.mxu0 0.0
    %1478 = vmatpush1.msra.mxu0 %v1472
    %1479 = vmatprep.subr.mxu0 0.0
    %1480 = vmatpush1.msra.mxu0 %v1473
    %1481 = vmatprep.subr.mxu0 0.0
    %1482 = vmatpush1.msra.mxu0 %v1474
    %1483 = vmatprep.subr.mxu0 0.0
    %1484 = vmatpush1.msra.mxu0 0.0
    %1485 = vmatprep.subr.mxu0 0.0
    %1486 = vmatpush1.msra.mxu0 0.0
    %1487 = vmatprep.subr.mxu0 0.0
    %1488 = vmatpush1.msra.mxu0 0.0
    %1489 = vmatprep.subr.mxu0 0.0
    %1490 = vmatpush1.msra.mxu0 0.0
    %1491 = vmatprep.subr.mxu0 0.0
    %1492 = vmatpush1.msra.mxu0 0.0
    %1493 = vmatprep.subr.mxu0 0.0
    %1494 = vmatpush1.msra.mxu0 0.0
    %1495 = vmatprep.subr.mxu0 0.0
    %1496 = vmatpush1.msra.mxu0 0.0
    %1497 = vmatprep.subr.mxu0 0.0
    %1498 = vmatpush1.msra.mxu0 0.0
    %1499 = vmatprep.subr.mxu0 0.0
    %1500 = vmatpush1.msra.mxu0 0.0
    %1501 = vmatprep.subr.mxu0 0.0
    %1502 = vmatpush1.msra.mxu0 0.0
    %1503 = vmatprep.subr.mxu0 0.0
    %1504 = vmatpush1.msra.mxu0 0.0
    %1505 = vmatprep.subr.mxu0 0.0
    %1506 = vmatpush1.msra.mxu0 0.0
    %1507 = vmatprep.subr.mxu0 0.0
    %1508 = vmatpush1.msra.mxu0 0.0
    %1509 = vmatprep.subr.mxu0 0.0
    %1510 = vmatpush1.msra.mxu0 0.0
    %1511 = vmatprep.subr.mxu0 0.0
    %1512 = vmatpush1.msra.mxu0 0.0
    %1513 = vmatprep.subr.mxu0 0.0
    %1514 = vmatpush1.msra.mxu0 0.0
    %1515 = vmatprep.subr.mxu0 0.0
    %1516 = vmatpush1.msra.mxu0 0.0
    %1517 = vmatprep.subr.mxu0 0.0
    %1518 = vmatpush1.msra.mxu0 0.0
    %1519 = vmatprep.subr.mxu0 0.0
    %1520 = vmatpush1.msra.mxu0 0.0
    %1521 = vmatprep.subr.mxu0 0.0
    %1522 = vmatpush1.msra.mxu0 0.0
    %1523 = vmatprep.subr.mxu0 0.0
    %1524 = vmatpush1.msra.mxu0 0.0
    %1525 = vmatprep.subr.mxu0 0.0
    %1526 = vmatpush1.msra.mxu0 0.0
    %1527 = vmatprep.subr.mxu0 0.0
    %1528 = vmatpush1.msra.mxu0 0.0
    %1529 = vmatprep.subr.mxu0 0.0
    %1530 = vmatpush1.msra.mxu0 0.0
    %1531 = vmatprep.subr.mxu0 0.0
    %1532 = vmatpush1.msra.mxu0 0.0
    %1533 = vmatprep.subr.mxu0 0.0
    %1534 = vmatpush1.msra.mxu0 0.0
    %1535 = vmatprep.subr.mxu0 0.0
    %1536 = vmatpush1.msra.mxu0 0.0
    %1537 = vmatprep.subr.mxu0 0.0
    %1538 = vmatpush1.msra.mxu0 0.0
    %1539 = vmatprep.mubr.f32.mxu0 0.0
    %1540 = vmatmul.mubr.f32.gmra.mrb[0].mxu0 %v77
    %v1541 = vpop.f32.mrb[0].mxu0
    %v1542 = vadd.f32 0.0, %v1541
    %v1543 = vpop.f32.mrb[0].mxu0
    %1544 = vmatprep.mubr.f32.mxu0 0.0
    %1545 = vmatmul.mubr.f32.gmra.mrb[0].mxu0 %v80
    %v1546 = vpop.f32.mrb[0].mxu0
    %v1547 = vadd.f32 0.0, %v1546
    %v1548 = vpop.f32.mrb[0].mxu0
    %1549 = vmatprep.mubr.f32.mxu0 0.0
    %1550 = vmatmul.mubr.f32.gmra.mrb[0].mxu0 %v83
    %v1551 = vpop.f32.mrb[0].mxu0
    %v1552 = vadd.f32 0.0, %v1551
    %v1553 = vpop.f32.mrb[0].mxu0
    %1554 = vmatprep.mubr.f32.mxu0 0.0
    %1555 = vmatmul.mubr.f32.gmra.mrb[0].mxu0 %v86
    %v1556 = vpop.f32.mrb[0].mxu0
    %v1557 = vadd.f32 0.0, %v1556
    %v1558 = vpop.f32.mrb[0].mxu0
    %1559 = vdwg.mxu0
    %v1560 = vmul.f32 %v1542, 2.0
    %v1561 = vmul.f32 %v1547, 2.0
    %v1562 = vmul.f32 %v1552, 2.0
    %v1563 = vmul.f32 %v1557, 2.0
    %v1564 = vsub.f32 %v1560, %v1378
    %v1565 = vsub.f32 %v1561, %v1379
    %v1566 = vsub.f32 %v1562, %v1380
    %v1567 = vsub.f32 %v1563, %v1381
    %1568 = vmatprep.subr.mxu0 0.0
    %1569 = vmatpush1.msra.mxu0 %v1564
    %1570 = vmatprep.subr.mxu0 0.0
    %1571 = vmatpush1.msra.mxu0 %v1565
    %1572 = vmatprep.subr.mxu0 0.0
    %1573 = vmatpush1.msra.mxu0 %v1566
    %1574 = vmatprep.subr.mxu0 0.0
    %1575 = vmatpush1.msra.mxu0 %v1567
    %1576 = vmatprep.subr.mxu0 0.0
    %1577 = vmatpush1.msra.mxu0 0.0
    %1578 = vmatprep.subr.mxu0 0.0
    %1579 = vmatpush1.msra.mxu0 0.0
    %1580 = vmatprep.subr.mxu0 0.0
    %1581 = vmatpush1.msra.mxu0 0.0
    %1582 = vmatprep.subr.mxu0 0.0
    %1583 = vmatpush1.msra.mxu0 0.0
    %1584 = vmatprep.subr.mxu0 0.0
    %1585 = vmatpush1.msra.mxu0 0.0
    %1586 = vmatprep.subr.mxu0 0.0
    %1587 = vmatpush1.msra.mxu0 0.0
    %1588 = vmatprep.subr.mxu0 0.0
    %1589 = vmatpush1.msra.mxu0 0.0
    %1590 = vmatprep.subr.mxu0 0.0
    %1591 = vmatpush1.msra.mxu0 0.0
    %1592 = vmatprep.subr.mxu0 0.0
    %1593 = vmatpush1.msra.mxu0 0.0
    %1594 = vmatprep.subr.mxu0 0.0
    %1595 = vmatpush1.msra.mxu0 0.0
    %1596 = vmatprep.subr.mxu0 0.0
    %1597 = vmatpush1.msra.mxu0 0.0
    %1598 = vmatprep.subr.mxu0 0.0
    %1599 = vmatpush1.msra.mxu0 0.0
    %1600 = vmatprep.subr.mxu0 0.0
    %1601 = vmatpush1.msra.mxu0 0.0
    %1602 = vmatprep.subr.mxu0 0.0
    %1603 = vmatpush1.msra.mxu0 0.0
    %1604 = vmatprep.subr.mxu0 0.0
    %1605 = vmatpush1.msra.mxu0 0.0
    %1606 = vmatprep.subr.mxu0 0.0
    %1607 = vmatpush1.msra.mxu0 0.0
    %1608 = vmatprep.subr.mxu0 0.0
    %1609 = vmatpush1.msra.mxu0 0.0
    %1610 = vmatprep.subr.mxu0 0.0
    %1611 = vmatpush1.msra.mxu0 0.0
    %1612 = vmatprep.subr.mxu0 0.0
    %1613 = vmatpush1.msra.mxu0 0.0
    %1614 = vmatprep.subr.mxu0 0.0
    %1615 = vmatpush1.msra.mxu0 0.0
    %1616 = vmatprep.subr.mxu0 0.0
    %1617 = vmatpush1.msra.mxu0 0.0
    %1618 = vmatprep.subr.mxu0 0.0
    %1619 = vmatpush1.msra.mxu0 0.0
    %1620 = vmatprep.subr.mxu0 0.0
    %1621 = vmatpush1.msra.mxu0 0.0
    %1622 = vmatprep.subr.mxu0 0.0
    %1623 = vmatpush1.msra.mxu0 0.0
    %1624 = vmatprep.subr.mxu0 0.0
    %1625 = vmatpush1.msra.mxu0 0.0
    %1626 = vmatprep.subr.mxu0 0.0
    %1627 = vmatpush1.msra.mxu0 0.0
    %1628 = vmatprep.subr.mxu0 0.0
    %1629 = vmatpush1.msra.mxu0 0.0
    %1630 = vmatprep.subr.mxu0 0.0
    %1631 = vmatpush1.msra.mxu0 0.0
    %1632 = vmatprep.mubr.f32.mxu0 0.0
    %1633 = vmatmul.mubr.f32.gmra.mrb[0].mxu0 %v77
    %v1634 = vpop.f32.mrb[0].mxu0
    %v1635 = vadd.f32 0.0, %v1634
    %v1636 = vpop.f32.mrb[0].mxu0
    %1637 = vmatprep.mubr.f32.mxu0 0.0
    %1638 = vmatmul.mubr.f32.gmra.mrb[0].mxu0 %v80
    %v1639 = vpop.f32.mrb[0].mxu0
    %v1640 = vadd.f32 0.0, %v1639
    %v1641 = vpop.f32.mrb[0].mxu0
    %1642 = vmatprep.mubr.f32.mxu0 0.0
    %1643 = vmatmul.mubr.f32.gmra.mrb[0].mxu0 %v83
    %v1644 = vpop.f32.mrb[0].mxu0
    %v1645 = vadd.f32 0.0, %v1644
    %v1646 = vpop.f32.mrb[0].mxu0
    %1647 = vmatprep.mubr.f32.mxu0 0.0
    %1648 = vmatmul.mubr.f32.gmra.mrb[0].mxu0 %v86
    %v1649 = vpop.f32.mrb[0].mxu0
    %v1650 = vadd.f32 0.0, %v1649
    %v1651 = vpop.f32.mrb[0].mxu0
    %1652 = vdwg.mxu0
    %v1653 = vmul.f32 %v1635, 2.0
    %v1654 = vmul.f32 %v1640, 2.0
    %v1655 = vmul.f32 %v1645, 2.0
    %v1656 = vmul.f32 %v1650, 2.0
    %v1657 = vsub.f32 %v1653, %v1471
    %v1658 = vsub.f32 %v1654, %v1472
    %v1659 = vsub.f32 %v1655, %v1473
    %v1660 = vsub.f32 %v1656, %v1474
    %1661 = vmatprep.subr.mxu0 0.0
    %1662 = vmatpush1.msra.mxu0 %v1657
    %1663 = vmatprep.subr.mxu0 0.0
    %1664 = vmatpush1.msra.mxu0 %v1658
    %1665 = vmatprep.subr.mxu0 0.0
    %1666 = vmatpush1.msra.mxu0 %v1659
    %1667 = vmatprep.subr.mxu0 0.0
    %1668 = vmatpush1.msra.mxu0 %v1660
    %1669 = vmatprep.subr.mxu0 0.0
    %1670 = vmatpush1.msra.mxu0 0.0
    %1671 = vmatprep.subr.mxu0 0.0
    %1672 = vmatpush1.msra.mxu0 0.0
    %1673 = vmatprep.subr.mxu0 0.0
    %1674 = vmatpush1.msra.mxu0 0.0
    %1675 = vmatprep.subr.mxu0 0.0
    %1676 = vmatpush1.msra.mxu0 0.0
    %1677 = vmatprep.subr.mxu0 0.0
    %1678 = vmatpush1.msra.mxu0 0.0
    %1679 = vmatprep.subr.mxu0 0.0
    %1680 = vmatpush1.msra.mxu0 0.0
    %1681 = vmatprep.subr.mxu0 0.0
    %1682 = vmatpush1.msra.mxu0 0.0
    %1683 = vmatprep.subr.mxu0 0.0
    %1684 = vmatpush1.msra.mxu0 0.0
    %1685 = vmatprep.subr.mxu0 0.0
    %1686 = vmatpush1.msra.mxu0 0.0
    %1687 = vmatprep.subr.mxu0 0.0
    %1688 = vmatpush1.msra.mxu0 0.0
    %1689 = vmatprep.subr.mxu0 0.0
    %1690 = vmatpush1.msra.mxu0 0.0
    %1691 = vmatprep.subr.mxu0 0.0
    %1692 = vmatpush1.msra.mxu0 0.0
    %1693 = vmatprep.subr.mxu0 0.0
    %1694 = vmatpush1.msra.mxu0 0.0
    %1695 = vmatprep.subr.mxu0 0.0
    %1696 = vmatpush1.msra.mxu0 0.0
    %1697 = vmatprep.subr.mxu0 0.0
    %1698 = vmatpush1.msra.mxu0 0.0
    %1699 = vmatprep.subr.mxu0 0.0
    %1700 = vmatpush1.msra.mxu0 0.0
    %1701 = vmatprep.subr.mxu0 0.0
    %1702 = vmatpush1.msra.mxu0 0.0
    %1703 = vmatprep.subr.mxu0 0.0
    %1704 = vmatpush1.msra.mxu0 0.0
    %1705 = vmatprep.subr.mxu0 0.0
    %1706 = vmatpush1.msra.mxu0 0.0
    %1707 = vmatprep.subr.mxu0 0.0
    %1708 = vmatpush1.msra.mxu0 0.0
    %1709 = vmatprep.subr.mxu0 0.0
    %1710 = vmatpush1.msra.mxu0 0.0
    %1711 = vmatprep.subr.mxu0 0.0
    %1712 = vmatpush1.msra.mxu0 0.0
    %1713 = vmatprep.subr.mxu0 0.0
    %1714 = vmatpush1.msra.mxu0 0.0
    %1715 = vmatprep.subr.mxu0 0.0
    %1716 = vmatpush1.msra.mxu0 0.0
    %1717 = vmatprep.subr.mxu0 0.0
    %1718 = vmatpush1.msra.mxu0 0.0
    %1719 = vmatprep.subr.mxu0 0.0
    %1720 = vmatpush1.msra.mxu0 0.0
    %1721 = vmatprep.subr.mxu0 0.0
    %1722 = vmatpush1.msra.mxu0 0.0
    %1723 = vmatprep.subr.mxu0 0.0
    %1724 = vmatpush1.msra.mxu0 0.0
    %1725 = vmatprep.mubr.f32.mxu0 0.0
    %1726 = vmatmul.mubr.f32.gmra.mrb[0].mxu0 %v77
    %v1727 = vpop.f32.mrb[0].mxu0
    %v1728 = vadd.f32 0.0, %v1727
    %v1729 = vpop.f32.mrb[0].mxu0
    %1730 = vmatprep.mubr.f32.mxu0 0.0
    %1731 = vmatmul.mubr.f32.gmra.mrb[0].mxu0 %v80
    %v1732 = vpop.f32.mrb[0].mxu0
    %v1733 = vadd.f32 0.0, %v1732
    %v1734 = vpop.f32.mrb[0].mxu0
    %1735 = vmatprep.mubr.f32.mxu0 0.0
    %1736 = vmatmul.mubr.f32.gmra.mrb[0].mxu0 %v83
    %v1737 = vpop.f32.mrb[0].mxu0
    %v1738 = vadd.f32 0.0, %v1737
    %v1739 = vpop.f32.mrb[0].mxu0
    %1740 = vmatprep.mubr.f32.mxu0 0.0
    %1741 = vmatmul.mubr.f32.gmra.mrb[0].mxu0 %v86
    %v1742 = vpop.f32.mrb[0].mxu0
    %v1743 = vadd.f32 0.0, %v1742
    %v1744 = vpop.f32.mrb[0].mxu0
    %1745 = vdwg.mxu0
    %v1746 = vmul.f32 %v1728, 2.0
    %v1747 = vmul.f32 %v1733, 2.0
    %v1748 = vmul.f32 %v1738, 2.0
    %v1749 = vmul.f32 %v1743, 2.0
    %v1750 = vsub.f32 %v1746, %v1564
    %v1751 = vsub.f32 %v1747, %v1565
    %v1752 = vsub.f32 %v1748, %v1566
    %v1753 = vsub.f32 %v1749, %v1567
    %1754 = vmatprep.subr.mxu0 0.0
    %1755 = vmatpush1.msra.mxu0 %v1750
    %1756 = vmatprep.subr.mxu0 0.0
    %1757 = vmatpush1.msra.mxu0 %v1751
    %1758 = vmatprep.subr.mxu0 0.0
    %1759 = vmatpush1.msra.mxu0 %v1752
    %1760 = vmatprep.subr.mxu0 0.0
    %1761 = vmatpush1.msra.mxu0 %v1753
    %1762 = vmatprep.subr.mxu0 0.0
    %1763 = vmatpush1.msra.mxu0 0.0
    %1764 = vmatprep.subr.mxu0 0.0
    %1765 = vmatpush1.msra.mxu0 0.0
    %1766 = vmatprep.subr.mxu0 0.0
    %1767 = vmatpush1.msra.mxu0 0.0
    %1768 = vmatprep.subr.mxu0 0.0
    %1769 = vmatpush1.msra.mxu0 0.0
    %1770 = vmatprep.subr.mxu0 0.0
    %1771 = vmatpush1.msra.mxu0 0.0
    %1772 = vmatprep.subr.mxu0 0.0
    %1773 = vmatpush1.msra.mxu0 0.0
    %1774 = vmatprep.subr.mxu0 0.0
    %1775 = vmatpush1.msra.mxu0 0.0
    %1776 = vmatprep.subr.mxu0 0.0
    %1777 = vmatpush1.msra.mxu0 0.0
    %1778 = vmatprep.subr.mxu0 0.0
    %1779 = vmatpush1.msra.mxu0 0.0
    %1780 = vmatprep.subr.mxu0 0.0
    %1781 = vmatpush1.msra.mxu0 0.0
    %1782 = vmatprep.subr.mxu0 0.0
    %1783 = vmatpush1.msra.mxu0 0.0
    %1784 = vmatprep.subr.mxu0 0.0
    %1785 = vmatpush1.msra.mxu0 0.0
    %1786 = vmatprep.subr.mxu0 0.0
    %1787 = vmatpush1.msra.mxu0 0.0
    %1788 = vmatprep.subr.mxu0 0.0
    %1789 = vmatpush1.msra.mxu0 0.0
    %1790 = vmatprep.subr.mxu0 0.0
    %1791 = vmatpush1.msra.mxu0 0.0
    %1792 = vmatprep.subr.mxu0 0.0
    %1793 = vmatpush1.msra.mxu0 0.0
    %1794 = vmatprep.subr.mxu0 0.0
    %1795 = vmatpush1.msra.mxu0 0.0
    %1796 = vmatprep.subr.mxu0 0.0
    %1797 = vmatpush1.msra.mxu0 0.0
    %1798 = vmatprep.subr.mxu0 0.0
    %1799 = vmatpush1.msra.mxu0 0.0
    %1800 = vmatprep.subr.mxu0 0.0
    %1801 = vmatpush1.msra.mxu0 0.0
    %1802 = vmatprep.subr.mxu0 0.0
    %1803 = vmatpush1.msra.mxu0 0.0
    %1804 = vmatprep.subr.mxu0 0.0
    %1805 = vmatpush1.msra.mxu0 0.0
    %1806 = vmatprep.subr.mxu0 0.0
    %1807 = vmatpush1.msra.mxu0 0.0
    %1808 = vmatprep.subr.mxu0 0.0
    %1809 = vmatpush1.msra.mxu0 0.0
    %1810 = vmatprep.subr.mxu0 0.0
    %1811 = vmatpush1.msra.mxu0 0.0
    %1812 = vmatprep.subr.mxu0 0.0
    %1813 = vmatpush1.msra.mxu0 0.0
    %1814 = vmatprep.subr.mxu0 0.0
    %1815 = vmatpush1.msra.mxu0 0.0
    %1816 = vmatprep.subr.mxu0 0.0
    %1817 = vmatpush1.msra.mxu0 0.0
    %1818 = vmatprep.mubr.f32.mxu0 0.0
    %1819 = vmatmul.mubr.f32.gmra.mrb[0].mxu0 %v77
    %v1820 = vpop.f32.mrb[0].mxu0
    %v1821 = vadd.f32 0.0, %v1820
    %v1822 = vpop.f32.mrb[0].mxu0
    %1823 = vmatprep.mubr.f32.mxu0 0.0
    %1824 = vmatmul.mubr.f32.gmra.mrb[0].mxu0 %v80
    %v1825 = vpop.f32.mrb[0].mxu0
    %v1826 = vadd.f32 0.0, %v1825
    %v1827 = vpop.f32.mrb[0].mxu0
    %1828 = vmatprep.mubr.f32.mxu0 0.0
    %1829 = vmatmul.mubr.f32.gmra.mrb[0].mxu0 %v83
    %v1830 = vpop.f32.mrb[0].mxu0
    %v1831 = vadd.f32 0.0, %v1830
    %v1832 = vpop.f32.mrb[0].mxu0
    %1833 = vmatprep.mubr.f32.mxu0 0.0
    %1834 = vmatmul.mubr.f32.gmra.mrb[0].mxu0 %v86
    %v1835 = vpop.f32.mrb[0].mxu0
    %v1836 = vadd.f32 0.0, %v1835
    %v1837 = vpop.f32.mrb[0].mxu0
    %1838 = vdwg.mxu0
    %v1839 = vmul.f32 %v1821, 2.0
    %v1840 = vmul.f32 %v1826, 2.0
    %v1841 = vmul.f32 %v1831, 2.0
    %v1842 = vmul.f32 %v1836, 2.0
    %v1843 = vsub.f32 %v1839, %v1657
    %v1844 = vsub.f32 %v1840, %v1658
    %v1845 = vsub.f32 %v1841, %v1659
    %v1846 = vsub.f32 %v1842, %v1660
    %1847 = vmatprep.subr.mxu0 0.0
    %1848 = vmatpush1.msra.mxu0 %v1843
    %1849 = vmatprep.subr.mxu0 0.0
    %1850 = vmatpush1.msra.mxu0 %v1844
    %1851 = vmatprep.subr.mxu0 0.0
    %1852 = vmatpush1.msra.mxu0 %v1845
    %1853 = vmatprep.subr.mxu0 0.0
    %1854 = vmatpush1.msra.mxu0 %v1846
    %1855 = vmatprep.subr.mxu0 0.0
    %1856 = vmatpush1.msra.mxu0 0.0
    %1857 = vmatprep.subr.mxu0 0.0
    %1858 = vmatpush1.msra.mxu0 0.0
    %1859 = vmatprep.subr.mxu0 0.0
    %1860 = vmatpush1.msra.mxu0 0.0
    %1861 = vmatprep.subr.mxu0 0.0
    %1862 = vmatpush1.msra.mxu0 0.0
    %1863 = vmatprep.subr.mxu0 0.0
    %1864 = vmatpush1.msra.mxu0 0.0
    %1865 = vmatprep.subr.mxu0 0.0
    %1866 = vmatpush1.msra.mxu0 0.0
    %1867 = vmatprep.subr.mxu0 0.0
    %1868 = vmatpush1.msra.mxu0 0.0
    %1869 = vmatprep.subr.mxu0 0.0
    %1870 = vmatpush1.msra.mxu0 0.0
    %1871 = vmatprep.subr.mxu0 0.0
    %1872 = vmatpush1.msra.mxu0 0.0
    %1873 = vmatprep.subr.mxu0 0.0
    %1874 = vmatpush1.msra.mxu0 0.0
    %1875 = vmatprep.subr.mxu0 0.0
    %1876 = vmatpush1.msra.mxu0 0.0
    %1877 = vmatprep.subr.mxu0 0.0
    %1878 = vmatpush1.msra.mxu0 0.0
    %1879 = vmatprep.subr.mxu0 0.0
    %1880 = vmatpush1.msra.mxu0 0.0
    %1881 = vmatprep.subr.mxu0 0.0
    %1882 = vmatpush1.msra.mxu0 0.0
    %1883 = vmatprep.subr.mxu0 0.0
    %1884 = vmatpush1.msra.mxu0 0.0
    %1885 = vmatprep.subr.mxu0 0.0
    %1886 = vmatpush1.msra.mxu0 0.0
    %1887 = vmatprep.subr.mxu0 0.0
    %1888 = vmatpush1.msra.mxu0 0.0
    %1889 = vmatprep.subr.mxu0 0.0
    %1890 = vmatpush1.msra.mxu0 0.0
    %1891 = vmatprep.subr.mxu0 0.0
    %1892 = vmatpush1.msra.mxu0 0.0
    %1893 = vmatprep.subr.mxu0 0.0
    %1894 = vmatpush1.msra.mxu0 0.0
    %1895 = vmatprep.subr.mxu0 0.0
    %1896 = vmatpush1.msra.mxu0 0.0
    %1897 = vmatprep.subr.mxu0 0.0
    %1898 = vmatpush1.msra.mxu0 0.0
    %1899 = vmatprep.subr.mxu0 0.0
    %1900 = vmatpush1.msra.mxu0 0.0
    %1901 = vmatprep.subr.mxu0 0.0
    %1902 = vmatpush1.msra.mxu0 0.0
    %1903 = vmatprep.subr.mxu0 0.0
    %1904 = vmatpush1.msra.mxu0 0.0
    %1905 = vmatprep.subr.mxu0 0.0
    %1906 = vmatpush1.msra.mxu0 0.0
    %1907 = vmatprep.subr.mxu0 0.0
    %1908 = vmatpush1.msra.mxu0 0.0
    %1909 = vmatprep.subr.mxu0 0.0
    %1910 = vmatpush1.msra.mxu0 0.0
    %1911 = vmatprep.mubr.f32.mxu0 0.0
    %1912 = vmatmul.mubr.f32.gmra.mrb[0].mxu0 %v77
    %v1913 = vpop.f32.mrb[0].mxu0
    %v1914 = vadd.f32 0.0, %v1913
    %v1915 = vpop.f32.mrb[0].mxu0
    %1916 = vmatprep.mubr.f32.mxu0 0.0
    %1917 = vmatmul.mubr.f32.gmra.mrb[0].mxu0 %v80
    %v1918 = vpop.f32.mrb[0].mxu0
    %v1919 = vadd.f32 0.0, %v1918
    %v1920 = vpop.f32.mrb[0].mxu0
    %1921 = vmatprep.mubr.f32.mxu0 0.0
    %1922 = vmatmul.mubr.f32.gmra.mrb[0].mxu0 %v83
    %v1923 = vpop.f32.mrb[0].mxu0
    %v1924 = vadd.f32 0.0, %v1923
    %v1925 = vpop.f32.mrb[0].mxu0
    %1926 = vmatprep.mubr.f32.mxu0 0.0
    %1927 = vmatmul.mubr.f32.gmra.mrb[0].mxu0 %v86
    %v1928 = vpop.f32.mrb[0].mxu0
    %v1929 = vadd.f32 0.0, %v1928
    %v1930 = vpop.f32.mrb[0].mxu0
    %1931 = vdwg.mxu0
    %v1932 = vmul.f32 %v1914, 2.0
    %v1933 = vmul.f32 %v1919, 2.0
    %v1934 = vmul.f32 %v1924, 2.0
    %v1935 = vmul.f32 %v1929, 2.0
    %v1936 = vsub.f32 %v1932, %v1750
    %v1937 = vsub.f32 %v1933, %v1751
    %v1938 = vsub.f32 %v1934, %v1752
    %v1939 = vsub.f32 %v1935, %v1753
    %1940 = vmatprep.subr.mxu0 0.0
    %1941 = vmatpush1.msra.mxu0 %v1936
    %1942 = vmatprep.subr.mxu0 0.0
    %1943 = vmatpush1.msra.mxu0 %v1937
    %1944 = vmatprep.subr.mxu0 0.0
    %1945 = vmatpush1.msra.mxu0 %v1938
    %1946 = vmatprep.subr.mxu0 0.0
    %1947 = vmatpush1.msra.mxu0 %v1939
    %1948 = vmatprep.subr.mxu0 0.0
    %1949 = vmatpush1.msra.mxu0 0.0
    %1950 = vmatprep.subr.mxu0 0.0
    %1951 = vmatpush1.msra.mxu0 0.0
    %1952 = vmatprep.subr.mxu0 0.0
    %1953 = vmatpush1.msra.mxu0 0.0
    %1954 = vmatprep.subr.mxu0 0.0
    %1955 = vmatpush1.msra.mxu0 0.0
    %1956 = vmatprep.subr.mxu0 0.0
    %1957 = vmatpush1.msra.mxu0 0.0
    %1958 = vmatprep.subr.mxu0 0.0
    %1959 = vmatpush1.msra.mxu0 0.0
    %1960 = vmatprep.subr.mxu0 0.0
    %1961 = vmatpush1.msra.mxu0 0.0
    %1962 = vmatprep.subr.mxu0 0.0
    %1963 = vmatpush1.msra.mxu0 0.0
    %1964 = vmatprep.subr.mxu0 0.0
    %1965 = vmatpush1.msra.mxu0 0.0
    %1966 = vmatprep.subr.mxu0 0.0
    %1967 = vmatpush1.msra.mxu0 0.0
    %1968 = vmatprep.subr.mxu0 0.0
    %1969 = vmatpush1.msra.mxu0 0.0
    %1970 = vmatprep.subr.mxu0 0.0
    %1971 = vmatpush1.msra.mxu0 0.0
    %1972 = vmatprep.subr.mxu0 0.0
    %1973 = vmatpush1.msra.mxu0 0.0
    %1974 = vmatprep.subr.mxu0 0.0
    %1975 = vmatpush1.msra.mxu0 0.0
    %1976 = vmatprep.subr.mxu0 0.0
    %1977 = vmatpush1.msra.mxu0 0.0
    %1978 = vmatprep.subr.mxu0 0.0
    %1979 = vmatpush1.msra.mxu0 0.0
    %1980 = vmatprep.subr.mxu0 0.0
    %1981 = vmatpush1.msra.mxu0 0.0
    %1982 = vmatprep.subr.mxu0 0.0
    %1983 = vmatpush1.msra.mxu0 0.0
    %1984 = vmatprep.subr.mxu0 0.0
    %1985 = vmatpush1.msra.mxu0 0.0
    %1986 = vmatprep.subr.mxu0 0.0
    %1987 = vmatpush1.msra.mxu0 0.0
    %1988 = vmatprep.subr.mxu0 0.0
    %1989 = vmatpush1.msra.mxu0 0.0
    %1990 = vmatprep.subr.mxu0 0.0
    %1991 = vmatpush1.msra.mxu0 0.0
    %1992 = vmatprep.subr.mxu0 0.0
    %1993 = vmatpush1.msra.mxu0 0.0
    %1994 = vmatprep.subr.mxu0 0.0
    %1995 = vmatpush1.msra.mxu0 0.0
    %1996 = vmatprep.subr.mxu0 0.0
    %1997 = vmatpush1.msra.mxu0 0.0
    %1998 = vmatprep.subr.mxu0 0.0
    %1999 = vmatpush1.msra.mxu0 0.0
    %2000 = vmatprep.subr.mxu0 0.0
    %2001 = vmatpush1.msra.mxu0 0.0
    %2002 = vmatprep.subr.mxu0 0.0
    %2003 = vmatpush1.msra.mxu0 0.0
    %2004 = vmatprep.mubr.f32.mxu0 0.0
    %2005 = vmatmul.mubr.f32.gmra.mrb[0].mxu0 %v77
    %v2006 = vpop.f32.mrb[0].mxu0
    %v2007 = vadd.f32 0.0, %v2006
    %v2008 = vpop.f32.mrb[0].mxu0
    %2009 = vmatprep.mubr.f32.mxu0 0.0
    %2010 = vmatmul.mubr.f32.gmra.mrb[0].mxu0 %v80
    %v2011 = vpop.f32.mrb[0].mxu0
    %v2012 = vadd.f32 0.0, %v2011
    %v2013 = vpop.f32.mrb[0].mxu0
    %2014 = vmatprep.mubr.f32.mxu0 0.0
    %2015 = vmatmul.mubr.f32.gmra.mrb[0].mxu0 %v83
    %v2016 = vpop.f32.mrb[0].mxu0
    %v2017 = vadd.f32 0.0, %v2016
    %v2018 = vpop.f32.mrb[0].mxu0
    %2019 = vmatprep.mubr.f32.mxu0 0.0
    %2020 = vmatmul.mubr.f32.gmra.mrb[0].mxu0 %v86
    %v2021 = vpop.f32.mrb[0].mxu0
    %v2022 = vadd.f32 0.0, %v2021
    %v2023 = vpop.f32.mrb[0].mxu0
    %2024 = vdwg.mxu0
    %v2025 = vmul.f32 %v2007, 2.0
    %v2026 = vmul.f32 %v2012, 2.0
    %v2027 = vmul.f32 %v2017, 2.0
    %v2028 = vmul.f32 %v2022, 2.0
    %v2029 = vsub.f32 %v2025, %v1843
    %v2030 = vsub.f32 %v2026, %v1844
    %v2031 = vsub.f32 %v2027, %v1845
    %v2032 = vsub.f32 %v2028, %v1846
    %2033 = vmatprep.subr.mxu0 0.0
    %2034 = vmatpush1.msra.mxu0 %v2029
    %2035 = vmatprep.subr.mxu0 0.0
    %2036 = vmatpush1.msra.mxu0 %v2030
    %2037 = vmatprep.subr.mxu0 0.0
    %2038 = vmatpush1.msra.mxu0 %v2031
    %2039 = vmatprep.subr.mxu0 0.0
    %2040 = vmatpush1.msra.mxu0 %v2032
    %2041 = vmatprep.subr.mxu0 0.0
    %2042 = vmatpush1.msra.mxu0 0.0
    %2043 = vmatprep.subr.mxu0 0.0
    %2044 = vmatpush1.msra.mxu0 0.0
    %2045 = vmatprep.subr.mxu0 0.0
    %2046 = vmatpush1.msra.mxu0 0.0
    %2047 = vmatprep.subr.mxu0 0.0
    %2048 = vmatpush1.msra.mxu0 0.0
    %2049 = vmatprep.subr.mxu0 0.0
    %2050 = vmatpush1.msra.mxu0 0.0
    %2051 = vmatprep.subr.mxu0 0.0
    %2052 = vmatpush1.msra.mxu0 0.0
    %2053 = vmatprep.subr.mxu0 0.0
    %2054 = vmatpush1.msra.mxu0 0.0
    %2055 = vmatprep.subr.mxu0 0.0
    %2056 = vmatpush1.msra.mxu0 0.0
    %2057 = vmatprep.subr.mxu0 0.0
    %2058 = vmatpush1.msra.mxu0 0.0
    %2059 = vmatprep.subr.mxu0 0.0
    %2060 = vmatpush1.msra.mxu0 0.0
    %2061 = vmatprep.subr.mxu0 0.0
    %2062 = vmatpush1.msra.mxu0 0.0
    %2063 = vmatprep.subr.mxu0 0.0
    %2064 = vmatpush1.msra.mxu0 0.0
    %2065 = vmatprep.subr.mxu0 0.0
    %2066 = vmatpush1.msra.mxu0 0.0
    %2067 = vmatprep.subr.mxu0 0.0
    %2068 = vmatpush1.msra.mxu0 0.0
    %2069 = vmatprep.subr.mxu0 0.0
    %2070 = vmatpush1.msra.mxu0 0.0
    %2071 = vmatprep.subr.mxu0 0.0
    %2072 = vmatpush1.msra.mxu0 0.0
    %2073 = vmatprep.subr.mxu0 0.0
    %2074 = vmatpush1.msra.mxu0 0.0
    %2075 = vmatprep.subr.mxu0 0.0
    %2076 = vmatpush1.msra.mxu0 0.0
    %2077 = vmatprep.subr.mxu0 0.0
    %2078 = vmatpush1.msra.mxu0 0.0
    %2079 = vmatprep.subr.mxu0 0.0
    %2080 = vmatpush1.msra.mxu0 0.0
    %2081 = vmatprep.subr.mxu0 0.0
    %2082 = vmatpush1.msra.mxu0 0.0
    %2083 = vmatprep.subr.mxu0 0.0
    %2084 = vmatpush1.msra.mxu0 0.0
    %2085 = vmatprep.subr.mxu0 0.0
    %2086 = vmatpush1.msra.mxu0 0.0
    %2087 = vmatprep.subr.mxu0 0.0
    %2088 = vmatpush1.msra.mxu0 0.0
    %2089 = vmatprep.subr.mxu0 0.0
    %2090 = vmatpush1.msra.mxu0 0.0
    %2091 = vmatprep.subr.mxu0 0.0
    %2092 = vmatpush1.msra.mxu0 0.0
    %2093 = vmatprep.subr.mxu0 0.0
    %2094 = vmatpush1.msra.mxu0 0.0
    %2095 = vmatprep.subr.mxu0 0.0
    %2096 = vmatpush1.msra.mxu0 0.0
    %2097 = vmatprep.mubr.f32.mxu0 0.0
    %2098 = vmatmul.mubr.f32.gmra.mrb[0].mxu0 %v77
    %v2099 = vpop.f32.mrb[0].mxu0
    %v2100 = vadd.f32 0.0, %v2099
    %v2101 = vpop.f32.mrb[0].mxu0
    %2102 = vmatprep.mubr.f32.mxu0 0.0
    %2103 = vmatmul.mubr.f32.gmra.mrb[0].mxu0 %v80
    %v2104 = vpop.f32.mrb[0].mxu0
    %v2105 = vadd.f32 0.0, %v2104
    %v2106 = vpop.f32.mrb[0].mxu0
    %2107 = vmatprep.mubr.f32.mxu0 0.0
    %2108 = vmatmul.mubr.f32.gmra.mrb[0].mxu0 %v83
    %v2109 = vpop.f32.mrb[0].mxu0
    %v2110 = vadd.f32 0.0, %v2109
    %v2111 = vpop.f32.mrb[0].mxu0
    %2112 = vmatprep.mubr.f32.mxu0 0.0
    %2113 = vmatmul.mubr.f32.gmra.mrb[0].mxu0 %v86
    %v2114 = vpop.f32.mrb[0].mxu0
    %v2115 = vadd.f32 0.0, %v2114
    %v2116 = vpop.f32.mrb[0].mxu0
    %2117 = vdwg.mxu0
    %v2118 = vmul.f32 %v2100, 2.0
    %v2119 = vmul.f32 %v2105, 2.0
    %v2120 = vmul.f32 %v2110, 2.0
    %v2121 = vmul.f32 %v2115, 2.0
    %v2122 = vsub.f32 %v2118, %v1936
    %v2123 = vsub.f32 %v2119, %v1937
    %v2124 = vsub.f32 %v2120, %v1938
    %v2125 = vsub.f32 %v2121, %v1939
    %2126 = vmatprep.subr.mxu0 0.0
    %2127 = vmatpush1.msra.mxu0 %v2122
    %2128 = vmatprep.subr.mxu0 0.0
    %2129 = vmatpush1.msra.mxu0 %v2123
    %2130 = vmatprep.subr.mxu0 0.0
    %2131 = vmatpush1.msra.mxu0 %v2124
    %2132 = vmatprep.subr.mxu0 0.0
    %2133 = vmatpush1.msra.mxu0 %v2125
    %2134 = vmatprep.subr.mxu0 0.0
    %2135 = vmatpush1.msra.mxu0 0.0
    %2136 = vmatprep.subr.mxu0 0.0
    %2137 = vmatpush1.msra.mxu0 0.0
    %2138 = vmatprep.subr.mxu0 0.0
    %2139 = vmatpush1.msra.mxu0 0.0
    %2140 = vmatprep.subr.mxu0 0.0
    %2141 = vmatpush1.msra.mxu0 0.0
    %2142 = vmatprep.subr.mxu0 0.0
    %2143 = vmatpush1.msra.mxu0 0.0
    %2144 = vmatprep.subr.mxu0 0.0
    %2145 = vmatpush1.msra.mxu0 0.0
    %2146 = vmatprep.subr.mxu0 0.0
    %2147 = vmatpush1.msra.mxu0 0.0
    %2148 = vmatprep.subr.mxu0 0.0
    %2149 = vmatpush1.msra.mxu0 0.0
    %2150 = vmatprep.subr.mxu0 0.0
    %2151 = vmatpush1.msra.mxu0 0.0
    %2152 = vmatprep.subr.mxu0 0.0
    %2153 = vmatpush1.msra.mxu0 0.0
    %2154 = vmatprep.subr.mxu0 0.0
    %2155 = vmatpush1.msra.mxu0 0.0
    %2156 = vmatprep.subr.mxu0 0.0
    %2157 = vmatpush1.msra.mxu0 0.0
    %2158 = vmatprep.subr.mxu0 0.0
    %2159 = vmatpush1.msra.mxu0 0.0
    %2160 = vmatprep.subr.mxu0 0.0
    %2161 = vmatpush1.msra.mxu0 0.0
    %2162 = vmatprep.subr.mxu0 0.0
    %2163 = vmatpush1.msra.mxu0 0.0
    %2164 = vmatprep.subr.mxu0 0.0
    %2165 = vmatpush1.msra.mxu0 0.0
    %2166 = vmatprep.subr.mxu0 0.0
    %2167 = vmatpush1.msra.mxu0 0.0
    %2168 = vmatprep.subr.mxu0 0.0
    %2169 = vmatpush1.msra.mxu0 0.0
    %2170 = vmatprep.subr.mxu0 0.0
    %2171 = vmatpush1.msra.mxu0 0.0
    %2172 = vmatprep.subr.mxu0 0.0
    %2173 = vmatpush1.msra.mxu0 0.0
    %2174 = vmatprep.subr.mxu0 0.0
    %2175 = vmatpush1.msra.mxu0 0.0
    %2176 = vmatprep.subr.mxu0 0.0
    %2177 = vmatpush1.msra.mxu0 0.0
    %2178 = vmatprep.subr.mxu0 0.0
    %2179 = vmatpush1.msra.mxu0 0.0
    %2180 = vmatprep.subr.mxu0 0.0
    %2181 = vmatpush1.msra.mxu0 0.0
    %2182 = vmatprep.subr.mxu0 0.0
    %2183 = vmatpush1.msra.mxu0 0.0
    %2184 = vmatprep.subr.mxu0 0.0
    %2185 = vmatpush1.msra.mxu0 0.0
    %2186 = vmatprep.subr.mxu0 0.0
    %2187 = vmatpush1.msra.mxu0 0.0
    %2188 = vmatprep.subr.mxu0 0.0
    %2189 = vmatpush1.msra.mxu0 0.0
    %2190 = vmatprep.mubr.f32.mxu0 0.0
    %2191 = vmatmul.mubr.f32.gmra.mrb[0].mxu0 %v77
    %v2192 = vpop.f32.mrb[0].mxu0
    %v2193 = vadd.f32 0.0, %v2192
    %v2194 = vpop.f32.mrb[0].mxu0
    %2195 = vmatprep.mubr.f32.mxu0 0.0
    %2196 = vmatmul.mubr.f32.gmra.mrb[0].mxu0 %v80
    %v2197 = vpop.f32.mrb[0].mxu0
    %v2198 = vadd.f32 0.0, %v2197
    %v2199 = vpop.f32.mrb[0].mxu0
    %2200 = vmatprep.mubr.f32.mxu0 0.0
    %2201 = vmatmul.mubr.f32.gmra.mrb[0].mxu0 %v83
    %v2202 = vpop.f32.mrb[0].mxu0
    %v2203 = vadd.f32 0.0, %v2202
    %v2204 = vpop.f32.mrb[0].mxu0
    %2205 = vmatprep.mubr.f32.mxu0 0.0
    %2206 = vmatmul.mubr.f32.gmra.mrb[0].mxu0 %v86
    %v2207 = vpop.f32.mrb[0].mxu0
    %v2208 = vadd.f32 0.0, %v2207
    %v2209 = vpop.f32.mrb[0].mxu0
    %2210 = vdwg.mxu0
    %v2211 = vmul.f32 %v2193, 2.0
    %v2212 = vmul.f32 %v2198, 2.0
    %v2213 = vmul.f32 %v2203, 2.0
    %v2214 = vmul.f32 %v2208, 2.0
    %v2215 = vsub.f32 %v2211, %v2029
    %v2216 = vsub.f32 %v2212, %v2030
    %v2217 = vsub.f32 %v2213, %v2031
    %v2218 = vsub.f32 %v2214, %v2032
    %2219 = vmatprep.subr.mxu0 0.0
    %2220 = vmatpush1.msra.mxu0 %v2215
    %2221 = vmatprep.subr.mxu0 0.0
    %2222 = vmatpush1.msra.mxu0 %v2216
    %2223 = vmatprep.subr.mxu0 0.0
    %2224 = vmatpush1.msra.mxu0 %v2217
    %2225 = vmatprep.subr.mxu0 0.0
    %2226 = vmatpush1.msra.mxu0 %v2218
    %2227 = vmatprep.subr.mxu0 0.0
    %2228 = vmatpush1.msra.mxu0 0.0
    %2229 = vmatprep.subr.mxu0 0.0
    %2230 = vmatpush1.msra.mxu0 0.0
    %2231 = vmatprep.subr.mxu0 0.0
    %2232 = vmatpush1.msra.mxu0 0.0
    %2233 = vmatprep.subr.mxu0 0.0
    %2234 = vmatpush1.msra.mxu0 0.0
    %2235 = vmatprep.subr.mxu0 0.0
    %2236 = vmatpush1.msra.mxu0 0.0
    %2237 = vmatprep.subr.mxu0 0.0
    %2238 = vmatpush1.msra.mxu0 0.0
    %2239 = vmatprep.subr.mxu0 0.0
    %2240 = vmatpush1.msra.mxu0 0.0
    %2241 = vmatprep.subr.mxu0 0.0
    %2242 = vmatpush1.msra.mxu0 0.0
    %2243 = vmatprep.subr.mxu0 0.0
    %2244 = vmatpush1.msra.mxu0 0.0
    %2245 = vmatprep.subr.mxu0 0.0
    %2246 = vmatpush1.msra.mxu0 0.0
    %2247 = vmatprep.subr.mxu0 0.0
    %2248 = vmatpush1.msra.mxu0 0.0
    %2249 = vmatprep.subr.mxu0 0.0
    %2250 = vmatpush1.msra.mxu0 0.0
    %2251 = vmatprep.subr.mxu0 0.0
    %2252 = vmatpush1.msra.mxu0 0.0
    %2253 = vmatprep.subr.mxu0 0.0
    %2254 = vmatpush1.msra.mxu0 0.0
    %2255 = vmatprep.subr.mxu0 0.0
    %2256 = vmatpush1.msra.mxu0 0.0
    %2257 = vmatprep.subr.mxu0 0.0
    %2258 = vmatpush1.msra.mxu0 0.0
    %2259 = vmatprep.subr.mxu0 0.0
    %2260 = vmatpush1.msra.mxu0 0.0
    %2261 = vmatprep.subr.mxu0 0.0
    %2262 = vmatpush1.msra.mxu0 0.0
    %2263 = vmatprep.subr.mxu0 0.0
    %2264 = vmatpush1.msra.mxu0 0.0
    %2265 = vmatprep.subr.mxu0 0.0
    %2266 = vmatpush1.msra.mxu0 0.0
    %2267 = vmatprep.subr.mxu0 0.0
    %2268 = vmatpush1.msra.mxu0 0.0
    %2269 = vmatprep.subr.mxu0 0.0
    %2270 = vmatpush1.msra.mxu0 0.0
    %2271 = vmatprep.subr.mxu0 0.0
    %2272 = vmatpush1.msra.mxu0 0.0
    %2273 = vmatprep.subr.mxu0 0.0
    %2274 = vmatpush1.msra.mxu0 0.0
    %2275 = vmatprep.subr.mxu0 0.0
    %2276 = vmatpush1.msra.mxu0 0.0
    %2277 = vmatprep.subr.mxu0 0.0
    %2278 = vmatpush1.msra.mxu0 0.0
    %2279 = vmatprep.subr.mxu0 0.0
    %2280 = vmatpush1.msra.mxu0 0.0
    %2281 = vmatprep.subr.mxu0 0.0
    %2282 = vmatpush1.msra.mxu0 0.0
    %2283 = vmatprep.mubr.f32.mxu0 0.0
    %2284 = vmatmul.mubr.f32.gmra.mrb[0].mxu0 %v77
    %v2285 = vpop.f32.mrb[0].mxu0
    %v2286 = vadd.f32 0.0, %v2285
    %v2287 = vpop.f32.mrb[0].mxu0
    %2288 = vmatprep.mubr.f32.mxu0 0.0
    %2289 = vmatmul.mubr.f32.gmra.mrb[0].mxu0 %v80
    %v2290 = vpop.f32.mrb[0].mxu0
    %v2291 = vadd.f32 0.0, %v2290
    %v2292 = vpop.f32.mrb[0].mxu0
    %2293 = vmatprep.mubr.f32.mxu0 0.0
    %2294 = vmatmul.mubr.f32.gmra.mrb[0].mxu0 %v83
    %v2295 = vpop.f32.mrb[0].mxu0
    %v2296 = vadd.f32 0.0, %v2295
    %v2297 = vpop.f32.mrb[0].mxu0
    %2298 = vmatprep.mubr.f32.mxu0 0.0
    %2299 = vmatmul.mubr.f32.gmra.mrb[0].mxu0 %v86
    %v2300 = vpop.f32.mrb[0].mxu0
    %v2301 = vadd.f32 0.0, %v2300
    %v2302 = vpop.f32.mrb[0].mxu0
    %2303 = vdwg.mxu0
    %v2304 = vmul.f32 %v2286, 2.0
    %v2305 = vmul.f32 %v2291, 2.0
    %v2306 = vmul.f32 %v2296, 2.0
    %v2307 = vmul.f32 %v2301, 2.0
    %v2308 = vsub.f32 %v2304, %v2122
    %v2309 = vsub.f32 %v2305, %v2123
    %v2310 = vsub.f32 %v2306, %v2124
    %v2311 = vsub.f32 %v2307, %v2125
    %2316 = vrot.lane.b32.xlu0 %v155, 4
    %v2317 = vpop.permute.xlu0 %2316
    %2318 = vrot.lane.b32.xlu0 %v160, 4
    %v2319 = vpop.permute.xlu0 %2318
    %2320 = vrot.lane.b32.xlu0 %v165, 4
    %v2321 = vpop.permute.xlu0 %2320
    %2322 = vrot.lane.b32.xlu0 %v170, 4
    %v2323 = vpop.permute.xlu0 %2322
    %2332 = vrot.lane.b32.xlu0 %v262, 8
    %v2333 = vpop.permute.xlu0 %2332
    %2334 = vrot.lane.b32.xlu0 %v263, 8
    %v2335 = vpop.permute.xlu0 %2334
    %2336 = vrot.lane.b32.xlu0 %v264, 8
    %v2337 = vpop.permute.xlu0 %2336
    %2338 = vrot.lane.b32.xlu0 %v265, 8
    %v2339 = vpop.permute.xlu0 %2338
    %2348 = vrot.lane.b32.xlu0 %v355, 12
    %v2349 = vpop.permute.xlu0 %2348
    %2350 = vrot.lane.b32.xlu0 %v356, 12
    %v2351 = vpop.permute.xlu0 %2350
    %2352 = vrot.lane.b32.xlu0 %v357, 12
    %v2353 = vpop.permute.xlu0 %2352
    %2354 = vrot.lane.b32.xlu0 %v358, 12
    %v2355 = vpop.permute.xlu0 %2354
    %2364 = vrot.lane.b32.xlu0 %v448, 16
    %v2365 = vpop.permute.xlu0 %2364
    %2366 = vrot.lane.b32.xlu0 %v449, 16
    %v2367 = vpop.permute.xlu0 %2366
    %2368 = vrot.lane.b32.xlu0 %v450, 16
    %v2369 = vpop.permute.xlu0 %2368
    %2370 = vrot.lane.b32.xlu0 %v451, 16
    %v2371 = vpop.permute.xlu0 %2370
    %2380 = vrot.lane.b32.xlu0 %v541, 20
    %v2381 = vpop.permute.xlu0 %2380
    %2382 = vrot.lane.b32.xlu0 %v542, 20
    %v2383 = vpop.permute.xlu0 %2382
    %2384 = vrot.lane.b32.xlu0 %v543, 20
    %v2385 = vpop.permute.xlu0 %2384
    %2386 = vrot.lane.b32.xlu0 %v544, 20
    %v2387 = vpop.permute.xlu0 %2386
    %2396 = vrot.lane.b32.xlu0 %v634, 24
    %v2397 = vpop.permute.xlu0 %2396
    %2398 = vrot.lane.b32.xlu0 %v635, 24
    %v2399 = vpop.permute.xlu0 %2398
    %2400 = vrot.lane.b32.xlu0 %v636, 24
    %v2401 = vpop.permute.xlu0 %2400
    %2402 = vrot.lane.b32.xlu0 %v637, 24
    %v2403 = vpop.permute.xlu0 %2402
    %2412 = vrot.lane.b32.xlu0 %v727, 28
    %v2413 = vpop.permute.xlu0 %2412
    %2414 = vrot.lane.b32.xlu0 %v728, 28
    %v2415 = vpop.permute.xlu0 %2414
    %2416 = vrot.lane.b32.xlu0 %v729, 28
    %v2417 = vpop.permute.xlu0 %2416
    %2418 = vrot.lane.b32.xlu0 %v730, 28
    %v2419 = vpop.permute.xlu0 %2418
    %2428 = vrot.lane.b32.xlu0 %v820, 32
    %v2429 = vpop.permute.xlu0 %2428
    %2430 = vrot.lane.b32.xlu0 %v821, 32
    %v2431 = vpop.permute.xlu0 %2430
    %2432 = vrot.lane.b32.xlu0 %v822, 32
    %v2433 = vpop.permute.xlu0 %2432
    %2434 = vrot.lane.b32.xlu0 %v823, 32
    %v2435 = vpop.permute.xlu0 %2434
    %2444 = vrot.lane.b32.xlu0 %v913, 36
    %v2445 = vpop.permute.xlu0 %2444
    %2446 = vrot.lane.b32.xlu0 %v914, 36
    %v2447 = vpop.permute.xlu0 %2446
    %2448 = vrot.lane.b32.xlu0 %v915, 36
    %v2449 = vpop.permute.xlu0 %2448
    %2450 = vrot.lane.b32.xlu0 %v916, 36
    %v2451 = vpop.permute.xlu0 %2450
    %2460 = vrot.lane.b32.xlu0 %v1006, 40
    %v2461 = vpop.permute.xlu0 %2460
    %2462 = vrot.lane.b32.xlu0 %v1007, 40
    %v2463 = vpop.permute.xlu0 %2462
    %2464 = vrot.lane.b32.xlu0 %v1008, 40
    %v2465 = vpop.permute.xlu0 %2464
    %2466 = vrot.lane.b32.xlu0 %v1009, 40
    %v2467 = vpop.permute.xlu0 %2466
    %2476 = vrot.lane.b32.xlu0 %v1099, 44
    %v2477 = vpop.permute.xlu0 %2476
    %2478 = vrot.lane.b32.xlu0 %v1100, 44
    %v2479 = vpop.permute.xlu0 %2478
    %2480 = vrot.lane.b32.xlu0 %v1101, 44
    %v2481 = vpop.permute.xlu0 %2480
    %2482 = vrot.lane.b32.xlu0 %v1102, 44
    %v2483 = vpop.permute.xlu0 %2482
    %2492 = vrot.lane.b32.xlu0 %v1192, 48
    %v2493 = vpop.permute.xlu0 %2492
    %2494 = vrot.lane.b32.xlu0 %v1193, 48
    %v2495 = vpop.permute.xlu0 %2494
    %2496 = vrot.lane.b32.xlu0 %v1194, 48
    %v2497 = vpop.permute.xlu0 %2496
    %2498 = vrot.lane.b32.xlu0 %v1195, 48
    %v2499 = vpop.permute.xlu0 %2498
    %2508 = vrot.lane.b32.xlu0 %v1285, 52
    %v2509 = vpop.permute.xlu0 %2508
    %2510 = vrot.lane.b32.xlu0 %v1286, 52
    %v2511 = vpop.permute.xlu0 %2510
    %2512 = vrot.lane.b32.xlu0 %v1287, 52
    %v2513 = vpop.permute.xlu0 %2512
    %2514 = vrot.lane.b32.xlu0 %v1288, 52
    %v2515 = vpop.permute.xlu0 %2514
    %2524 = vrot.lane.b32.xlu0 %v1378, 56
    %v2525 = vpop.permute.xlu0 %2524
    %2526 = vrot.lane.b32.xlu0 %v1379, 56
    %v2527 = vpop.permute.xlu0 %2526
    %2528 = vrot.lane.b32.xlu0 %v1380, 56
    %v2529 = vpop.permute.xlu0 %2528
    %2530 = vrot.lane.b32.xlu0 %v1381, 56
    %v2531 = vpop.permute.xlu0 %2530
    %2540 = vrot.lane.b32.xlu0 %v1471, 60
    %v2541 = vpop.permute.xlu0 %2540
    %2542 = vrot.lane.b32.xlu0 %v1472, 60
    %v2543 = vpop.permute.xlu0 %2542
    %2544 = vrot.lane.b32.xlu0 %v1473, 60
    %v2545 = vpop.permute.xlu0 %2544
    %2546 = vrot.lane.b32.xlu0 %v1474, 60
    %v2547 = vpop.permute.xlu0 %2546
    %vm2552 = vcmask 31744
    %v2553 = vsel %vm2552, %v67, %v2317
    %v2554 = vsel %vm2552, %v68, %v2319
    %v2555 = vsel %vm2552, %v69, %v2321
    %v2556 = vsel %vm2552, %v70, %v2323
    %vm2557 = vcmask 64512
    %v2558 = vsel %vm2557, %v2553, %v2333
    %v2559 = vsel %vm2557, %v2554, %v2335
    %v2560 = vsel %vm2557, %v2555, %v2337
    %v2561 = vsel %vm2557, %v2556, %v2339
    %vm2562 = vcmask 97280
    %v2563 = vsel %vm2562, %v2558, %v2349
    %v2564 = vsel %vm2562, %v2559, %v2351
    %v2565 = vsel %vm2562, %v2560, %v2353
    %v2566 = vsel %vm2562, %v2561, %v2355
    %vm2567 = vcmask 130048
    %v2568 = vsel %vm2567, %v2563, %v2365
    %v2569 = vsel %vm2567, %v2564, %v2367
    %v2570 = vsel %vm2567, %v2565, %v2369
    %v2571 = vsel %vm2567, %v2566, %v2371
    %vm2572 = vcmask 162816
    %v2573 = vsel %vm2572, %v2568, %v2381
    %v2574 = vsel %vm2572, %v2569, %v2383
    %v2575 = vsel %vm2572, %v2570, %v2385
    %v2576 = vsel %vm2572, %v2571, %v2387
    %vm2577 = vcmask 195584
    %v2578 = vsel %vm2577, %v2573, %v2397
    %v2579 = vsel %vm2577, %v2574, %v2399
    %v2580 = vsel %vm2577, %v2575, %v2401
    %v2581 = vsel %vm2577, %v2576, %v2403
    %vm2582 = vcmask 228352
    %v2583 = vsel %vm2582, %v2578, %v2413
    %v2584 = vsel %vm2582, %v2579, %v2415
    %v2585 = vsel %vm2582, %v2580, %v2417
    %v2586 = vsel %vm2582, %v2581, %v2419
    %v2587 = vsel %vm75, %v2583, %v2429
    %v2588 = vsel %vm75, %v2584, %v2431
    %v2589 = vsel %vm75, %v2585, %v2433
    %v2590 = vsel %vm75, %v2586, %v2435
    %vm2591 = vcmask 293888
    %v2592 = vsel %vm2591, %v2587, %v2445
    %v2593 = vsel %vm2591, %v2588, %v2447
    %v2594 = vsel %vm2591, %v2589, %v2449
    %v2595 = vsel %vm2591, %v2590, %v2451
    %vm2596 = vcmask 326656
    %v2597 = vsel %vm2596, %v2592, %v2461
    %v2598 = vsel %vm2596, %v2593, %v2463
    %v2599 = vsel %vm2596, %v2594, %v2465
    %v2600 = vsel %vm2596, %v2595, %v2467
    %vm2601 = vcmask 359424
    %v2602 = vsel %vm2601, %v2597, %v2477
    %v2603 = vsel %vm2601, %v2598, %v2479
    %v2604 = vsel %vm2601, %v2599, %v2481
    %v2605 = vsel %vm2601, %v2600, %v2483
    %vm2606 = vcmask 392192
    %v2607 = vsel %vm2606, %v2602, %v2493
    %v2608 = vsel %vm2606, %v2603, %v2495
    %v2609 = vsel %vm2606, %v2604, %v2497
    %v2610 = vsel %vm2606, %v2605, %v2499
    %vm2611 = vcmask 424960
    %v2612 = vsel %vm2611, %v2607, %v2509
    %v2613 = vsel %vm2611, %v2608, %v2511
    %v2614 = vsel %vm2611, %v2609, %v2513
    %v2615 = vsel %vm2611, %v2610, %v2515
    %vm2616 = vcmask 457728
    %v2617 = vsel %vm2616, %v2612, %v2525
    %v2618 = vsel %vm2616, %v2613, %v2527
    %v2619 = vsel %vm2616, %v2614, %v2529
    %v2620 = vsel %vm2616, %v2615, %v2531
    %vm2621 = vcmask 490496
    %v2622 = vsel %vm2621, %v2617, %v2541
    %v2623 = vsel %vm2621, %v2618, %v2543
    %v2624 = vsel %vm2621, %v2619, %v2545
    %v2625 = vsel %vm2621, %v2620, %v2547
    %2630 = vrot.lane.b32.xlu0 %v1657, 4
    %v2631 = vpop.permute.xlu0 %2630
    %2632 = vrot.lane.b32.xlu0 %v1658, 4
    %v2633 = vpop.permute.xlu0 %2632
    %2634 = vrot.lane.b32.xlu0 %v1659, 4
    %v2635 = vpop.permute.xlu0 %2634
    %2636 = vrot.lane.b32.xlu0 %v1660, 4
    %v2637 = vpop.permute.xlu0 %2636
    %2646 = vrot.lane.b32.xlu0 %v1750, 8
    %v2647 = vpop.permute.xlu0 %2646
    %2648 = vrot.lane.b32.xlu0 %v1751, 8
    %v2649 = vpop.permute.xlu0 %2648
    %2650 = vrot.lane.b32.xlu0 %v1752, 8
    %v2651 = vpop.permute.xlu0 %2650
    %2652 = vrot.lane.b32.xlu0 %v1753, 8
    %v2653 = vpop.permute.xlu0 %2652
    %2662 = vrot.lane.b32.xlu0 %v1843, 12
    %v2663 = vpop.permute.xlu0 %2662
    %2664 = vrot.lane.b32.xlu0 %v1844, 12
    %v2665 = vpop.permute.xlu0 %2664
    %2666 = vrot.lane.b32.xlu0 %v1845, 12
    %v2667 = vpop.permute.xlu0 %2666
    %2668 = vrot.lane.b32.xlu0 %v1846, 12
    %v2669 = vpop.permute.xlu0 %2668
    %2678 = vrot.lane.b32.xlu0 %v1936, 16
    %v2679 = vpop.permute.xlu0 %2678
    %2680 = vrot.lane.b32.xlu0 %v1937, 16
    %v2681 = vpop.permute.xlu0 %2680
    %2682 = vrot.lane.b32.xlu0 %v1938, 16
    %v2683 = vpop.permute.xlu0 %2682
    %2684 = vrot.lane.b32.xlu0 %v1939, 16
    %v2685 = vpop.permute.xlu0 %2684
    %2694 = vrot.lane.b32.xlu0 %v2029, 20
    %v2695 = vpop.permute.xlu0 %2694
    %2696 = vrot.lane.b32.xlu0 %v2030, 20
    %v2697 = vpop.permute.xlu0 %2696
    %2698 = vrot.lane.b32.xlu0 %v2031, 20
    %v2699 = vpop.permute.xlu0 %2698
    %2700 = vrot.lane.b32.xlu0 %v2032, 20
    %v2701 = vpop.permute.xlu0 %2700
    %2710 = vrot.lane.b32.xlu0 %v2122, 24
    %v2711 = vpop.permute.xlu0 %2710
    %2712 = vrot.lane.b32.xlu0 %v2123, 24
    %v2713 = vpop.permute.xlu0 %2712
    %2714 = vrot.lane.b32.xlu0 %v2124, 24
    %v2715 = vpop.permute.xlu0 %2714
    %2716 = vrot.lane.b32.xlu0 %v2125, 24
    %v2717 = vpop.permute.xlu0 %2716
    %2726 = vrot.lane.b32.xlu0 %v2215, 28
    %v2727 = vpop.permute.xlu0 %2726
    %2728 = vrot.lane.b32.xlu0 %v2216, 28
    %v2729 = vpop.permute.xlu0 %2728
    %2730 = vrot.lane.b32.xlu0 %v2217, 28
    %v2731 = vpop.permute.xlu0 %2730
    %2732 = vrot.lane.b32.xlu0 %v2218, 28
    %v2733 = vpop.permute.xlu0 %2732
    %2742 = vrot.lane.b32.xlu0 %v2308, 32
    %v2743 = vpop.permute.xlu0 %2742
    %2744 = vrot.lane.b32.xlu0 %v2309, 32
    %v2745 = vpop.permute.xlu0 %2744
    %2746 = vrot.lane.b32.xlu0 %v2310, 32
    %v2747 = vpop.permute.xlu0 %2746
    %2748 = vrot.lane.b32.xlu0 %v2311, 32
    %v2749 = vpop.permute.xlu0 %2748
    %v2754 = vsel %vm2552, %v1564, %v2631
    %v2755 = vsel %vm2552, %v1565, %v2633
    %v2756 = vsel %vm2552, %v1566, %v2635
    %v2757 = vsel %vm2552, %v1567, %v2637
    %v2758 = vsel %vm2557, %v2754, %v2647
    %v2759 = vsel %vm2557, %v2755, %v2649
    %v2760 = vsel %vm2557, %v2756, %v2651
    %v2761 = vsel %vm2557, %v2757, %v2653
    %v2762 = vsel %vm2562, %v2758, %v2663
    %v2763 = vsel %vm2562, %v2759, %v2665
    %v2764 = vsel %vm2562, %v2760, %v2667
    %v2765 = vsel %vm2562, %v2761, %v2669
    %v2766 = vsel %vm2567, %v2762, %v2679
    %v2767 = vsel %vm2567, %v2763, %v2681
    %v2768 = vsel %vm2567, %v2764, %v2683
    %v2769 = vsel %vm2567, %v2765, %v2685
    %v2770 = vsel %vm2572, %v2766, %v2695
    %v2771 = vsel %vm2572, %v2767, %v2697
    %v2772 = vsel %vm2572, %v2768, %v2699
    %v2773 = vsel %vm2572, %v2769, %v2701
    %v2774 = vsel %vm2577, %v2770, %v2711
    %v2775 = vsel %vm2577, %v2771, %v2713
    %v2776 = vsel %vm2577, %v2772, %v2715
    %v2777 = vsel %vm2577, %v2773, %v2717
    %v2778 = vsel %vm2582, %v2774, %v2727
    %v2779 = vsel %vm2582, %v2775, %v2729
    %v2780 = vsel %vm2582, %v2776, %v2731
    %v2781 = vsel %vm2582, %v2777, %v2733
    %v2782 = vsel %vm75, %v2778, %v2743
    %v2783 = vsel %vm75, %v2779, %v2745
    %v2784 = vsel %vm75, %v2780, %v2747
    %v2785 = vsel %vm75, %v2781, %v2749
    %2790 = vrot.lane.b32.xlu0 %v2782, 64
    %v2791 = vpop.permute.xlu0 %2790
    %2792 = vrot.lane.b32.xlu0 %v2783, 64
    %v2793 = vpop.permute.xlu0 %2792
    %2794 = vrot.lane.b32.xlu0 %v2784, 64
    %v2795 = vpop.permute.xlu0 %2794
    %2796 = vrot.lane.b32.xlu0 %v2785, 64
    %v2797 = vpop.permute.xlu0 %2796
    %vm2802 = vcmask 523264
    %v2803 = vsel %vm2802, %v2622, %v2791
    %v2804 = vsel %vm2802, %v2623, %v2793
    %v2805 = vsel %vm2802, %v2624, %v2795
    %v2806 = vsel %vm2802, %v2625, %v2797
    %v2807 = vld [vmem:[%s3] sm:$0xff]
    %v2808 = vld [vmem:[%s3 + $0x8] sm:$0xff]
    %v2809 = vld [vmem:[%s3 + $0x10] sm:$0xff]
    %v2810 = vld [vmem:[%s3 + $0x18] sm:$0xff]
    %v2811 = vld [vmem:[%s3 + $0x20] sm:$0xff]
    %v2812 = vld [vmem:[%s3 + $0x28] sm:$0xff]
    %v2813 = vld [vmem:[%s3 + $0x30] sm:$0xff]
    %v2814 = vld [vmem:[%s3 + $0x38] sm:$0xff]
    %v2815 = vld [vmem:[%s3 + $0x40] sm:$0xff]
    %v2816 = vld [vmem:[%s3 + $0x48] sm:$0xff]
    %v2817 = vld [vmem:[%s3 + $0x50] sm:$0xff]
    %v2818 = vld [vmem:[%s3 + $0x58] sm:$0xff]
    %v2819 = vld [vmem:[%s3 + $0x60] sm:$0xf]
    %v2820 = vld [vmem:[%s4] sm:$0x1]
    %v2822 = vlaneseq
    %v2823 = vshrl.u32 %v2822, 7
    %v2824 = vsub.s32 0, %v2823
    %v2825 = vrot.slane %v2820, %v2824
    %vm2827 = vcmask 818176
    %v2829 = vsel %vm2827, %v2803, 0
    %v2832 = vsel %vm2827, %v2804, 0
    %v2835 = vsel %vm2827, %v2805, 0
    %v2838 = vsel %vm2827, %v2806, 0
    %vm2840 = vcmask 1043456
    %v2842 = vsel %vm2840, %v2819, 0
    %2844 = vmatprep.subr.mxu0 0.0
    %2845 = vmatpush1.msra.mxu0 %v2807
    %2846 = vmatprep.subr.mxu0 0.0
    %2847 = vmatpush1.msra.mxu0 %v2808
    %2848 = vmatprep.subr.mxu0 0.0
    %2849 = vmatpush1.msra.mxu0 %v2809
    %2850 = vmatprep.subr.mxu0 0.0
    %2851 = vmatpush1.msra.mxu0 %v2810
    %2852 = vmatprep.subr.mxu0 0.0
    %2853 = vmatpush1.msra.mxu0 %v2811
    %2854 = vmatprep.subr.mxu0 0.0
    %2855 = vmatpush1.msra.mxu0 %v2812
    %2856 = vmatprep.subr.mxu0 0.0
    %2857 = vmatpush1.msra.mxu0 %v2813
    %2858 = vmatprep.subr.mxu0 0.0
    %2859 = vmatpush1.msra.mxu0 %v2814
    %2860 = vmatprep.subr.mxu0 0.0
    %2861 = vmatpush1.msra.mxu0 %v2815
    %2862 = vmatprep.subr.mxu0 0.0
    %2863 = vmatpush1.msra.mxu0 %v2816
    %2864 = vmatprep.subr.mxu0 0.0
    %2865 = vmatpush1.msra.mxu0 %v2817
    %2866 = vmatprep.subr.mxu0 0.0
    %2867 = vmatpush1.msra.mxu0 %v2818
    %2868 = vmatprep.subr.mxu0 0.0
    %2869 = vmatpush1.msra.mxu0 %v2842
    %2870 = vmatprep.subr.mxu0 0.0
    %2871 = vmatpush1.msra.mxu0 0.0
    %2872 = vmatprep.subr.mxu0 0.0
    %2873 = vmatpush1.msra.mxu0 0.0
    %2874 = vmatprep.subr.mxu0 0.0
    %2875 = vmatpush1.msra.mxu0 0.0
    %2876 = vmatprep.subr.mxu0 0.0
    %2877 = vmatpush1.msra.mxu0 0.0
    %2878 = vmatprep.subr.mxu0 0.0
    %2879 = vmatpush1.msra.mxu0 0.0
    %2880 = vmatprep.subr.mxu0 0.0
    %2881 = vmatpush1.msra.mxu0 0.0
    %2882 = vmatprep.subr.mxu0 0.0
    %2883 = vmatpush1.msra.mxu0 0.0
    %2884 = vmatprep.subr.mxu0 0.0
    %2885 = vmatpush1.msra.mxu0 0.0
    %2886 = vmatprep.subr.mxu0 0.0
    %2887 = vmatpush1.msra.mxu0 0.0
    %2888 = vmatprep.subr.mxu0 0.0
    %2889 = vmatpush1.msra.mxu0 0.0
    %2890 = vmatprep.subr.mxu0 0.0
    %2891 = vmatpush1.msra.mxu0 0.0
    %2892 = vmatprep.subr.mxu0 0.0
    %2893 = vmatpush1.msra.mxu0 0.0
    %2894 = vmatprep.subr.mxu0 0.0
    %2895 = vmatpush1.msra.mxu0 0.0
    %2896 = vmatprep.subr.mxu0 0.0
    %2897 = vmatpush1.msra.mxu0 0.0
    %2898 = vmatprep.subr.mxu0 0.0
    %2899 = vmatpush1.msra.mxu0 0.0
    %2900 = vmatprep.subr.mxu0 0.0
    %2901 = vmatpush1.msra.mxu0 0.0
    %2902 = vmatprep.subr.mxu0 0.0
    %2903 = vmatpush1.msra.mxu0 0.0
    %2904 = vmatprep.subr.mxu0 0.0
    %2905 = vmatpush1.msra.mxu0 0.0
    %2906 = vmatprep.subr.mxu0 0.0
    %2907 = vmatpush1.msra.mxu0 0.0
    %2908 = vmatprep.mubr.f32.mxu0 0.0
    %2909 = vmatmul.mubr.f32.gmra.mrb[0].mxu0 %v2829
    %v2910 = vpop.f32.mrb[0].mxu0
    %v2911 = vadd.f32 %v2825, %v2910
    %v2912 = vpop.f32.mrb[0].mxu0
    %2913 = vmatprep.mubr.f32.mxu0 0.0
    %2914 = vmatmul.mubr.f32.gmra.mrb[0].mxu0 %v2832
    %v2915 = vpop.f32.mrb[0].mxu0
    %v2916 = vadd.f32 %v2825, %v2915
    %v2917 = vpop.f32.mrb[0].mxu0
    %2918 = vmatprep.mubr.f32.mxu0 0.0
    %2919 = vmatmul.mubr.f32.gmra.mrb[0].mxu0 %v2835
    %v2920 = vpop.f32.mrb[0].mxu0
    %v2921 = vadd.f32 %v2825, %v2920
    %v2922 = vpop.f32.mrb[0].mxu0
    %2923 = vmatprep.mubr.f32.mxu0 0.0
    %2924 = vmatmul.mubr.f32.gmra.mrb[0].mxu0 %v2838
    %v2925 = vpop.f32.mrb[0].mxu0
    %v2926 = vadd.f32 %v2825, %v2925
    %v2927 = vpop.f32.mrb[0].mxu0
    %2928 = vdwg.mxu0
    %v2929 = vmax.f32 %v2911, 0.0
    %v2930 = vmax.f32 %v2916, 0.0
    %v2931 = vmax.f32 %v2921, 0.0
    %v2932 = vmax.f32 %v2926, 0.0
    %vm2933 = vcmask 125952
    %v2934 = vsel %vm2933, %v2929, -inf
    %v2935 = vrot.slane %v2934, 4
    %v2936 = vmax.f32 %v2934, %v2935
    %v2937 = vrot.slane %v2936, 2
    %v2938 = vmax.f32 %v2936, %v2937
    %v2939 = vrot.slane %v2938, 1
    %v2940 = vmax.f32 %v2938, %v2939
    %vm2941 = vcmask 130052
    %v2942 = vsel %vm2941, %v2929, -inf
    %v2943 = vrot.slane %v2942, 4
    %v2944 = vmax.f32 %v2942, %v2943
    %v2945 = vrot.slane %v2944, 2
    %v2946 = vmax.f32 %v2944, %v2945
    %v2947 = vrot.slane %v2946, 1
    %v2948 = vmax.f32 %v2946, %v2947
    %v2949 = vsel %vm2933, %v2930, -inf
    %v2950 = vrot.slane %v2949, 4
    %v2951 = vmax.f32 %v2949, %v2950
    %v2952 = vrot.slane %v2951, 2
    %v2953 = vmax.f32 %v2951, %v2952
    %v2954 = vrot.slane %v2953, 1
    %v2955 = vmax.f32 %v2953, %v2954
    %v2956 = vsel %vm2941, %v2930, -inf
    %v2957 = vrot.slane %v2956, 4
    %v2958 = vmax.f32 %v2956, %v2957
    %v2959 = vrot.slane %v2958, 2
    %v2960 = vmax.f32 %v2958, %v2959
    %v2961 = vrot.slane %v2960, 1
    %v2962 = vmax.f32 %v2960, %v2961
    %v2963 = vsel %vm2933, %v2931, -inf
    %v2964 = vrot.slane %v2963, 4
    %v2965 = vmax.f32 %v2963, %v2964
    %v2966 = vrot.slane %v2965, 2
    %v2967 = vmax.f32 %v2965, %v2966
    %v2968 = vrot.slane %v2967, 1
    %v2969 = vmax.f32 %v2967, %v2968
    %v2970 = vsel %vm2941, %v2931, -inf
    %v2971 = vrot.slane %v2970, 4
    %v2972 = vmax.f32 %v2970, %v2971
    %v2973 = vrot.slane %v2972, 2
    %v2974 = vmax.f32 %v2972, %v2973
    %v2975 = vrot.slane %v2974, 1
    %v2976 = vmax.f32 %v2974, %v2975
    %v2977 = vsel %vm2933, %v2932, -inf
    %v2978 = vrot.slane %v2977, 4
    %v2979 = vmax.f32 %v2977, %v2978
    %v2980 = vrot.slane %v2979, 2
    %v2981 = vmax.f32 %v2979, %v2980
    %v2982 = vrot.slane %v2981, 1
    %v2983 = vmax.f32 %v2981, %v2982
    %v2984 = vsel %vm2941, %v2932, -inf
    %v2985 = vrot.slane %v2984, 4
    %v2986 = vmax.f32 %v2984, %v2985
    %v2987 = vrot.slane %v2986, 2
    %v2988 = vmax.f32 %v2986, %v2987
    %v2989 = vrot.slane %v2988, 1
    %v2990 = vmax.f32 %v2988, %v2989
    %vm2991 = vcmask 1040384
    %v2992 = vsel %vm2991, %v2940, %v2948
    %vm2993 = vcmask 1041408
    %v2994 = vsel %vm2993, %v2992, %v2955
    %vm2995 = vcmask 1042432
    %v2996 = vsel %vm2995, %v2994, %v2962
    %v2997 = vsel %vm2840, %v2996, %v2969
    %vm2998 = vcmask 1044480
    %v2999 = vsel %vm2998, %v2997, %v2976
    %vm3000 = vcmask 1045504
    %v3001 = vsel %vm3000, %v2999, %v2983
    %vm3002 = vcmask 1046528
    %v3003 = vsel %vm3002, %v3001, %v2990
    %v3004 = vld [vmem:[%s2] sm:$0xff]
    %v3006 = vsel %vm2557, %v3004, 0
    %3008 = vmatprep.subr.mxu0 0.0
    %3009 = vmatpush1.msra.mxu0 %v3003
    %3010 = vmatprep.subr.mxu0 0.0
    %3011 = vmatpush1.msra.mxu0 0.0
    %3012 = vmatprep.subr.mxu0 0.0
    %3013 = vmatpush1.msra.mxu0 0.0
    %3014 = vmatprep.subr.mxu0 0.0
    %3015 = vmatpush1.msra.mxu0 0.0
    %3016 = vmatprep.subr.mxu0 0.0
    %3017 = vmatpush1.msra.mxu0 0.0
    %3018 = vmatprep.subr.mxu0 0.0
    %3019 = vmatpush1.msra.mxu0 0.0
    %3020 = vmatprep.subr.mxu0 0.0
    %3021 = vmatpush1.msra.mxu0 0.0
    %3022 = vmatprep.subr.mxu0 0.0
    %3023 = vmatpush1.msra.mxu0 0.0
    %3024 = vmatprep.subr.mxu0 0.0
    %3025 = vmatpush1.msra.mxu0 0.0
    %3026 = vmatprep.subr.mxu0 0.0
    %3027 = vmatpush1.msra.mxu0 0.0
    %3028 = vmatprep.subr.mxu0 0.0
    %3029 = vmatpush1.msra.mxu0 0.0
    %3030 = vmatprep.subr.mxu0 0.0
    %3031 = vmatpush1.msra.mxu0 0.0
    %3032 = vmatprep.subr.mxu0 0.0
    %3033 = vmatpush1.msra.mxu0 0.0
    %3034 = vmatprep.subr.mxu0 0.0
    %3035 = vmatpush1.msra.mxu0 0.0
    %3036 = vmatprep.subr.mxu0 0.0
    %3037 = vmatpush1.msra.mxu0 0.0
    %3038 = vmatprep.subr.mxu0 0.0
    %3039 = vmatpush1.msra.mxu0 0.0
    %3040 = vmatprep.subr.mxu0 0.0
    %3041 = vmatpush1.msra.mxu0 0.0
    %3042 = vmatprep.subr.mxu0 0.0
    %3043 = vmatpush1.msra.mxu0 0.0
    %3044 = vmatprep.subr.mxu0 0.0
    %3045 = vmatpush1.msra.mxu0 0.0
    %3046 = vmatprep.subr.mxu0 0.0
    %3047 = vmatpush1.msra.mxu0 0.0
    %3048 = vmatprep.subr.mxu0 0.0
    %3049 = vmatpush1.msra.mxu0 0.0
    %3050 = vmatprep.subr.mxu0 0.0
    %3051 = vmatpush1.msra.mxu0 0.0
    %3052 = vmatprep.subr.mxu0 0.0
    %3053 = vmatpush1.msra.mxu0 0.0
    %3054 = vmatprep.subr.mxu0 0.0
    %3055 = vmatpush1.msra.mxu0 0.0
    %3056 = vmatprep.subr.mxu0 0.0
    %3057 = vmatpush1.msra.mxu0 0.0
    %3058 = vmatprep.subr.mxu0 0.0
    %3059 = vmatpush1.msra.mxu0 0.0
    %3060 = vmatprep.subr.mxu0 0.0
    %3061 = vmatpush1.msra.mxu0 0.0
    %3062 = vmatprep.subr.mxu0 0.0
    %3063 = vmatpush1.msra.mxu0 0.0
    %3064 = vmatprep.subr.mxu0 0.0
    %3065 = vmatpush1.msra.mxu0 0.0
    %3066 = vmatprep.subr.mxu0 0.0
    %3067 = vmatpush1.msra.mxu0 0.0
    %3068 = vmatprep.subr.mxu0 0.0
    %3069 = vmatpush1.msra.mxu0 0.0
    %3070 = vmatprep.subr.mxu0 0.0
    %3071 = vmatpush1.msra.mxu0 0.0
    %3072 = vmatprep.mubr.f32.mxu0 0.0
    %3073 = vmatmul.mubr.f32.gmra.mrb[0].mxu0 %v3006
    %v3074 = vpop.f32.mrb[0].mxu0
    %v3075 = vadd.f32 0.0, %v3074
    %v3076 = vpop.f32.mrb[0].mxu0
    %3077 = vdwg.mxu0
    %3078 = vmatprep.subr.mxu0 0.0
    %3079 = vmatpush1.msra.mxu0 %v3075
    %3080 = vmatprep.subr.mxu0 0.0
    %3081 = vmatpush1.msra.mxu0 0.0
    %3082 = vmatprep.subr.mxu0 0.0
    %3083 = vmatpush1.msra.mxu0 0.0
    %3084 = vmatprep.subr.mxu0 0.0
    %3085 = vmatpush1.msra.mxu0 0.0
    %3086 = vmatprep.subr.mxu0 0.0
    %3087 = vmatpush1.msra.mxu0 0.0
    %3088 = vmatprep.subr.mxu0 0.0
    %3089 = vmatpush1.msra.mxu0 0.0
    %3090 = vmatprep.subr.mxu0 0.0
    %3091 = vmatpush1.msra.mxu0 0.0
    %3092 = vmatprep.subr.mxu0 0.0
    %3093 = vmatpush1.msra.mxu0 0.0
    %3094 = vmatprep.subr.mxu0 0.0
    %3095 = vmatpush1.msra.mxu0 0.0
    %3096 = vmatprep.subr.mxu0 0.0
    %3097 = vmatpush1.msra.mxu0 0.0
    %3098 = vmatprep.subr.mxu0 0.0
    %3099 = vmatpush1.msra.mxu0 0.0
    %3100 = vmatprep.subr.mxu0 0.0
    %3101 = vmatpush1.msra.mxu0 0.0
    %3102 = vmatprep.subr.mxu0 0.0
    %3103 = vmatpush1.msra.mxu0 0.0
    %3104 = vmatprep.subr.mxu0 0.0
    %3105 = vmatpush1.msra.mxu0 0.0
    %3106 = vmatprep.subr.mxu0 0.0
    %3107 = vmatpush1.msra.mxu0 0.0
    %3108 = vmatprep.subr.mxu0 0.0
    %3109 = vmatpush1.msra.mxu0 0.0
    %3110 = vmatprep.subr.mxu0 0.0
    %3111 = vmatpush1.msra.mxu0 0.0
    %3112 = vmatprep.subr.mxu0 0.0
    %3113 = vmatpush1.msra.mxu0 0.0
    %3114 = vmatprep.subr.mxu0 0.0
    %3115 = vmatpush1.msra.mxu0 0.0
    %3116 = vmatprep.subr.mxu0 0.0
    %3117 = vmatpush1.msra.mxu0 0.0
    %3118 = vmatprep.subr.mxu0 0.0
    %3119 = vmatpush1.msra.mxu0 0.0
    %3120 = vmatprep.subr.mxu0 0.0
    %3121 = vmatpush1.msra.mxu0 0.0
    %3122 = vmatprep.subr.mxu0 0.0
    %3123 = vmatpush1.msra.mxu0 0.0
    %3124 = vmatprep.subr.mxu0 0.0
    %3125 = vmatpush1.msra.mxu0 0.0
    %3126 = vmatprep.subr.mxu0 0.0
    %3127 = vmatpush1.msra.mxu0 0.0
    %3128 = vmatprep.subr.mxu0 0.0
    %3129 = vmatpush1.msra.mxu0 0.0
    %3130 = vmatprep.subr.mxu0 0.0
    %3131 = vmatpush1.msra.mxu0 0.0
    %3132 = vmatprep.subr.mxu0 0.0
    %3133 = vmatpush1.msra.mxu0 0.0
    %3134 = vmatprep.subr.mxu0 0.0
    %3135 = vmatpush1.msra.mxu0 0.0
    %3136 = vmatprep.subr.mxu0 0.0
    %3137 = vmatpush1.msra.mxu0 0.0
    %3138 = vmatprep.subr.mxu0 0.0
    %3139 = vmatpush1.msra.mxu0 0.0
    %3140 = vmatprep.subr.mxu0 0.0
    %3141 = vmatpush1.msra.mxu0 0.0
    %3142 = vmatprep.mubr.f32.mxu0 0.0
    %3143 = vmatmul.mubr.f32.gmra.mrb[0].mxu0 %v3006
    %v3144 = vpop.f32.mrb[0].mxu0
    %v3145 = vadd.f32 0.0, %v3144
    %v3146 = vpop.f32.mrb[0].mxu0
    %3147 = vdwg.mxu0
    %v3148 = vmul.f32 %v3145, 2.0
    %v3149 = vsub.f32 %v3148, %v3003
    %3150 = vmatprep.subr.mxu0 0.0
    %3151 = vmatpush1.msra.mxu0 %v3149
    %3152 = vmatprep.subr.mxu0 0.0
    %3153 = vmatpush1.msra.mxu0 0.0
    %3154 = vmatprep.subr.mxu0 0.0
    %3155 = vmatpush1.msra.mxu0 0.0
    %3156 = vmatprep.subr.mxu0 0.0
    %3157 = vmatpush1.msra.mxu0 0.0
    %3158 = vmatprep.subr.mxu0 0.0
    %3159 = vmatpush1.msra.mxu0 0.0
    %3160 = vmatprep.subr.mxu0 0.0
    %3161 = vmatpush1.msra.mxu0 0.0
    %3162 = vmatprep.subr.mxu0 0.0
    %3163 = vmatpush1.msra.mxu0 0.0
    %3164 = vmatprep.subr.mxu0 0.0
    %3165 = vmatpush1.msra.mxu0 0.0
    %3166 = vmatprep.subr.mxu0 0.0
    %3167 = vmatpush1.msra.mxu0 0.0
    %3168 = vmatprep.subr.mxu0 0.0
    %3169 = vmatpush1.msra.mxu0 0.0
    %3170 = vmatprep.subr.mxu0 0.0
    %3171 = vmatpush1.msra.mxu0 0.0
    %3172 = vmatprep.subr.mxu0 0.0
    %3173 = vmatpush1.msra.mxu0 0.0
    %3174 = vmatprep.subr.mxu0 0.0
    %3175 = vmatpush1.msra.mxu0 0.0
    %3176 = vmatprep.subr.mxu0 0.0
    %3177 = vmatpush1.msra.mxu0 0.0
    %3178 = vmatprep.subr.mxu0 0.0
    %3179 = vmatpush1.msra.mxu0 0.0
    %3180 = vmatprep.subr.mxu0 0.0
    %3181 = vmatpush1.msra.mxu0 0.0
    %3182 = vmatprep.subr.mxu0 0.0
    %3183 = vmatpush1.msra.mxu0 0.0
    %3184 = vmatprep.subr.mxu0 0.0
    %3185 = vmatpush1.msra.mxu0 0.0
    %3186 = vmatprep.subr.mxu0 0.0
    %3187 = vmatpush1.msra.mxu0 0.0
    %3188 = vmatprep.subr.mxu0 0.0
    %3189 = vmatpush1.msra.mxu0 0.0
    %3190 = vmatprep.subr.mxu0 0.0
    %3191 = vmatpush1.msra.mxu0 0.0
    %3192 = vmatprep.subr.mxu0 0.0
    %3193 = vmatpush1.msra.mxu0 0.0
    %3194 = vmatprep.subr.mxu0 0.0
    %3195 = vmatpush1.msra.mxu0 0.0
    %3196 = vmatprep.subr.mxu0 0.0
    %3197 = vmatpush1.msra.mxu0 0.0
    %3198 = vmatprep.subr.mxu0 0.0
    %3199 = vmatpush1.msra.mxu0 0.0
    %3200 = vmatprep.subr.mxu0 0.0
    %3201 = vmatpush1.msra.mxu0 0.0
    %3202 = vmatprep.subr.mxu0 0.0
    %3203 = vmatpush1.msra.mxu0 0.0
    %3204 = vmatprep.subr.mxu0 0.0
    %3205 = vmatpush1.msra.mxu0 0.0
    %3206 = vmatprep.subr.mxu0 0.0
    %3207 = vmatpush1.msra.mxu0 0.0
    %3208 = vmatprep.subr.mxu0 0.0
    %3209 = vmatpush1.msra.mxu0 0.0
    %3210 = vmatprep.subr.mxu0 0.0
    %3211 = vmatpush1.msra.mxu0 0.0
    %3212 = vmatprep.subr.mxu0 0.0
    %3213 = vmatpush1.msra.mxu0 0.0
    %3214 = vmatprep.mubr.f32.mxu0 0.0
    %3215 = vmatmul.mubr.f32.gmra.mrb[0].mxu0 %v3006
    %v3216 = vpop.f32.mrb[0].mxu0
    %v3217 = vadd.f32 0.0, %v3216
    %v3218 = vpop.f32.mrb[0].mxu0
    %3219 = vdwg.mxu0
    %v3220 = vmul.f32 %v3217, 2.0
    %v3221 = vsub.f32 %v3220, %v3075
    %3222 = vmatprep.subr.mxu0 0.0
    %3223 = vmatpush1.msra.mxu0 %v3221
    %3224 = vmatprep.subr.mxu0 0.0
    %3225 = vmatpush1.msra.mxu0 0.0
    %3226 = vmatprep.subr.mxu0 0.0
    %3227 = vmatpush1.msra.mxu0 0.0
    %3228 = vmatprep.subr.mxu0 0.0
    %3229 = vmatpush1.msra.mxu0 0.0
    %3230 = vmatprep.subr.mxu0 0.0
    %3231 = vmatpush1.msra.mxu0 0.0
    %3232 = vmatprep.subr.mxu0 0.0
    %3233 = vmatpush1.msra.mxu0 0.0
    %3234 = vmatprep.subr.mxu0 0.0
    %3235 = vmatpush1.msra.mxu0 0.0
    %3236 = vmatprep.subr.mxu0 0.0
    %3237 = vmatpush1.msra.mxu0 0.0
    %3238 = vmatprep.subr.mxu0 0.0
    %3239 = vmatpush1.msra.mxu0 0.0
    %3240 = vmatprep.subr.mxu0 0.0
    %3241 = vmatpush1.msra.mxu0 0.0
    %3242 = vmatprep.subr.mxu0 0.0
    %3243 = vmatpush1.msra.mxu0 0.0
    %3244 = vmatprep.subr.mxu0 0.0
    %3245 = vmatpush1.msra.mxu0 0.0
    %3246 = vmatprep.subr.mxu0 0.0
    %3247 = vmatpush1.msra.mxu0 0.0
    %3248 = vmatprep.subr.mxu0 0.0
    %3249 = vmatpush1.msra.mxu0 0.0
    %3250 = vmatprep.subr.mxu0 0.0
    %3251 = vmatpush1.msra.mxu0 0.0
    %3252 = vmatprep.subr.mxu0 0.0
    %3253 = vmatpush1.msra.mxu0 0.0
    %3254 = vmatprep.subr.mxu0 0.0
    %3255 = vmatpush1.msra.mxu0 0.0
    %3256 = vmatprep.subr.mxu0 0.0
    %3257 = vmatpush1.msra.mxu0 0.0
    %3258 = vmatprep.subr.mxu0 0.0
    %3259 = vmatpush1.msra.mxu0 0.0
    %3260 = vmatprep.subr.mxu0 0.0
    %3261 = vmatpush1.msra.mxu0 0.0
    %3262 = vmatprep.subr.mxu0 0.0
    %3263 = vmatpush1.msra.mxu0 0.0
    %3264 = vmatprep.subr.mxu0 0.0
    %3265 = vmatpush1.msra.mxu0 0.0
    %3266 = vmatprep.subr.mxu0 0.0
    %3267 = vmatpush1.msra.mxu0 0.0
    %3268 = vmatprep.subr.mxu0 0.0
    %3269 = vmatpush1.msra.mxu0 0.0
    %3270 = vmatprep.subr.mxu0 0.0
    %3271 = vmatpush1.msra.mxu0 0.0
    %3272 = vmatprep.subr.mxu0 0.0
    %3273 = vmatpush1.msra.mxu0 0.0
    %3274 = vmatprep.subr.mxu0 0.0
    %3275 = vmatpush1.msra.mxu0 0.0
    %3276 = vmatprep.subr.mxu0 0.0
    %3277 = vmatpush1.msra.mxu0 0.0
    %3278 = vmatprep.subr.mxu0 0.0
    %3279 = vmatpush1.msra.mxu0 0.0
    %3280 = vmatprep.subr.mxu0 0.0
    %3281 = vmatpush1.msra.mxu0 0.0
    %3282 = vmatprep.subr.mxu0 0.0
    %3283 = vmatpush1.msra.mxu0 0.0
    %3284 = vmatprep.subr.mxu0 0.0
    %3285 = vmatpush1.msra.mxu0 0.0
    %3286 = vmatprep.mubr.f32.mxu0 0.0
    %3287 = vmatmul.mubr.f32.gmra.mrb[0].mxu0 %v3006
    %v3288 = vpop.f32.mrb[0].mxu0
    %v3289 = vadd.f32 0.0, %v3288
    %v3290 = vpop.f32.mrb[0].mxu0
    %3291 = vdwg.mxu0
    %v3292 = vmul.f32 %v3289, 2.0
    %v3293 = vsub.f32 %v3292, %v3149
    %3294 = vmatprep.subr.mxu0 0.0
    %3295 = vmatpush1.msra.mxu0 %v3293
    %3296 = vmatprep.subr.mxu0 0.0
    %3297 = vmatpush1.msra.mxu0 0.0
    %3298 = vmatprep.subr.mxu0 0.0
    %3299 = vmatpush1.msra.mxu0 0.0
    %3300 = vmatprep.subr.mxu0 0.0
    %3301 = vmatpush1.msra.mxu0 0.0
    %3302 = vmatprep.subr.mxu0 0.0
    %3303 = vmatpush1.msra.mxu0 0.0
    %3304 = vmatprep.subr.mxu0 0.0
    %3305 = vmatpush1.msra.mxu0 0.0
    %3306 = vmatprep.subr.mxu0 0.0
    %3307 = vmatpush1.msra.mxu0 0.0
    %3308 = vmatprep.subr.mxu0 0.0
    %3309 = vmatpush1.msra.mxu0 0.0
    %3310 = vmatprep.subr.mxu0 0.0
    %3311 = vmatpush1.msra.mxu0 0.0
    %3312 = vmatprep.subr.mxu0 0.0
    %3313 = vmatpush1.msra.mxu0 0.0
    %3314 = vmatprep.subr.mxu0 0.0
    %3315 = vmatpush1.msra.mxu0 0.0
    %3316 = vmatprep.subr.mxu0 0.0
    %3317 = vmatpush1.msra.mxu0 0.0
    %3318 = vmatprep.subr.mxu0 0.0
    %3319 = vmatpush1.msra.mxu0 0.0
    %3320 = vmatprep.subr.mxu0 0.0
    %3321 = vmatpush1.msra.mxu0 0.0
    %3322 = vmatprep.subr.mxu0 0.0
    %3323 = vmatpush1.msra.mxu0 0.0
    %3324 = vmatprep.subr.mxu0 0.0
    %3325 = vmatpush1.msra.mxu0 0.0
    %3326 = vmatprep.subr.mxu0 0.0
    %3327 = vmatpush1.msra.mxu0 0.0
    %3328 = vmatprep.subr.mxu0 0.0
    %3329 = vmatpush1.msra.mxu0 0.0
    %3330 = vmatprep.subr.mxu0 0.0
    %3331 = vmatpush1.msra.mxu0 0.0
    %3332 = vmatprep.subr.mxu0 0.0
    %3333 = vmatpush1.msra.mxu0 0.0
    %3334 = vmatprep.subr.mxu0 0.0
    %3335 = vmatpush1.msra.mxu0 0.0
    %3336 = vmatprep.subr.mxu0 0.0
    %3337 = vmatpush1.msra.mxu0 0.0
    %3338 = vmatprep.subr.mxu0 0.0
    %3339 = vmatpush1.msra.mxu0 0.0
    %3340 = vmatprep.subr.mxu0 0.0
    %3341 = vmatpush1.msra.mxu0 0.0
    %3342 = vmatprep.subr.mxu0 0.0
    %3343 = vmatpush1.msra.mxu0 0.0
    %3344 = vmatprep.subr.mxu0 0.0
    %3345 = vmatpush1.msra.mxu0 0.0
    %3346 = vmatprep.subr.mxu0 0.0
    %3347 = vmatpush1.msra.mxu0 0.0
    %3348 = vmatprep.subr.mxu0 0.0
    %3349 = vmatpush1.msra.mxu0 0.0
    %3350 = vmatprep.subr.mxu0 0.0
    %3351 = vmatpush1.msra.mxu0 0.0
    %3352 = vmatprep.subr.mxu0 0.0
    %3353 = vmatpush1.msra.mxu0 0.0
    %3354 = vmatprep.subr.mxu0 0.0
    %3355 = vmatpush1.msra.mxu0 0.0
    %3356 = vmatprep.subr.mxu0 0.0
    %3357 = vmatpush1.msra.mxu0 0.0
    %3358 = vmatprep.mubr.f32.mxu0 0.0
    %3359 = vmatmul.mubr.f32.gmra.mrb[0].mxu0 %v3006
    %v3360 = vpop.f32.mrb[0].mxu0
    %v3361 = vadd.f32 0.0, %v3360
    %v3362 = vpop.f32.mrb[0].mxu0
    %3363 = vdwg.mxu0
    %v3364 = vmul.f32 %v3361, 2.0
    %v3365 = vsub.f32 %v3364, %v3221
    %3366 = vmatprep.subr.mxu0 0.0
    %3367 = vmatpush1.msra.mxu0 %v3365
    %3368 = vmatprep.subr.mxu0 0.0
    %3369 = vmatpush1.msra.mxu0 0.0
    %3370 = vmatprep.subr.mxu0 0.0
    %3371 = vmatpush1.msra.mxu0 0.0
    %3372 = vmatprep.subr.mxu0 0.0
    %3373 = vmatpush1.msra.mxu0 0.0
    %3374 = vmatprep.subr.mxu0 0.0
    %3375 = vmatpush1.msra.mxu0 0.0
    %3376 = vmatprep.subr.mxu0 0.0
    %3377 = vmatpush1.msra.mxu0 0.0
    %3378 = vmatprep.subr.mxu0 0.0
    %3379 = vmatpush1.msra.mxu0 0.0
    %3380 = vmatprep.subr.mxu0 0.0
    %3381 = vmatpush1.msra.mxu0 0.0
    %3382 = vmatprep.subr.mxu0 0.0
    %3383 = vmatpush1.msra.mxu0 0.0
    %3384 = vmatprep.subr.mxu0 0.0
    %3385 = vmatpush1.msra.mxu0 0.0
    %3386 = vmatprep.subr.mxu0 0.0
    %3387 = vmatpush1.msra.mxu0 0.0
    %3388 = vmatprep.subr.mxu0 0.0
    %3389 = vmatpush1.msra.mxu0 0.0
    %3390 = vmatprep.subr.mxu0 0.0
    %3391 = vmatpush1.msra.mxu0 0.0
    %3392 = vmatprep.subr.mxu0 0.0
    %3393 = vmatpush1.msra.mxu0 0.0
    %3394 = vmatprep.subr.mxu0 0.0
    %3395 = vmatpush1.msra.mxu0 0.0
    %3396 = vmatprep.subr.mxu0 0.0
    %3397 = vmatpush1.msra.mxu0 0.0
    %3398 = vmatprep.subr.mxu0 0.0
    %3399 = vmatpush1.msra.mxu0 0.0
    %3400 = vmatprep.subr.mxu0 0.0
    %3401 = vmatpush1.msra.mxu0 0.0
    %3402 = vmatprep.subr.mxu0 0.0
    %3403 = vmatpush1.msra.mxu0 0.0
    %3404 = vmatprep.subr.mxu0 0.0
    %3405 = vmatpush1.msra.mxu0 0.0
    %3406 = vmatprep.subr.mxu0 0.0
    %3407 = vmatpush1.msra.mxu0 0.0
    %3408 = vmatprep.subr.mxu0 0.0
    %3409 = vmatpush1.msra.mxu0 0.0
    %3410 = vmatprep.subr.mxu0 0.0
    %3411 = vmatpush1.msra.mxu0 0.0
    %3412 = vmatprep.subr.mxu0 0.0
    %3413 = vmatpush1.msra.mxu0 0.0
    %3414 = vmatprep.subr.mxu0 0.0
    %3415 = vmatpush1.msra.mxu0 0.0
    %3416 = vmatprep.subr.mxu0 0.0
    %3417 = vmatpush1.msra.mxu0 0.0
    %3418 = vmatprep.subr.mxu0 0.0
    %3419 = vmatpush1.msra.mxu0 0.0
    %3420 = vmatprep.subr.mxu0 0.0
    %3421 = vmatpush1.msra.mxu0 0.0
    %3422 = vmatprep.subr.mxu0 0.0
    %3423 = vmatpush1.msra.mxu0 0.0
    %3424 = vmatprep.subr.mxu0 0.0
    %3425 = vmatpush1.msra.mxu0 0.0
    %3426 = vmatprep.subr.mxu0 0.0
    %3427 = vmatpush1.msra.mxu0 0.0
    %3428 = vmatprep.subr.mxu0 0.0
    %3429 = vmatpush1.msra.mxu0 0.0
    %3430 = vmatprep.mubr.f32.mxu0 0.0
    %3431 = vmatmul.mubr.f32.gmra.mrb[0].mxu0 %v3006
    %v3432 = vpop.f32.mrb[0].mxu0
    %v3433 = vadd.f32 0.0, %v3432
    %v3434 = vpop.f32.mrb[0].mxu0
    %3435 = vdwg.mxu0
    %v3436 = vmul.f32 %v3433, 2.0
    %v3437 = vsub.f32 %v3436, %v3293
    %3438 = vmatprep.subr.mxu0 0.0
    %3439 = vmatpush1.msra.mxu0 %v3437
    %3440 = vmatprep.subr.mxu0 0.0
    %3441 = vmatpush1.msra.mxu0 0.0
    %3442 = vmatprep.subr.mxu0 0.0
    %3443 = vmatpush1.msra.mxu0 0.0
    %3444 = vmatprep.subr.mxu0 0.0
    %3445 = vmatpush1.msra.mxu0 0.0
    %3446 = vmatprep.subr.mxu0 0.0
    %3447 = vmatpush1.msra.mxu0 0.0
    %3448 = vmatprep.subr.mxu0 0.0
    %3449 = vmatpush1.msra.mxu0 0.0
    %3450 = vmatprep.subr.mxu0 0.0
    %3451 = vmatpush1.msra.mxu0 0.0
    %3452 = vmatprep.subr.mxu0 0.0
    %3453 = vmatpush1.msra.mxu0 0.0
    %3454 = vmatprep.subr.mxu0 0.0
    %3455 = vmatpush1.msra.mxu0 0.0
    %3456 = vmatprep.subr.mxu0 0.0
    %3457 = vmatpush1.msra.mxu0 0.0
    %3458 = vmatprep.subr.mxu0 0.0
    %3459 = vmatpush1.msra.mxu0 0.0
    %3460 = vmatprep.subr.mxu0 0.0
    %3461 = vmatpush1.msra.mxu0 0.0
    %3462 = vmatprep.subr.mxu0 0.0
    %3463 = vmatpush1.msra.mxu0 0.0
    %3464 = vmatprep.subr.mxu0 0.0
    %3465 = vmatpush1.msra.mxu0 0.0
    %3466 = vmatprep.subr.mxu0 0.0
    %3467 = vmatpush1.msra.mxu0 0.0
    %3468 = vmatprep.subr.mxu0 0.0
    %3469 = vmatpush1.msra.mxu0 0.0
    %3470 = vmatprep.subr.mxu0 0.0
    %3471 = vmatpush1.msra.mxu0 0.0
    %3472 = vmatprep.subr.mxu0 0.0
    %3473 = vmatpush1.msra.mxu0 0.0
    %3474 = vmatprep.subr.mxu0 0.0
    %3475 = vmatpush1.msra.mxu0 0.0
    %3476 = vmatprep.subr.mxu0 0.0
    %3477 = vmatpush1.msra.mxu0 0.0
    %3478 = vmatprep.subr.mxu0 0.0
    %3479 = vmatpush1.msra.mxu0 0.0
    %3480 = vmatprep.subr.mxu0 0.0
    %3481 = vmatpush1.msra.mxu0 0.0
    %3482 = vmatprep.subr.mxu0 0.0
    %3483 = vmatpush1.msra.mxu0 0.0
    %3484 = vmatprep.subr.mxu0 0.0
    %3485 = vmatpush1.msra.mxu0 0.0
    %3486 = vmatprep.subr.mxu0 0.0
    %3487 = vmatpush1.msra.mxu0 0.0
    %3488 = vmatprep.subr.mxu0 0.0
    %3489 = vmatpush1.msra.mxu0 0.0
    %3490 = vmatprep.subr.mxu0 0.0
    %3491 = vmatpush1.msra.mxu0 0.0
    %3492 = vmatprep.subr.mxu0 0.0
    %3493 = vmatpush1.msra.mxu0 0.0
    %3494 = vmatprep.subr.mxu0 0.0
    %3495 = vmatpush1.msra.mxu0 0.0
    %3496 = vmatprep.subr.mxu0 0.0
    %3497 = vmatpush1.msra.mxu0 0.0
    %3498 = vmatprep.subr.mxu0 0.0
    %3499 = vmatpush1.msra.mxu0 0.0
    %3500 = vmatprep.subr.mxu0 0.0
    %3501 = vmatpush1.msra.mxu0 0.0
    %3502 = vmatprep.mubr.f32.mxu0 0.0
    %3503 = vmatmul.mubr.f32.gmra.mrb[0].mxu0 %v3006
    %v3504 = vpop.f32.mrb[0].mxu0
    %v3505 = vadd.f32 0.0, %v3504
    %v3506 = vpop.f32.mrb[0].mxu0
    %3507 = vdwg.mxu0
    %v3508 = vmul.f32 %v3505, 2.0
    %v3509 = vsub.f32 %v3508, %v3365
    %3510 = vmatprep.subr.mxu0 0.0
    %3511 = vmatpush1.msra.mxu0 %v3509
    %3512 = vmatprep.subr.mxu0 0.0
    %3513 = vmatpush1.msra.mxu0 0.0
    %3514 = vmatprep.subr.mxu0 0.0
    %3515 = vmatpush1.msra.mxu0 0.0
    %3516 = vmatprep.subr.mxu0 0.0
    %3517 = vmatpush1.msra.mxu0 0.0
    %3518 = vmatprep.subr.mxu0 0.0
    %3519 = vmatpush1.msra.mxu0 0.0
    %3520 = vmatprep.subr.mxu0 0.0
    %3521 = vmatpush1.msra.mxu0 0.0
    %3522 = vmatprep.subr.mxu0 0.0
    %3523 = vmatpush1.msra.mxu0 0.0
    %3524 = vmatprep.subr.mxu0 0.0
    %3525 = vmatpush1.msra.mxu0 0.0
    %3526 = vmatprep.subr.mxu0 0.0
    %3527 = vmatpush1.msra.mxu0 0.0
    %3528 = vmatprep.subr.mxu0 0.0
    %3529 = vmatpush1.msra.mxu0 0.0
    %3530 = vmatprep.subr.mxu0 0.0
    %3531 = vmatpush1.msra.mxu0 0.0
    %3532 = vmatprep.subr.mxu0 0.0
    %3533 = vmatpush1.msra.mxu0 0.0
    %3534 = vmatprep.subr.mxu0 0.0
    %3535 = vmatpush1.msra.mxu0 0.0
    %3536 = vmatprep.subr.mxu0 0.0
    %3537 = vmatpush1.msra.mxu0 0.0
    %3538 = vmatprep.subr.mxu0 0.0
    %3539 = vmatpush1.msra.mxu0 0.0
    %3540 = vmatprep.subr.mxu0 0.0
    %3541 = vmatpush1.msra.mxu0 0.0
    %3542 = vmatprep.subr.mxu0 0.0
    %3543 = vmatpush1.msra.mxu0 0.0
    %3544 = vmatprep.subr.mxu0 0.0
    %3545 = vmatpush1.msra.mxu0 0.0
    %3546 = vmatprep.subr.mxu0 0.0
    %3547 = vmatpush1.msra.mxu0 0.0
    %3548 = vmatprep.subr.mxu0 0.0
    %3549 = vmatpush1.msra.mxu0 0.0
    %3550 = vmatprep.subr.mxu0 0.0
    %3551 = vmatpush1.msra.mxu0 0.0
    %3552 = vmatprep.subr.mxu0 0.0
    %3553 = vmatpush1.msra.mxu0 0.0
    %3554 = vmatprep.subr.mxu0 0.0
    %3555 = vmatpush1.msra.mxu0 0.0
    %3556 = vmatprep.subr.mxu0 0.0
    %3557 = vmatpush1.msra.mxu0 0.0
    %3558 = vmatprep.subr.mxu0 0.0
    %3559 = vmatpush1.msra.mxu0 0.0
    %3560 = vmatprep.subr.mxu0 0.0
    %3561 = vmatpush1.msra.mxu0 0.0
    %3562 = vmatprep.subr.mxu0 0.0
    %3563 = vmatpush1.msra.mxu0 0.0
    %3564 = vmatprep.subr.mxu0 0.0
    %3565 = vmatpush1.msra.mxu0 0.0
    %3566 = vmatprep.subr.mxu0 0.0
    %3567 = vmatpush1.msra.mxu0 0.0
    %3568 = vmatprep.subr.mxu0 0.0
    %3569 = vmatpush1.msra.mxu0 0.0
    %3570 = vmatprep.subr.mxu0 0.0
    %3571 = vmatpush1.msra.mxu0 0.0
    %3572 = vmatprep.subr.mxu0 0.0
    %3573 = vmatpush1.msra.mxu0 0.0
    %3574 = vmatprep.mubr.f32.mxu0 0.0
    %3575 = vmatmul.mubr.f32.gmra.mrb[0].mxu0 %v3006
    %v3576 = vpop.f32.mrb[0].mxu0
    %v3577 = vadd.f32 0.0, %v3576
    %v3578 = vpop.f32.mrb[0].mxu0
    %3579 = vdwg.mxu0
    %v3580 = vmul.f32 %v3577, 2.0
    %v3581 = vsub.f32 %v3580, %v3437
    %3582 = vmatprep.subr.mxu0 0.0
    %3583 = vmatpush1.msra.mxu0 %v3581
    %3584 = vmatprep.subr.mxu0 0.0
    %3585 = vmatpush1.msra.mxu0 0.0
    %3586 = vmatprep.subr.mxu0 0.0
    %3587 = vmatpush1.msra.mxu0 0.0
    %3588 = vmatprep.subr.mxu0 0.0
    %3589 = vmatpush1.msra.mxu0 0.0
    %3590 = vmatprep.subr.mxu0 0.0
    %3591 = vmatpush1.msra.mxu0 0.0
    %3592 = vmatprep.subr.mxu0 0.0
    %3593 = vmatpush1.msra.mxu0 0.0
    %3594 = vmatprep.subr.mxu0 0.0
    %3595 = vmatpush1.msra.mxu0 0.0
    %3596 = vmatprep.subr.mxu0 0.0
    %3597 = vmatpush1.msra.mxu0 0.0
    %3598 = vmatprep.subr.mxu0 0.0
    %3599 = vmatpush1.msra.mxu0 0.0
    %3600 = vmatprep.subr.mxu0 0.0
    %3601 = vmatpush1.msra.mxu0 0.0
    %3602 = vmatprep.subr.mxu0 0.0
    %3603 = vmatpush1.msra.mxu0 0.0
    %3604 = vmatprep.subr.mxu0 0.0
    %3605 = vmatpush1.msra.mxu0 0.0
    %3606 = vmatprep.subr.mxu0 0.0
    %3607 = vmatpush1.msra.mxu0 0.0
    %3608 = vmatprep.subr.mxu0 0.0
    %3609 = vmatpush1.msra.mxu0 0.0
    %3610 = vmatprep.subr.mxu0 0.0
    %3611 = vmatpush1.msra.mxu0 0.0
    %3612 = vmatprep.subr.mxu0 0.0
    %3613 = vmatpush1.msra.mxu0 0.0
    %3614 = vmatprep.subr.mxu0 0.0
    %3615 = vmatpush1.msra.mxu0 0.0
    %3616 = vmatprep.subr.mxu0 0.0
    %3617 = vmatpush1.msra.mxu0 0.0
    %3618 = vmatprep.subr.mxu0 0.0
    %3619 = vmatpush1.msra.mxu0 0.0
    %3620 = vmatprep.subr.mxu0 0.0
    %3621 = vmatpush1.msra.mxu0 0.0
    %3622 = vmatprep.subr.mxu0 0.0
    %3623 = vmatpush1.msra.mxu0 0.0
    %3624 = vmatprep.subr.mxu0 0.0
    %3625 = vmatpush1.msra.mxu0 0.0
    %3626 = vmatprep.subr.mxu0 0.0
    %3627 = vmatpush1.msra.mxu0 0.0
    %3628 = vmatprep.subr.mxu0 0.0
    %3629 = vmatpush1.msra.mxu0 0.0
    %3630 = vmatprep.subr.mxu0 0.0
    %3631 = vmatpush1.msra.mxu0 0.0
    %3632 = vmatprep.subr.mxu0 0.0
    %3633 = vmatpush1.msra.mxu0 0.0
    %3634 = vmatprep.subr.mxu0 0.0
    %3635 = vmatpush1.msra.mxu0 0.0
    %3636 = vmatprep.subr.mxu0 0.0
    %3637 = vmatpush1.msra.mxu0 0.0
    %3638 = vmatprep.subr.mxu0 0.0
    %3639 = vmatpush1.msra.mxu0 0.0
    %3640 = vmatprep.subr.mxu0 0.0
    %3641 = vmatpush1.msra.mxu0 0.0
    %3642 = vmatprep.subr.mxu0 0.0
    %3643 = vmatpush1.msra.mxu0 0.0
    %3644 = vmatprep.subr.mxu0 0.0
    %3645 = vmatpush1.msra.mxu0 0.0
    %3646 = vmatprep.mubr.f32.mxu0 0.0
    %3647 = vmatmul.mubr.f32.gmra.mrb[0].mxu0 %v3006
    %v3648 = vpop.f32.mrb[0].mxu0
    %v3649 = vadd.f32 0.0, %v3648
    %v3650 = vpop.f32.mrb[0].mxu0
    %3651 = vdwg.mxu0
    %v3652 = vmul.f32 %v3649, 2.0
    %v3653 = vsub.f32 %v3652, %v3509
    %3654 = vmatprep.subr.mxu0 0.0
    %3655 = vmatpush1.msra.mxu0 %v3653
    %3656 = vmatprep.subr.mxu0 0.0
    %3657 = vmatpush1.msra.mxu0 0.0
    %3658 = vmatprep.subr.mxu0 0.0
    %3659 = vmatpush1.msra.mxu0 0.0
    %3660 = vmatprep.subr.mxu0 0.0
    %3661 = vmatpush1.msra.mxu0 0.0
    %3662 = vmatprep.subr.mxu0 0.0
    %3663 = vmatpush1.msra.mxu0 0.0
    %3664 = vmatprep.subr.mxu0 0.0
    %3665 = vmatpush1.msra.mxu0 0.0
    %3666 = vmatprep.subr.mxu0 0.0
    %3667 = vmatpush1.msra.mxu0 0.0
    %3668 = vmatprep.subr.mxu0 0.0
    %3669 = vmatpush1.msra.mxu0 0.0
    %3670 = vmatprep.subr.mxu0 0.0
    %3671 = vmatpush1.msra.mxu0 0.0
    %3672 = vmatprep.subr.mxu0 0.0
    %3673 = vmatpush1.msra.mxu0 0.0
    %3674 = vmatprep.subr.mxu0 0.0
    %3675 = vmatpush1.msra.mxu0 0.0
    %3676 = vmatprep.subr.mxu0 0.0
    %3677 = vmatpush1.msra.mxu0 0.0
    %3678 = vmatprep.subr.mxu0 0.0
    %3679 = vmatpush1.msra.mxu0 0.0
    %3680 = vmatprep.subr.mxu0 0.0
    %3681 = vmatpush1.msra.mxu0 0.0
    %3682 = vmatprep.subr.mxu0 0.0
    %3683 = vmatpush1.msra.mxu0 0.0
    %3684 = vmatprep.subr.mxu0 0.0
    %3685 = vmatpush1.msra.mxu0 0.0
    %3686 = vmatprep.subr.mxu0 0.0
    %3687 = vmatpush1.msra.mxu0 0.0
    %3688 = vmatprep.subr.mxu0 0.0
    %3689 = vmatpush1.msra.mxu0 0.0
    %3690 = vmatprep.subr.mxu0 0.0
    %3691 = vmatpush1.msra.mxu0 0.0
    %3692 = vmatprep.subr.mxu0 0.0
    %3693 = vmatpush1.msra.mxu0 0.0
    %3694 = vmatprep.subr.mxu0 0.0
    %3695 = vmatpush1.msra.mxu0 0.0
    %3696 = vmatprep.subr.mxu0 0.0
    %3697 = vmatpush1.msra.mxu0 0.0
    %3698 = vmatprep.subr.mxu0 0.0
    %3699 = vmatpush1.msra.mxu0 0.0
    %3700 = vmatprep.subr.mxu0 0.0
    %3701 = vmatpush1.msra.mxu0 0.0
    %3702 = vmatprep.subr.mxu0 0.0
    %3703 = vmatpush1.msra.mxu0 0.0
    %3704 = vmatprep.subr.mxu0 0.0
    %3705 = vmatpush1.msra.mxu0 0.0
    %3706 = vmatprep.subr.mxu0 0.0
    %3707 = vmatpush1.msra.mxu0 0.0
    %3708 = vmatprep.subr.mxu0 0.0
    %3709 = vmatpush1.msra.mxu0 0.0
    %3710 = vmatprep.subr.mxu0 0.0
    %3711 = vmatpush1.msra.mxu0 0.0
    %3712 = vmatprep.subr.mxu0 0.0
    %3713 = vmatpush1.msra.mxu0 0.0
    %3714 = vmatprep.subr.mxu0 0.0
    %3715 = vmatpush1.msra.mxu0 0.0
    %3716 = vmatprep.subr.mxu0 0.0
    %3717 = vmatpush1.msra.mxu0 0.0
    %3718 = vmatprep.mubr.f32.mxu0 0.0
    %3719 = vmatmul.mubr.f32.gmra.mrb[0].mxu0 %v3006
    %v3720 = vpop.f32.mrb[0].mxu0
    %v3721 = vadd.f32 0.0, %v3720
    %v3722 = vpop.f32.mrb[0].mxu0
    %3723 = vdwg.mxu0
    %v3724 = vmul.f32 %v3721, 2.0
    %v3725 = vsub.f32 %v3724, %v3581
    %3726 = vmatprep.subr.mxu0 0.0
    %3727 = vmatpush1.msra.mxu0 %v3725
    %3728 = vmatprep.subr.mxu0 0.0
    %3729 = vmatpush1.msra.mxu0 0.0
    %3730 = vmatprep.subr.mxu0 0.0
    %3731 = vmatpush1.msra.mxu0 0.0
    %3732 = vmatprep.subr.mxu0 0.0
    %3733 = vmatpush1.msra.mxu0 0.0
    %3734 = vmatprep.subr.mxu0 0.0
    %3735 = vmatpush1.msra.mxu0 0.0
    %3736 = vmatprep.subr.mxu0 0.0
    %3737 = vmatpush1.msra.mxu0 0.0
    %3738 = vmatprep.subr.mxu0 0.0
    %3739 = vmatpush1.msra.mxu0 0.0
    %3740 = vmatprep.subr.mxu0 0.0
    %3741 = vmatpush1.msra.mxu0 0.0
    %3742 = vmatprep.subr.mxu0 0.0
    %3743 = vmatpush1.msra.mxu0 0.0
    %3744 = vmatprep.subr.mxu0 0.0
    %3745 = vmatpush1.msra.mxu0 0.0
    %3746 = vmatprep.subr.mxu0 0.0
    %3747 = vmatpush1.msra.mxu0 0.0
    %3748 = vmatprep.subr.mxu0 0.0
    %3749 = vmatpush1.msra.mxu0 0.0
    %3750 = vmatprep.subr.mxu0 0.0
    %3751 = vmatpush1.msra.mxu0 0.0
    %3752 = vmatprep.subr.mxu0 0.0
    %3753 = vmatpush1.msra.mxu0 0.0
    %3754 = vmatprep.subr.mxu0 0.0
    %3755 = vmatpush1.msra.mxu0 0.0
    %3756 = vmatprep.subr.mxu0 0.0
    %3757 = vmatpush1.msra.mxu0 0.0
    %3758 = vmatprep.subr.mxu0 0.0
    %3759 = vmatpush1.msra.mxu0 0.0
    %3760 = vmatprep.subr.mxu0 0.0
    %3761 = vmatpush1.msra.mxu0 0.0
    %3762 = vmatprep.subr.mxu0 0.0
    %3763 = vmatpush1.msra.mxu0 0.0
    %3764 = vmatprep.subr.mxu0 0.0
    %3765 = vmatpush1.msra.mxu0 0.0
    %3766 = vmatprep.subr.mxu0 0.0
    %3767 = vmatpush1.msra.mxu0 0.0
    %3768 = vmatprep.subr.mxu0 0.0
    %3769 = vmatpush1.msra.mxu0 0.0
    %3770 = vmatprep.subr.mxu0 0.0
    %3771 = vmatpush1.msra.mxu0 0.0
    %3772 = vmatprep.subr.mxu0 0.0
    %3773 = vmatpush1.msra.mxu0 0.0
    %3774 = vmatprep.subr.mxu0 0.0
    %3775 = vmatpush1.msra.mxu0 0.0
    %3776 = vmatprep.subr.mxu0 0.0
    %3777 = vmatpush1.msra.mxu0 0.0
    %3778 = vmatprep.subr.mxu0 0.0
    %3779 = vmatpush1.msra.mxu0 0.0
    %3780 = vmatprep.subr.mxu0 0.0
    %3781 = vmatpush1.msra.mxu0 0.0
    %3782 = vmatprep.subr.mxu0 0.0
    %3783 = vmatpush1.msra.mxu0 0.0
    %3784 = vmatprep.subr.mxu0 0.0
    %3785 = vmatpush1.msra.mxu0 0.0
    %3786 = vmatprep.subr.mxu0 0.0
    %3787 = vmatpush1.msra.mxu0 0.0
    %3788 = vmatprep.subr.mxu0 0.0
    %3789 = vmatpush1.msra.mxu0 0.0
    %3790 = vmatprep.mubr.f32.mxu0 0.0
    %3791 = vmatmul.mubr.f32.gmra.mrb[0].mxu0 %v3006
    %v3792 = vpop.f32.mrb[0].mxu0
    %v3793 = vadd.f32 0.0, %v3792
    %v3794 = vpop.f32.mrb[0].mxu0
    %3795 = vdwg.mxu0
    %v3796 = vmul.f32 %v3793, 2.0
    %v3797 = vsub.f32 %v3796, %v3653
    %3798 = vmatprep.subr.mxu0 0.0
    %3799 = vmatpush1.msra.mxu0 %v3797
    %3800 = vmatprep.subr.mxu0 0.0
    %3801 = vmatpush1.msra.mxu0 0.0
    %3802 = vmatprep.subr.mxu0 0.0
    %3803 = vmatpush1.msra.mxu0 0.0
    %3804 = vmatprep.subr.mxu0 0.0
    %3805 = vmatpush1.msra.mxu0 0.0
    %3806 = vmatprep.subr.mxu0 0.0
    %3807 = vmatpush1.msra.mxu0 0.0
    %3808 = vmatprep.subr.mxu0 0.0
    %3809 = vmatpush1.msra.mxu0 0.0
    %3810 = vmatprep.subr.mxu0 0.0
    %3811 = vmatpush1.msra.mxu0 0.0
    %3812 = vmatprep.subr.mxu0 0.0
    %3813 = vmatpush1.msra.mxu0 0.0
    %3814 = vmatprep.subr.mxu0 0.0
    %3815 = vmatpush1.msra.mxu0 0.0
    %3816 = vmatprep.subr.mxu0 0.0
    %3817 = vmatpush1.msra.mxu0 0.0
    %3818 = vmatprep.subr.mxu0 0.0
    %3819 = vmatpush1.msra.mxu0 0.0
    %3820 = vmatprep.subr.mxu0 0.0
    %3821 = vmatpush1.msra.mxu0 0.0
    %3822 = vmatprep.subr.mxu0 0.0
    %3823 = vmatpush1.msra.mxu0 0.0
    %3824 = vmatprep.subr.mxu0 0.0
    %3825 = vmatpush1.msra.mxu0 0.0
    %3826 = vmatprep.subr.mxu0 0.0
    %3827 = vmatpush1.msra.mxu0 0.0
    %3828 = vmatprep.subr.mxu0 0.0
    %3829 = vmatpush1.msra.mxu0 0.0
    %3830 = vmatprep.subr.mxu0 0.0
    %3831 = vmatpush1.msra.mxu0 0.0
    %3832 = vmatprep.subr.mxu0 0.0
    %3833 = vmatpush1.msra.mxu0 0.0
    %3834 = vmatprep.subr.mxu0 0.0
    %3835 = vmatpush1.msra.mxu0 0.0
    %3836 = vmatprep.subr.mxu0 0.0
    %3837 = vmatpush1.msra.mxu0 0.0
    %3838 = vmatprep.subr.mxu0 0.0
    %3839 = vmatpush1.msra.mxu0 0.0
    %3840 = vmatprep.subr.mxu0 0.0
    %3841 = vmatpush1.msra.mxu0 0.0
    %3842 = vmatprep.subr.mxu0 0.0
    %3843 = vmatpush1.msra.mxu0 0.0
    %3844 = vmatprep.subr.mxu0 0.0
    %3845 = vmatpush1.msra.mxu0 0.0
    %3846 = vmatprep.subr.mxu0 0.0
    %3847 = vmatpush1.msra.mxu0 0.0
    %3848 = vmatprep.subr.mxu0 0.0
    %3849 = vmatpush1.msra.mxu0 0.0
    %3850 = vmatprep.subr.mxu0 0.0
    %3851 = vmatpush1.msra.mxu0 0.0
    %3852 = vmatprep.subr.mxu0 0.0
    %3853 = vmatpush1.msra.mxu0 0.0
    %3854 = vmatprep.subr.mxu0 0.0
    %3855 = vmatpush1.msra.mxu0 0.0
    %3856 = vmatprep.subr.mxu0 0.0
    %3857 = vmatpush1.msra.mxu0 0.0
    %3858 = vmatprep.subr.mxu0 0.0
    %3859 = vmatpush1.msra.mxu0 0.0
    %3860 = vmatprep.subr.mxu0 0.0
    %3861 = vmatpush1.msra.mxu0 0.0
    %3862 = vmatprep.mubr.f32.mxu0 0.0
    %3863 = vmatmul.mubr.f32.gmra.mrb[0].mxu0 %v3006
    %v3864 = vpop.f32.mrb[0].mxu0
    %v3865 = vadd.f32 0.0, %v3864
    %v3866 = vpop.f32.mrb[0].mxu0
    %3867 = vdwg.mxu0
    %v3868 = vmul.f32 %v3865, 2.0
    %v3869 = vsub.f32 %v3868, %v3725
    %3870 = vmatprep.subr.mxu0 0.0
    %3871 = vmatpush1.msra.mxu0 %v3869
    %3872 = vmatprep.subr.mxu0 0.0
    %3873 = vmatpush1.msra.mxu0 0.0
    %3874 = vmatprep.subr.mxu0 0.0
    %3875 = vmatpush1.msra.mxu0 0.0
    %3876 = vmatprep.subr.mxu0 0.0
    %3877 = vmatpush1.msra.mxu0 0.0
    %3878 = vmatprep.subr.mxu0 0.0
    %3879 = vmatpush1.msra.mxu0 0.0
    %3880 = vmatprep.subr.mxu0 0.0
    %3881 = vmatpush1.msra.mxu0 0.0
    %3882 = vmatprep.subr.mxu0 0.0
    %3883 = vmatpush1.msra.mxu0 0.0
    %3884 = vmatprep.subr.mxu0 0.0
    %3885 = vmatpush1.msra.mxu0 0.0
    %3886 = vmatprep.subr.mxu0 0.0
    %3887 = vmatpush1.msra.mxu0 0.0
    %3888 = vmatprep.subr.mxu0 0.0
    %3889 = vmatpush1.msra.mxu0 0.0
    %3890 = vmatprep.subr.mxu0 0.0
    %3891 = vmatpush1.msra.mxu0 0.0
    %3892 = vmatprep.subr.mxu0 0.0
    %3893 = vmatpush1.msra.mxu0 0.0
    %3894 = vmatprep.subr.mxu0 0.0
    %3895 = vmatpush1.msra.mxu0 0.0
    %3896 = vmatprep.subr.mxu0 0.0
    %3897 = vmatpush1.msra.mxu0 0.0
    %3898 = vmatprep.subr.mxu0 0.0
    %3899 = vmatpush1.msra.mxu0 0.0
    %3900 = vmatprep.subr.mxu0 0.0
    %3901 = vmatpush1.msra.mxu0 0.0
    %3902 = vmatprep.subr.mxu0 0.0
    %3903 = vmatpush1.msra.mxu0 0.0
    %3904 = vmatprep.subr.mxu0 0.0
    %3905 = vmatpush1.msra.mxu0 0.0
    %3906 = vmatprep.subr.mxu0 0.0
    %3907 = vmatpush1.msra.mxu0 0.0
    %3908 = vmatprep.subr.mxu0 0.0
    %3909 = vmatpush1.msra.mxu0 0.0
    %3910 = vmatprep.subr.mxu0 0.0
    %3911 = vmatpush1.msra.mxu0 0.0
    %3912 = vmatprep.subr.mxu0 0.0
    %3913 = vmatpush1.msra.mxu0 0.0
    %3914 = vmatprep.subr.mxu0 0.0
    %3915 = vmatpush1.msra.mxu0 0.0
    %3916 = vmatprep.subr.mxu0 0.0
    %3917 = vmatpush1.msra.mxu0 0.0
    %3918 = vmatprep.subr.mxu0 0.0
    %3919 = vmatpush1.msra.mxu0 0.0
    %3920 = vmatprep.subr.mxu0 0.0
    %3921 = vmatpush1.msra.mxu0 0.0
    %3922 = vmatprep.subr.mxu0 0.0
    %3923 = vmatpush1.msra.mxu0 0.0
    %3924 = vmatprep.subr.mxu0 0.0
    %3925 = vmatpush1.msra.mxu0 0.0
    %3926 = vmatprep.subr.mxu0 0.0
    %3927 = vmatpush1.msra.mxu0 0.0
    %3928 = vmatprep.subr.mxu0 0.0
    %3929 = vmatpush1.msra.mxu0 0.0
    %3930 = vmatprep.subr.mxu0 0.0
    %3931 = vmatpush1.msra.mxu0 0.0
    %3932 = vmatprep.subr.mxu0 0.0
    %3933 = vmatpush1.msra.mxu0 0.0
    %3934 = vmatprep.mubr.f32.mxu0 0.0
    %3935 = vmatmul.mubr.f32.gmra.mrb[0].mxu0 %v3006
    %v3936 = vpop.f32.mrb[0].mxu0
    %v3937 = vadd.f32 0.0, %v3936
    %v3938 = vpop.f32.mrb[0].mxu0
    %3939 = vdwg.mxu0
    %v3940 = vmul.f32 %v3937, 2.0
    %v3941 = vsub.f32 %v3940, %v3797
    %3942 = vmatprep.subr.mxu0 0.0
    %3943 = vmatpush1.msra.mxu0 %v3941
    %3944 = vmatprep.subr.mxu0 0.0
    %3945 = vmatpush1.msra.mxu0 0.0
    %3946 = vmatprep.subr.mxu0 0.0
    %3947 = vmatpush1.msra.mxu0 0.0
    %3948 = vmatprep.subr.mxu0 0.0
    %3949 = vmatpush1.msra.mxu0 0.0
    %3950 = vmatprep.subr.mxu0 0.0
    %3951 = vmatpush1.msra.mxu0 0.0
    %3952 = vmatprep.subr.mxu0 0.0
    %3953 = vmatpush1.msra.mxu0 0.0
    %3954 = vmatprep.subr.mxu0 0.0
    %3955 = vmatpush1.msra.mxu0 0.0
    %3956 = vmatprep.subr.mxu0 0.0
    %3957 = vmatpush1.msra.mxu0 0.0
    %3958 = vmatprep.subr.mxu0 0.0
    %3959 = vmatpush1.msra.mxu0 0.0
    %3960 = vmatprep.subr.mxu0 0.0
    %3961 = vmatpush1.msra.mxu0 0.0
    %3962 = vmatprep.subr.mxu0 0.0
    %3963 = vmatpush1.msra.mxu0 0.0
    %3964 = vmatprep.subr.mxu0 0.0
    %3965 = vmatpush1.msra.mxu0 0.0
    %3966 = vmatprep.subr.mxu0 0.0
    %3967 = vmatpush1.msra.mxu0 0.0
    %3968 = vmatprep.subr.mxu0 0.0
    %3969 = vmatpush1.msra.mxu0 0.0
    %3970 = vmatprep.subr.mxu0 0.0
    %3971 = vmatpush1.msra.mxu0 0.0
    %3972 = vmatprep.subr.mxu0 0.0
    %3973 = vmatpush1.msra.mxu0 0.0
    %3974 = vmatprep.subr.mxu0 0.0
    %3975 = vmatpush1.msra.mxu0 0.0
    %3976 = vmatprep.subr.mxu0 0.0
    %3977 = vmatpush1.msra.mxu0 0.0
    %3978 = vmatprep.subr.mxu0 0.0
    %3979 = vmatpush1.msra.mxu0 0.0
    %3980 = vmatprep.subr.mxu0 0.0
    %3981 = vmatpush1.msra.mxu0 0.0
    %3982 = vmatprep.subr.mxu0 0.0
    %3983 = vmatpush1.msra.mxu0 0.0
    %3984 = vmatprep.subr.mxu0 0.0
    %3985 = vmatpush1.msra.mxu0 0.0
    %3986 = vmatprep.subr.mxu0 0.0
    %3987 = vmatpush1.msra.mxu0 0.0
    %3988 = vmatprep.subr.mxu0 0.0
    %3989 = vmatpush1.msra.mxu0 0.0
    %3990 = vmatprep.subr.mxu0 0.0
    %3991 = vmatpush1.msra.mxu0 0.0
    %3992 = vmatprep.subr.mxu0 0.0
    %3993 = vmatpush1.msra.mxu0 0.0
    %3994 = vmatprep.subr.mxu0 0.0
    %3995 = vmatpush1.msra.mxu0 0.0
    %3996 = vmatprep.subr.mxu0 0.0
    %3997 = vmatpush1.msra.mxu0 0.0
    %3998 = vmatprep.subr.mxu0 0.0
    %3999 = vmatpush1.msra.mxu0 0.0
    %4000 = vmatprep.subr.mxu0 0.0
    %4001 = vmatpush1.msra.mxu0 0.0
    %4002 = vmatprep.subr.mxu0 0.0
    %4003 = vmatpush1.msra.mxu0 0.0
    %4004 = vmatprep.subr.mxu0 0.0
    %4005 = vmatpush1.msra.mxu0 0.0
    %4006 = vmatprep.mubr.f32.mxu0 0.0
    %4007 = vmatmul.mubr.f32.gmra.mrb[0].mxu0 %v3006
    %v4008 = vpop.f32.mrb[0].mxu0
    %v4009 = vadd.f32 0.0, %v4008
    %v4010 = vpop.f32.mrb[0].mxu0
    %4011 = vdwg.mxu0
    %v4012 = vmul.f32 %v4009, 2.0
    %v4013 = vsub.f32 %v4012, %v3869
    %4014 = vmatprep.subr.mxu0 0.0
    %4015 = vmatpush1.msra.mxu0 %v4013
    %4016 = vmatprep.subr.mxu0 0.0
    %4017 = vmatpush1.msra.mxu0 0.0
    %4018 = vmatprep.subr.mxu0 0.0
    %4019 = vmatpush1.msra.mxu0 0.0
    %4020 = vmatprep.subr.mxu0 0.0
    %4021 = vmatpush1.msra.mxu0 0.0
    %4022 = vmatprep.subr.mxu0 0.0
    %4023 = vmatpush1.msra.mxu0 0.0
    %4024 = vmatprep.subr.mxu0 0.0
    %4025 = vmatpush1.msra.mxu0 0.0
    %4026 = vmatprep.subr.mxu0 0.0
    %4027 = vmatpush1.msra.mxu0 0.0
    %4028 = vmatprep.subr.mxu0 0.0
    %4029 = vmatpush1.msra.mxu0 0.0
    %4030 = vmatprep.subr.mxu0 0.0
    %4031 = vmatpush1.msra.mxu0 0.0
    %4032 = vmatprep.subr.mxu0 0.0
    %4033 = vmatpush1.msra.mxu0 0.0
    %4034 = vmatprep.subr.mxu0 0.0
    %4035 = vmatpush1.msra.mxu0 0.0
    %4036 = vmatprep.subr.mxu0 0.0
    %4037 = vmatpush1.msra.mxu0 0.0
    %4038 = vmatprep.subr.mxu0 0.0
    %4039 = vmatpush1.msra.mxu0 0.0
    %4040 = vmatprep.subr.mxu0 0.0
    %4041 = vmatpush1.msra.mxu0 0.0
    %4042 = vmatprep.subr.mxu0 0.0
    %4043 = vmatpush1.msra.mxu0 0.0
    %4044 = vmatprep.subr.mxu0 0.0
    %4045 = vmatpush1.msra.mxu0 0.0
    %4046 = vmatprep.subr.mxu0 0.0
    %4047 = vmatpush1.msra.mxu0 0.0
    %4048 = vmatprep.subr.mxu0 0.0
    %4049 = vmatpush1.msra.mxu0 0.0
    %4050 = vmatprep.subr.mxu0 0.0
    %4051 = vmatpush1.msra.mxu0 0.0
    %4052 = vmatprep.subr.mxu0 0.0
    %4053 = vmatpush1.msra.mxu0 0.0
    %4054 = vmatprep.subr.mxu0 0.0
    %4055 = vmatpush1.msra.mxu0 0.0
    %4056 = vmatprep.subr.mxu0 0.0
    %4057 = vmatpush1.msra.mxu0 0.0
    %4058 = vmatprep.subr.mxu0 0.0
    %4059 = vmatpush1.msra.mxu0 0.0
    %4060 = vmatprep.subr.mxu0 0.0
    %4061 = vmatpush1.msra.mxu0 0.0
    %4062 = vmatprep.subr.mxu0 0.0
    %4063 = vmatpush1.msra.mxu0 0.0
    %4064 = vmatprep.subr.mxu0 0.0
    %4065 = vmatpush1.msra.mxu0 0.0
    %4066 = vmatprep.subr.mxu0 0.0
    %4067 = vmatpush1.msra.mxu0 0.0
    %4068 = vmatprep.subr.mxu0 0.0
    %4069 = vmatpush1.msra.mxu0 0.0
    %4070 = vmatprep.subr.mxu0 0.0
    %4071 = vmatpush1.msra.mxu0 0.0
    %4072 = vmatprep.subr.mxu0 0.0
    %4073 = vmatpush1.msra.mxu0 0.0
    %4074 = vmatprep.subr.mxu0 0.0
    %4075 = vmatpush1.msra.mxu0 0.0
    %4076 = vmatprep.subr.mxu0 0.0
    %4077 = vmatpush1.msra.mxu0 0.0
    %4078 = vmatprep.mubr.f32.mxu0 0.0
    %4079 = vmatmul.mubr.f32.gmra.mrb[0].mxu0 %v3006
    %v4080 = vpop.f32.mrb[0].mxu0
    %v4081 = vadd.f32 0.0, %v4080
    %v4082 = vpop.f32.mrb[0].mxu0
    %4083 = vdwg.mxu0
    %v4084 = vmul.f32 %v4081, 2.0
    %v4085 = vsub.f32 %v4084, %v3941
    %4086 = vmatprep.subr.mxu0 0.0
    %4087 = vmatpush1.msra.mxu0 %v4085
    %4088 = vmatprep.subr.mxu0 0.0
    %4089 = vmatpush1.msra.mxu0 0.0
    %4090 = vmatprep.subr.mxu0 0.0
    %4091 = vmatpush1.msra.mxu0 0.0
    %4092 = vmatprep.subr.mxu0 0.0
    %4093 = vmatpush1.msra.mxu0 0.0
    %4094 = vmatprep.subr.mxu0 0.0
    %4095 = vmatpush1.msra.mxu0 0.0
    %4096 = vmatprep.subr.mxu0 0.0
    %4097 = vmatpush1.msra.mxu0 0.0
    %4098 = vmatprep.subr.mxu0 0.0
    %4099 = vmatpush1.msra.mxu0 0.0
    %4100 = vmatprep.subr.mxu0 0.0
    %4101 = vmatpush1.msra.mxu0 0.0
    %4102 = vmatprep.subr.mxu0 0.0
    %4103 = vmatpush1.msra.mxu0 0.0
    %4104 = vmatprep.subr.mxu0 0.0
    %4105 = vmatpush1.msra.mxu0 0.0
    %4106 = vmatprep.subr.mxu0 0.0
    %4107 = vmatpush1.msra.mxu0 0.0
    %4108 = vmatprep.subr.mxu0 0.0
    %4109 = vmatpush1.msra.mxu0 0.0
    %4110 = vmatprep.subr.mxu0 0.0
    %4111 = vmatpush1.msra.mxu0 0.0
    %4112 = vmatprep.subr.mxu0 0.0
    %4113 = vmatpush1.msra.mxu0 0.0
    %4114 = vmatprep.subr.mxu0 0.0
    %4115 = vmatpush1.msra.mxu0 0.0
    %4116 = vmatprep.subr.mxu0 0.0
    %4117 = vmatpush1.msra.mxu0 0.0
    %4118 = vmatprep.subr.mxu0 0.0
    %4119 = vmatpush1.msra.mxu0 0.0
    %4120 = vmatprep.subr.mxu0 0.0
    %4121 = vmatpush1.msra.mxu0 0.0
    %4122 = vmatprep.subr.mxu0 0.0
    %4123 = vmatpush1.msra.mxu0 0.0
    %4124 = vmatprep.subr.mxu0 0.0
    %4125 = vmatpush1.msra.mxu0 0.0
    %4126 = vmatprep.subr.mxu0 0.0
    %4127 = vmatpush1.msra.mxu0 0.0
    %4128 = vmatprep.subr.mxu0 0.0
    %4129 = vmatpush1.msra.mxu0 0.0
    %4130 = vmatprep.subr.mxu0 0.0
    %4131 = vmatpush1.msra.mxu0 0.0
    %4132 = vmatprep.subr.mxu0 0.0
    %4133 = vmatpush1.msra.mxu0 0.0
    %4134 = vmatprep.subr.mxu0 0.0
    %4135 = vmatpush1.msra.mxu0 0.0
    %4136 = vmatprep.subr.mxu0 0.0
    %4137 = vmatpush1.msra.mxu0 0.0
    %4138 = vmatprep.subr.mxu0 0.0
    %4139 = vmatpush1.msra.mxu0 0.0
    %4140 = vmatprep.subr.mxu0 0.0
    %4141 = vmatpush1.msra.mxu0 0.0
    %4142 = vmatprep.subr.mxu0 0.0
    %4143 = vmatpush1.msra.mxu0 0.0
    %4144 = vmatprep.subr.mxu0 0.0
    %4145 = vmatpush1.msra.mxu0 0.0
    %4146 = vmatprep.subr.mxu0 0.0
    %4147 = vmatpush1.msra.mxu0 0.0
    %4148 = vmatprep.subr.mxu0 0.0
    %4149 = vmatpush1.msra.mxu0 0.0
    %4150 = vmatprep.mubr.f32.mxu0 0.0
    %4151 = vmatmul.mubr.f32.gmra.mrb[0].mxu0 %v3006
    %v4152 = vpop.f32.mrb[0].mxu0
    %v4153 = vadd.f32 0.0, %v4152
    %v4154 = vpop.f32.mrb[0].mxu0
    %4155 = vdwg.mxu0
    %v4156 = vmul.f32 %v4153, 2.0
    %v4157 = vsub.f32 %v4156, %v4013
    %4158 = vmatprep.subr.mxu0 0.0
    %4159 = vmatpush1.msra.mxu0 %v4157
    %4160 = vmatprep.subr.mxu0 0.0
    %4161 = vmatpush1.msra.mxu0 0.0
    %4162 = vmatprep.subr.mxu0 0.0
    %4163 = vmatpush1.msra.mxu0 0.0
    %4164 = vmatprep.subr.mxu0 0.0
    %4165 = vmatpush1.msra.mxu0 0.0
    %4166 = vmatprep.subr.mxu0 0.0
    %4167 = vmatpush1.msra.mxu0 0.0
    %4168 = vmatprep.subr.mxu0 0.0
    %4169 = vmatpush1.msra.mxu0 0.0
    %4170 = vmatprep.subr.mxu0 0.0
    %4171 = vmatpush1.msra.mxu0 0.0
    %4172 = vmatprep.subr.mxu0 0.0
    %4173 = vmatpush1.msra.mxu0 0.0
    %4174 = vmatprep.subr.mxu0 0.0
    %4175 = vmatpush1.msra.mxu0 0.0
    %4176 = vmatprep.subr.mxu0 0.0
    %4177 = vmatpush1.msra.mxu0 0.0
    %4178 = vmatprep.subr.mxu0 0.0
    %4179 = vmatpush1.msra.mxu0 0.0
    %4180 = vmatprep.subr.mxu0 0.0
    %4181 = vmatpush1.msra.mxu0 0.0
    %4182 = vmatprep.subr.mxu0 0.0
    %4183 = vmatpush1.msra.mxu0 0.0
    %4184 = vmatprep.subr.mxu0 0.0
    %4185 = vmatpush1.msra.mxu0 0.0
    %4186 = vmatprep.subr.mxu0 0.0
    %4187 = vmatpush1.msra.mxu0 0.0
    %4188 = vmatprep.subr.mxu0 0.0
    %4189 = vmatpush1.msra.mxu0 0.0
    %4190 = vmatprep.subr.mxu0 0.0
    %4191 = vmatpush1.msra.mxu0 0.0
    %4192 = vmatprep.subr.mxu0 0.0
    %4193 = vmatpush1.msra.mxu0 0.0
    %4194 = vmatprep.subr.mxu0 0.0
    %4195 = vmatpush1.msra.mxu0 0.0
    %4196 = vmatprep.subr.mxu0 0.0
    %4197 = vmatpush1.msra.mxu0 0.0
    %4198 = vmatprep.subr.mxu0 0.0
    %4199 = vmatpush1.msra.mxu0 0.0
    %4200 = vmatprep.subr.mxu0 0.0
    %4201 = vmatpush1.msra.mxu0 0.0
    %4202 = vmatprep.subr.mxu0 0.0
    %4203 = vmatpush1.msra.mxu0 0.0
    %4204 = vmatprep.subr.mxu0 0.0
    %4205 = vmatpush1.msra.mxu0 0.0
    %4206 = vmatprep.subr.mxu0 0.0
    %4207 = vmatpush1.msra.mxu0 0.0
    %4208 = vmatprep.subr.mxu0 0.0
    %4209 = vmatpush1.msra.mxu0 0.0
    %4210 = vmatprep.subr.mxu0 0.0
    %4211 = vmatpush1.msra.mxu0 0.0
    %4212 = vmatprep.subr.mxu0 0.0
    %4213 = vmatpush1.msra.mxu0 0.0
    %4214 = vmatprep.subr.mxu0 0.0
    %4215 = vmatpush1.msra.mxu0 0.0
    %4216 = vmatprep.subr.mxu0 0.0
    %4217 = vmatpush1.msra.mxu0 0.0
    %4218 = vmatprep.subr.mxu0 0.0
    %4219 = vmatpush1.msra.mxu0 0.0
    %4220 = vmatprep.subr.mxu0 0.0
    %4221 = vmatpush1.msra.mxu0 0.0
    %4222 = vmatprep.mubr.f32.mxu0 0.0
    %4223 = vmatmul.mubr.f32.gmra.mrb[0].mxu0 %v3006
    %v4224 = vpop.f32.mrb[0].mxu0
    %v4225 = vadd.f32 0.0, %v4224
    %v4226 = vpop.f32.mrb[0].mxu0
    %4227 = vdwg.mxu0
    %v4228 = vmul.f32 %v4225, 2.0
    %v4229 = vsub.f32 %v4228, %v4085
    %4230 = vmatprep.subr.mxu0 0.0
    %4231 = vmatpush1.msra.mxu0 %v4229
    %4232 = vmatprep.subr.mxu0 0.0
    %4233 = vmatpush1.msra.mxu0 0.0
    %4234 = vmatprep.subr.mxu0 0.0
    %4235 = vmatpush1.msra.mxu0 0.0
    %4236 = vmatprep.subr.mxu0 0.0
    %4237 = vmatpush1.msra.mxu0 0.0
    %4238 = vmatprep.subr.mxu0 0.0
    %4239 = vmatpush1.msra.mxu0 0.0
    %4240 = vmatprep.subr.mxu0 0.0
    %4241 = vmatpush1.msra.mxu0 0.0
    %4242 = vmatprep.subr.mxu0 0.0
    %4243 = vmatpush1.msra.mxu0 0.0
    %4244 = vmatprep.subr.mxu0 0.0
    %4245 = vmatpush1.msra.mxu0 0.0
    %4246 = vmatprep.subr.mxu0 0.0
    %4247 = vmatpush1.msra.mxu0 0.0
    %4248 = vmatprep.subr.mxu0 0.0
    %4249 = vmatpush1.msra.mxu0 0.0
    %4250 = vmatprep.subr.mxu0 0.0
    %4251 = vmatpush1.msra.mxu0 0.0
    %4252 = vmatprep.subr.mxu0 0.0
    %4253 = vmatpush1.msra.mxu0 0.0
    %4254 = vmatprep.subr.mxu0 0.0
    %4255 = vmatpush1.msra.mxu0 0.0
    %4256 = vmatprep.subr.mxu0 0.0
    %4257 = vmatpush1.msra.mxu0 0.0
    %4258 = vmatprep.subr.mxu0 0.0
    %4259 = vmatpush1.msra.mxu0 0.0
    %4260 = vmatprep.subr.mxu0 0.0
    %4261 = vmatpush1.msra.mxu0 0.0
    %4262 = vmatprep.subr.mxu0 0.0
    %4263 = vmatpush1.msra.mxu0 0.0
    %4264 = vmatprep.subr.mxu0 0.0
    %4265 = vmatpush1.msra.mxu0 0.0
    %4266 = vmatprep.subr.mxu0 0.0
    %4267 = vmatpush1.msra.mxu0 0.0
    %4268 = vmatprep.subr.mxu0 0.0
    %4269 = vmatpush1.msra.mxu0 0.0
    %4270 = vmatprep.subr.mxu0 0.0
    %4271 = vmatpush1.msra.mxu0 0.0
    %4272 = vmatprep.subr.mxu0 0.0
    %4273 = vmatpush1.msra.mxu0 0.0
    %4274 = vmatprep.subr.mxu0 0.0
    %4275 = vmatpush1.msra.mxu0 0.0
    %4276 = vmatprep.subr.mxu0 0.0
    %4277 = vmatpush1.msra.mxu0 0.0
    %4278 = vmatprep.subr.mxu0 0.0
    %4279 = vmatpush1.msra.mxu0 0.0
    %4280 = vmatprep.subr.mxu0 0.0
    %4281 = vmatpush1.msra.mxu0 0.0
    %4282 = vmatprep.subr.mxu0 0.0
    %4283 = vmatpush1.msra.mxu0 0.0
    %4284 = vmatprep.subr.mxu0 0.0
    %4285 = vmatpush1.msra.mxu0 0.0
    %4286 = vmatprep.subr.mxu0 0.0
    %4287 = vmatpush1.msra.mxu0 0.0
    %4288 = vmatprep.subr.mxu0 0.0
    %4289 = vmatpush1.msra.mxu0 0.0
    %4290 = vmatprep.subr.mxu0 0.0
    %4291 = vmatpush1.msra.mxu0 0.0
    %4292 = vmatprep.subr.mxu0 0.0
    %4293 = vmatpush1.msra.mxu0 0.0
    %4294 = vmatprep.mubr.f32.mxu0 0.0
    %4295 = vmatmul.mubr.f32.gmra.mrb[0].mxu0 %v3006
    %v4296 = vpop.f32.mrb[0].mxu0
    %v4297 = vadd.f32 0.0, %v4296
    %v4298 = vpop.f32.mrb[0].mxu0
    %4299 = vdwg.mxu0
    %v4300 = vmul.f32 %v4297, 2.0
    %v4301 = vsub.f32 %v4300, %v4157
    %4302 = vmatprep.subr.mxu0 0.0
    %4303 = vmatpush1.msra.mxu0 %v4301
    %4304 = vmatprep.subr.mxu0 0.0
    %4305 = vmatpush1.msra.mxu0 0.0
    %4306 = vmatprep.subr.mxu0 0.0
    %4307 = vmatpush1.msra.mxu0 0.0
    %4308 = vmatprep.subr.mxu0 0.0
    %4309 = vmatpush1.msra.mxu0 0.0
    %4310 = vmatprep.subr.mxu0 0.0
    %4311 = vmatpush1.msra.mxu0 0.0
    %4312 = vmatprep.subr.mxu0 0.0
    %4313 = vmatpush1.msra.mxu0 0.0
    %4314 = vmatprep.subr.mxu0 0.0
    %4315 = vmatpush1.msra.mxu0 0.0
    %4316 = vmatprep.subr.mxu0 0.0
    %4317 = vmatpush1.msra.mxu0 0.0
    %4318 = vmatprep.subr.mxu0 0.0
    %4319 = vmatpush1.msra.mxu0 0.0
    %4320 = vmatprep.subr.mxu0 0.0
    %4321 = vmatpush1.msra.mxu0 0.0
    %4322 = vmatprep.subr.mxu0 0.0
    %4323 = vmatpush1.msra.mxu0 0.0
    %4324 = vmatprep.subr.mxu0 0.0
    %4325 = vmatpush1.msra.mxu0 0.0
    %4326 = vmatprep.subr.mxu0 0.0
    %4327 = vmatpush1.msra.mxu0 0.0
    %4328 = vmatprep.subr.mxu0 0.0
    %4329 = vmatpush1.msra.mxu0 0.0
    %4330 = vmatprep.subr.mxu0 0.0
    %4331 = vmatpush1.msra.mxu0 0.0
    %4332 = vmatprep.subr.mxu0 0.0
    %4333 = vmatpush1.msra.mxu0 0.0
    %4334 = vmatprep.subr.mxu0 0.0
    %4335 = vmatpush1.msra.mxu0 0.0
    %4336 = vmatprep.subr.mxu0 0.0
    %4337 = vmatpush1.msra.mxu0 0.0
    %4338 = vmatprep.subr.mxu0 0.0
    %4339 = vmatpush1.msra.mxu0 0.0
    %4340 = vmatprep.subr.mxu0 0.0
    %4341 = vmatpush1.msra.mxu0 0.0
    %4342 = vmatprep.subr.mxu0 0.0
    %4343 = vmatpush1.msra.mxu0 0.0
    %4344 = vmatprep.subr.mxu0 0.0
    %4345 = vmatpush1.msra.mxu0 0.0
    %4346 = vmatprep.subr.mxu0 0.0
    %4347 = vmatpush1.msra.mxu0 0.0
    %4348 = vmatprep.subr.mxu0 0.0
    %4349 = vmatpush1.msra.mxu0 0.0
    %4350 = vmatprep.subr.mxu0 0.0
    %4351 = vmatpush1.msra.mxu0 0.0
    %4352 = vmatprep.subr.mxu0 0.0
    %4353 = vmatpush1.msra.mxu0 0.0
    %4354 = vmatprep.subr.mxu0 0.0
    %4355 = vmatpush1.msra.mxu0 0.0
    %4356 = vmatprep.subr.mxu0 0.0
    %4357 = vmatpush1.msra.mxu0 0.0
    %4358 = vmatprep.subr.mxu0 0.0
    %4359 = vmatpush1.msra.mxu0 0.0
    %4360 = vmatprep.subr.mxu0 0.0
    %4361 = vmatpush1.msra.mxu0 0.0
    %4362 = vmatprep.subr.mxu0 0.0
    %4363 = vmatpush1.msra.mxu0 0.0
    %4364 = vmatprep.subr.mxu0 0.0
    %4365 = vmatpush1.msra.mxu0 0.0
    %4366 = vmatprep.mubr.f32.mxu0 0.0
    %4367 = vmatmul.mubr.f32.gmra.mrb[0].mxu0 %v3006
    %v4368 = vpop.f32.mrb[0].mxu0
    %v4369 = vadd.f32 0.0, %v4368
    %v4370 = vpop.f32.mrb[0].mxu0
    %4371 = vdwg.mxu0
    %v4372 = vmul.f32 %v4369, 2.0
    %v4373 = vsub.f32 %v4372, %v4229
    %4374 = vmatprep.subr.mxu0 0.0
    %4375 = vmatpush1.msra.mxu0 %v4373
    %4376 = vmatprep.subr.mxu0 0.0
    %4377 = vmatpush1.msra.mxu0 0.0
    %4378 = vmatprep.subr.mxu0 0.0
    %4379 = vmatpush1.msra.mxu0 0.0
    %4380 = vmatprep.subr.mxu0 0.0
    %4381 = vmatpush1.msra.mxu0 0.0
    %4382 = vmatprep.subr.mxu0 0.0
    %4383 = vmatpush1.msra.mxu0 0.0
    %4384 = vmatprep.subr.mxu0 0.0
    %4385 = vmatpush1.msra.mxu0 0.0
    %4386 = vmatprep.subr.mxu0 0.0
    %4387 = vmatpush1.msra.mxu0 0.0
    %4388 = vmatprep.subr.mxu0 0.0
    %4389 = vmatpush1.msra.mxu0 0.0
    %4390 = vmatprep.subr.mxu0 0.0
    %4391 = vmatpush1.msra.mxu0 0.0
    %4392 = vmatprep.subr.mxu0 0.0
    %4393 = vmatpush1.msra.mxu0 0.0
    %4394 = vmatprep.subr.mxu0 0.0
    %4395 = vmatpush1.msra.mxu0 0.0
    %4396 = vmatprep.subr.mxu0 0.0
    %4397 = vmatpush1.msra.mxu0 0.0
    %4398 = vmatprep.subr.mxu0 0.0
    %4399 = vmatpush1.msra.mxu0 0.0
    %4400 = vmatprep.subr.mxu0 0.0
    %4401 = vmatpush1.msra.mxu0 0.0
    %4402 = vmatprep.subr.mxu0 0.0
    %4403 = vmatpush1.msra.mxu0 0.0
    %4404 = vmatprep.subr.mxu0 0.0
    %4405 = vmatpush1.msra.mxu0 0.0
    %4406 = vmatprep.subr.mxu0 0.0
    %4407 = vmatpush1.msra.mxu0 0.0
    %4408 = vmatprep.subr.mxu0 0.0
    %4409 = vmatpush1.msra.mxu0 0.0
    %4410 = vmatprep.subr.mxu0 0.0
    %4411 = vmatpush1.msra.mxu0 0.0
    %4412 = vmatprep.subr.mxu0 0.0
    %4413 = vmatpush1.msra.mxu0 0.0
    %4414 = vmatprep.subr.mxu0 0.0
    %4415 = vmatpush1.msra.mxu0 0.0
    %4416 = vmatprep.subr.mxu0 0.0
    %4417 = vmatpush1.msra.mxu0 0.0
    %4418 = vmatprep.subr.mxu0 0.0
    %4419 = vmatpush1.msra.mxu0 0.0
    %4420 = vmatprep.subr.mxu0 0.0
    %4421 = vmatpush1.msra.mxu0 0.0
    %4422 = vmatprep.subr.mxu0 0.0
    %4423 = vmatpush1.msra.mxu0 0.0
    %4424 = vmatprep.subr.mxu0 0.0
    %4425 = vmatpush1.msra.mxu0 0.0
    %4426 = vmatprep.subr.mxu0 0.0
    %4427 = vmatpush1.msra.mxu0 0.0
    %4428 = vmatprep.subr.mxu0 0.0
    %4429 = vmatpush1.msra.mxu0 0.0
    %4430 = vmatprep.subr.mxu0 0.0
    %4431 = vmatpush1.msra.mxu0 0.0
    %4432 = vmatprep.subr.mxu0 0.0
    %4433 = vmatpush1.msra.mxu0 0.0
    %4434 = vmatprep.subr.mxu0 0.0
    %4435 = vmatpush1.msra.mxu0 0.0
    %4436 = vmatprep.subr.mxu0 0.0
    %4437 = vmatpush1.msra.mxu0 0.0
    %4438 = vmatprep.mubr.f32.mxu0 0.0
    %4439 = vmatmul.mubr.f32.gmra.mrb[0].mxu0 %v3006
    %v4440 = vpop.f32.mrb[0].mxu0
    %v4441 = vadd.f32 0.0, %v4440
    %v4442 = vpop.f32.mrb[0].mxu0
    %4443 = vdwg.mxu0
    %v4444 = vmul.f32 %v4441, 2.0
    %v4445 = vsub.f32 %v4444, %v4301
    %4446 = vmatprep.subr.mxu0 0.0
    %4447 = vmatpush1.msra.mxu0 %v4445
    %4448 = vmatprep.subr.mxu0 0.0
    %4449 = vmatpush1.msra.mxu0 0.0
    %4450 = vmatprep.subr.mxu0 0.0
    %4451 = vmatpush1.msra.mxu0 0.0
    %4452 = vmatprep.subr.mxu0 0.0
    %4453 = vmatpush1.msra.mxu0 0.0
    %4454 = vmatprep.subr.mxu0 0.0
    %4455 = vmatpush1.msra.mxu0 0.0
    %4456 = vmatprep.subr.mxu0 0.0
    %4457 = vmatpush1.msra.mxu0 0.0
    %4458 = vmatprep.subr.mxu0 0.0
    %4459 = vmatpush1.msra.mxu0 0.0
    %4460 = vmatprep.subr.mxu0 0.0
    %4461 = vmatpush1.msra.mxu0 0.0
    %4462 = vmatprep.subr.mxu0 0.0
    %4463 = vmatpush1.msra.mxu0 0.0
    %4464 = vmatprep.subr.mxu0 0.0
    %4465 = vmatpush1.msra.mxu0 0.0
    %4466 = vmatprep.subr.mxu0 0.0
    %4467 = vmatpush1.msra.mxu0 0.0
    %4468 = vmatprep.subr.mxu0 0.0
    %4469 = vmatpush1.msra.mxu0 0.0
    %4470 = vmatprep.subr.mxu0 0.0
    %4471 = vmatpush1.msra.mxu0 0.0
    %4472 = vmatprep.subr.mxu0 0.0
    %4473 = vmatpush1.msra.mxu0 0.0
    %4474 = vmatprep.subr.mxu0 0.0
    %4475 = vmatpush1.msra.mxu0 0.0
    %4476 = vmatprep.subr.mxu0 0.0
    %4477 = vmatpush1.msra.mxu0 0.0
    %4478 = vmatprep.subr.mxu0 0.0
    %4479 = vmatpush1.msra.mxu0 0.0
    %4480 = vmatprep.subr.mxu0 0.0
    %4481 = vmatpush1.msra.mxu0 0.0
    %4482 = vmatprep.subr.mxu0 0.0
    %4483 = vmatpush1.msra.mxu0 0.0
    %4484 = vmatprep.subr.mxu0 0.0
    %4485 = vmatpush1.msra.mxu0 0.0
    %4486 = vmatprep.subr.mxu0 0.0
    %4487 = vmatpush1.msra.mxu0 0.0
    %4488 = vmatprep.subr.mxu0 0.0
    %4489 = vmatpush1.msra.mxu0 0.0
    %4490 = vmatprep.subr.mxu0 0.0
    %4491 = vmatpush1.msra.mxu0 0.0
    %4492 = vmatprep.subr.mxu0 0.0
    %4493 = vmatpush1.msra.mxu0 0.0
    %4494 = vmatprep.subr.mxu0 0.0
    %4495 = vmatpush1.msra.mxu0 0.0
    %4496 = vmatprep.subr.mxu0 0.0
    %4497 = vmatpush1.msra.mxu0 0.0
    %4498 = vmatprep.subr.mxu0 0.0
    %4499 = vmatpush1.msra.mxu0 0.0
    %4500 = vmatprep.subr.mxu0 0.0
    %4501 = vmatpush1.msra.mxu0 0.0
    %4502 = vmatprep.subr.mxu0 0.0
    %4503 = vmatpush1.msra.mxu0 0.0
    %4504 = vmatprep.subr.mxu0 0.0
    %4505 = vmatpush1.msra.mxu0 0.0
    %4506 = vmatprep.subr.mxu0 0.0
    %4507 = vmatpush1.msra.mxu0 0.0
    %4508 = vmatprep.subr.mxu0 0.0
    %4509 = vmatpush1.msra.mxu0 0.0
    %4510 = vmatprep.mubr.f32.mxu0 0.0
    %4511 = vmatmul.mubr.f32.gmra.mrb[0].mxu0 %v3006
    %v4512 = vpop.f32.mrb[0].mxu0
    %v4513 = vadd.f32 0.0, %v4512
    %v4514 = vpop.f32.mrb[0].mxu0
    %4515 = vdwg.mxu0
    %v4516 = vmul.f32 %v4513, 2.0
    %v4517 = vsub.f32 %v4516, %v4373
    %4518 = vmatprep.subr.mxu0 0.0
    %4519 = vmatpush1.msra.mxu0 %v4517
    %4520 = vmatprep.subr.mxu0 0.0
    %4521 = vmatpush1.msra.mxu0 0.0
    %4522 = vmatprep.subr.mxu0 0.0
    %4523 = vmatpush1.msra.mxu0 0.0
    %4524 = vmatprep.subr.mxu0 0.0
    %4525 = vmatpush1.msra.mxu0 0.0
    %4526 = vmatprep.subr.mxu0 0.0
    %4527 = vmatpush1.msra.mxu0 0.0
    %4528 = vmatprep.subr.mxu0 0.0
    %4529 = vmatpush1.msra.mxu0 0.0
    %4530 = vmatprep.subr.mxu0 0.0
    %4531 = vmatpush1.msra.mxu0 0.0
    %4532 = vmatprep.subr.mxu0 0.0
    %4533 = vmatpush1.msra.mxu0 0.0
    %4534 = vmatprep.subr.mxu0 0.0
    %4535 = vmatpush1.msra.mxu0 0.0
    %4536 = vmatprep.subr.mxu0 0.0
    %4537 = vmatpush1.msra.mxu0 0.0
    %4538 = vmatprep.subr.mxu0 0.0
    %4539 = vmatpush1.msra.mxu0 0.0
    %4540 = vmatprep.subr.mxu0 0.0
    %4541 = vmatpush1.msra.mxu0 0.0
    %4542 = vmatprep.subr.mxu0 0.0
    %4543 = vmatpush1.msra.mxu0 0.0
    %4544 = vmatprep.subr.mxu0 0.0
    %4545 = vmatpush1.msra.mxu0 0.0
    %4546 = vmatprep.subr.mxu0 0.0
    %4547 = vmatpush1.msra.mxu0 0.0
    %4548 = vmatprep.subr.mxu0 0.0
    %4549 = vmatpush1.msra.mxu0 0.0
    %4550 = vmatprep.subr.mxu0 0.0
    %4551 = vmatpush1.msra.mxu0 0.0
    %4552 = vmatprep.subr.mxu0 0.0
    %4553 = vmatpush1.msra.mxu0 0.0
    %4554 = vmatprep.subr.mxu0 0.0
    %4555 = vmatpush1.msra.mxu0 0.0
    %4556 = vmatprep.subr.mxu0 0.0
    %4557 = vmatpush1.msra.mxu0 0.0
    %4558 = vmatprep.subr.mxu0 0.0
    %4559 = vmatpush1.msra.mxu0 0.0
    %4560 = vmatprep.subr.mxu0 0.0
    %4561 = vmatpush1.msra.mxu0 0.0
    %4562 = vmatprep.subr.mxu0 0.0
    %4563 = vmatpush1.msra.mxu0 0.0
    %4564 = vmatprep.subr.mxu0 0.0
    %4565 = vmatpush1.msra.mxu0 0.0
    %4566 = vmatprep.subr.mxu0 0.0
    %4567 = vmatpush1.msra.mxu0 0.0
    %4568 = vmatprep.subr.mxu0 0.0
    %4569 = vmatpush1.msra.mxu0 0.0
    %4570 = vmatprep.subr.mxu0 0.0
    %4571 = vmatpush1.msra.mxu0 0.0
    %4572 = vmatprep.subr.mxu0 0.0
    %4573 = vmatpush1.msra.mxu0 0.0
    %4574 = vmatprep.subr.mxu0 0.0
    %4575 = vmatpush1.msra.mxu0 0.0
    %4576 = vmatprep.subr.mxu0 0.0
    %4577 = vmatpush1.msra.mxu0 0.0
    %4578 = vmatprep.subr.mxu0 0.0
    %4579 = vmatpush1.msra.mxu0 0.0
    %4580 = vmatprep.subr.mxu0 0.0
    %4581 = vmatpush1.msra.mxu0 0.0
    %4582 = vmatprep.mubr.f32.mxu0 0.0
    %4583 = vmatmul.mubr.f32.gmra.mrb[0].mxu0 %v3006
    %v4584 = vpop.f32.mrb[0].mxu0
    %v4585 = vadd.f32 0.0, %v4584
    %v4586 = vpop.f32.mrb[0].mxu0
    %4587 = vdwg.mxu0
    %v4588 = vmul.f32 %v4585, 2.0
    %v4589 = vsub.f32 %v4588, %v4445
    %4590 = vmatprep.subr.mxu0 0.0
    %4591 = vmatpush1.msra.mxu0 %v4589
    %4592 = vmatprep.subr.mxu0 0.0
    %4593 = vmatpush1.msra.mxu0 0.0
    %4594 = vmatprep.subr.mxu0 0.0
    %4595 = vmatpush1.msra.mxu0 0.0
    %4596 = vmatprep.subr.mxu0 0.0
    %4597 = vmatpush1.msra.mxu0 0.0
    %4598 = vmatprep.subr.mxu0 0.0
    %4599 = vmatpush1.msra.mxu0 0.0
    %4600 = vmatprep.subr.mxu0 0.0
    %4601 = vmatpush1.msra.mxu0 0.0
    %4602 = vmatprep.subr.mxu0 0.0
    %4603 = vmatpush1.msra.mxu0 0.0
    %4604 = vmatprep.subr.mxu0 0.0
    %4605 = vmatpush1.msra.mxu0 0.0
    %4606 = vmatprep.subr.mxu0 0.0
    %4607 = vmatpush1.msra.mxu0 0.0
    %4608 = vmatprep.subr.mxu0 0.0
    %4609 = vmatpush1.msra.mxu0 0.0
    %4610 = vmatprep.subr.mxu0 0.0
    %4611 = vmatpush1.msra.mxu0 0.0
    %4612 = vmatprep.subr.mxu0 0.0
    %4613 = vmatpush1.msra.mxu0 0.0
    %4614 = vmatprep.subr.mxu0 0.0
    %4615 = vmatpush1.msra.mxu0 0.0
    %4616 = vmatprep.subr.mxu0 0.0
    %4617 = vmatpush1.msra.mxu0 0.0
    %4618 = vmatprep.subr.mxu0 0.0
    %4619 = vmatpush1.msra.mxu0 0.0
    %4620 = vmatprep.subr.mxu0 0.0
    %4621 = vmatpush1.msra.mxu0 0.0
    %4622 = vmatprep.subr.mxu0 0.0
    %4623 = vmatpush1.msra.mxu0 0.0
    %4624 = vmatprep.subr.mxu0 0.0
    %4625 = vmatpush1.msra.mxu0 0.0
    %4626 = vmatprep.subr.mxu0 0.0
    %4627 = vmatpush1.msra.mxu0 0.0
    %4628 = vmatprep.subr.mxu0 0.0
    %4629 = vmatpush1.msra.mxu0 0.0
    %4630 = vmatprep.subr.mxu0 0.0
    %4631 = vmatpush1.msra.mxu0 0.0
    %4632 = vmatprep.subr.mxu0 0.0
    %4633 = vmatpush1.msra.mxu0 0.0
    %4634 = vmatprep.subr.mxu0 0.0
    %4635 = vmatpush1.msra.mxu0 0.0
    %4636 = vmatprep.subr.mxu0 0.0
    %4637 = vmatpush1.msra.mxu0 0.0
    %4638 = vmatprep.subr.mxu0 0.0
    %4639 = vmatpush1.msra.mxu0 0.0
    %4640 = vmatprep.subr.mxu0 0.0
    %4641 = vmatpush1.msra.mxu0 0.0
    %4642 = vmatprep.subr.mxu0 0.0
    %4643 = vmatpush1.msra.mxu0 0.0
    %4644 = vmatprep.subr.mxu0 0.0
    %4645 = vmatpush1.msra.mxu0 0.0
    %4646 = vmatprep.subr.mxu0 0.0
    %4647 = vmatpush1.msra.mxu0 0.0
    %4648 = vmatprep.subr.mxu0 0.0
    %4649 = vmatpush1.msra.mxu0 0.0
    %4650 = vmatprep.subr.mxu0 0.0
    %4651 = vmatpush1.msra.mxu0 0.0
    %4652 = vmatprep.subr.mxu0 0.0
    %4653 = vmatpush1.msra.mxu0 0.0
    %4654 = vmatprep.mubr.f32.mxu0 0.0
    %4655 = vmatmul.mubr.f32.gmra.mrb[0].mxu0 %v3006
    %v4656 = vpop.f32.mrb[0].mxu0
    %v4657 = vadd.f32 0.0, %v4656
    %v4658 = vpop.f32.mrb[0].mxu0
    %4659 = vdwg.mxu0
    %v4660 = vmul.f32 %v4657, 2.0
    %v4661 = vsub.f32 %v4660, %v4517
    %4662 = vmatprep.subr.mxu0 0.0
    %4663 = vmatpush1.msra.mxu0 %v4661
    %4664 = vmatprep.subr.mxu0 0.0
    %4665 = vmatpush1.msra.mxu0 0.0
    %4666 = vmatprep.subr.mxu0 0.0
    %4667 = vmatpush1.msra.mxu0 0.0
    %4668 = vmatprep.subr.mxu0 0.0
    %4669 = vmatpush1.msra.mxu0 0.0
    %4670 = vmatprep.subr.mxu0 0.0
    %4671 = vmatpush1.msra.mxu0 0.0
    %4672 = vmatprep.subr.mxu0 0.0
    %4673 = vmatpush1.msra.mxu0 0.0
    %4674 = vmatprep.subr.mxu0 0.0
    %4675 = vmatpush1.msra.mxu0 0.0
    %4676 = vmatprep.subr.mxu0 0.0
    %4677 = vmatpush1.msra.mxu0 0.0
    %4678 = vmatprep.subr.mxu0 0.0
    %4679 = vmatpush1.msra.mxu0 0.0
    %4680 = vmatprep.subr.mxu0 0.0
    %4681 = vmatpush1.msra.mxu0 0.0
    %4682 = vmatprep.subr.mxu0 0.0
    %4683 = vmatpush1.msra.mxu0 0.0
    %4684 = vmatprep.subr.mxu0 0.0
    %4685 = vmatpush1.msra.mxu0 0.0
    %4686 = vmatprep.subr.mxu0 0.0
    %4687 = vmatpush1.msra.mxu0 0.0
    %4688 = vmatprep.subr.mxu0 0.0
    %4689 = vmatpush1.msra.mxu0 0.0
    %4690 = vmatprep.subr.mxu0 0.0
    %4691 = vmatpush1.msra.mxu0 0.0
    %4692 = vmatprep.subr.mxu0 0.0
    %4693 = vmatpush1.msra.mxu0 0.0
    %4694 = vmatprep.subr.mxu0 0.0
    %4695 = vmatpush1.msra.mxu0 0.0
    %4696 = vmatprep.subr.mxu0 0.0
    %4697 = vmatpush1.msra.mxu0 0.0
    %4698 = vmatprep.subr.mxu0 0.0
    %4699 = vmatpush1.msra.mxu0 0.0
    %4700 = vmatprep.subr.mxu0 0.0
    %4701 = vmatpush1.msra.mxu0 0.0
    %4702 = vmatprep.subr.mxu0 0.0
    %4703 = vmatpush1.msra.mxu0 0.0
    %4704 = vmatprep.subr.mxu0 0.0
    %4705 = vmatpush1.msra.mxu0 0.0
    %4706 = vmatprep.subr.mxu0 0.0
    %4707 = vmatpush1.msra.mxu0 0.0
    %4708 = vmatprep.subr.mxu0 0.0
    %4709 = vmatpush1.msra.mxu0 0.0
    %4710 = vmatprep.subr.mxu0 0.0
    %4711 = vmatpush1.msra.mxu0 0.0
    %4712 = vmatprep.subr.mxu0 0.0
    %4713 = vmatpush1.msra.mxu0 0.0
    %4714 = vmatprep.subr.mxu0 0.0
    %4715 = vmatpush1.msra.mxu0 0.0
    %4716 = vmatprep.subr.mxu0 0.0
    %4717 = vmatpush1.msra.mxu0 0.0
    %4718 = vmatprep.subr.mxu0 0.0
    %4719 = vmatpush1.msra.mxu0 0.0
    %4720 = vmatprep.subr.mxu0 0.0
    %4721 = vmatpush1.msra.mxu0 0.0
    %4722 = vmatprep.subr.mxu0 0.0
    %4723 = vmatpush1.msra.mxu0 0.0
    %4724 = vmatprep.subr.mxu0 0.0
    %4725 = vmatpush1.msra.mxu0 0.0
    %4726 = vmatprep.mubr.f32.mxu0 0.0
    %4727 = vmatmul.mubr.f32.gmra.mrb[0].mxu0 %v3006
    %v4728 = vpop.f32.mrb[0].mxu0
    %v4729 = vadd.f32 0.0, %v4728
    %v4730 = vpop.f32.mrb[0].mxu0
    %4731 = vdwg.mxu0
    %v4732 = vmul.f32 %v4729, 2.0
    %v4733 = vsub.f32 %v4732, %v4589
    %4735 = vrot.lane.b32.xlu0 %v3075, 16
    %v4736 = vpop.permute.xlu0 %4735
    %4739 = vrot.lane.b32.xlu0 %v3149, 32
    %v4740 = vpop.permute.xlu0 %4739
    %4743 = vrot.lane.b32.xlu0 %v3221, 48
    %v4744 = vpop.permute.xlu0 %4743
    %4747 = vrot.lane.b32.xlu0 %v3293, 64
    %v4748 = vpop.permute.xlu0 %4747
    %4751 = vrot.lane.b32.xlu0 %v3365, 80
    %v4752 = vpop.permute.xlu0 %4751
    %4755 = vrot.lane.b32.xlu0 %v3437, 96
    %v4756 = vpop.permute.xlu0 %4755
    %4759 = vrot.lane.b32.xlu0 %v3509, 112
    %v4760 = vpop.permute.xlu0 %4759
    %4763 = vrot.lane.b32.xlu0 %v3653, 16
    %v4764 = vpop.permute.xlu0 %4763
    %4767 = vrot.lane.b32.xlu0 %v3725, 32
    %v4768 = vpop.permute.xlu0 %4767
    %4771 = vrot.lane.b32.xlu0 %v3797, 48
    %v4772 = vpop.permute.xlu0 %4771
    %4775 = vrot.lane.b32.xlu0 %v3869, 64
    %v4776 = vpop.permute.xlu0 %4775
    %4779 = vrot.lane.b32.xlu0 %v3941, 80
    %v4780 = vpop.permute.xlu0 %4779
    %4783 = vrot.lane.b32.xlu0 %v4013, 96
    %v4784 = vpop.permute.xlu0 %4783
    %4787 = vrot.lane.b32.xlu0 %v4085, 112
    %v4788 = vpop.permute.xlu0 %4787
    %v4790 = vsel %vm2567, %v3003, %v4736
    %v4791 = vsel %vm75, %v4790, %v4740
    %v4792 = vsel %vm2606, %v4791, %v4744
    %v4793 = vsel %vm2802, %v4792, %v4748
    %vm4794 = vcmask 654336
    %v4795 = vsel %vm4794, %v4793, %v4752
    %vm4796 = vcmask 785408
    %v4797 = vsel %vm4796, %v4795, %v4756
    %vm4798 = vcmask 916480
    %v4799 = vsel %vm4798, %v4797, %v4760
    %v4800 = vsel %vm2567, %v3581, %v4764
    %v4801 = vsel %vm75, %v4800, %v4768
    %v4802 = vsel %vm2606, %v4801, %v4772
    %v4803 = vsel %vm2802, %v4802, %v4776
    %v4804 = vsel %vm4794, %v4803, %v4780
    %v4805 = vsel %vm4796, %v4804, %v4784
    %v4806 = vsel %vm4798, %v4805, %v4788
    %4808 = vrot.lane.b32.xlu0 %v4229, 16
    %v4809 = vpop.permute.xlu0 %4808
    %4812 = vrot.lane.b32.xlu0 %v4301, 32
    %v4813 = vpop.permute.xlu0 %4812
    %4816 = vrot.lane.b32.xlu0 %v4373, 48
    %v4817 = vpop.permute.xlu0 %4816
    %4820 = vrot.lane.b32.xlu0 %v4445, 64
    %v4821 = vpop.permute.xlu0 %4820
    %4824 = vrot.lane.b32.xlu0 %v4517, 80
    %v4825 = vpop.permute.xlu0 %4824
    %4828 = vrot.lane.b32.xlu0 %v4589, 96
    %v4829 = vpop.permute.xlu0 %4828
    %4832 = vrot.lane.b32.xlu0 %v4661, 112
    %v4833 = vpop.permute.xlu0 %4832
    %v4835 = vsel %vm2567, %v4157, %v4809
    %v4836 = vsel %vm75, %v4835, %v4813
    %v4837 = vsel %vm2606, %v4836, %v4817
    %v4838 = vsel %vm2802, %v4837, %v4821
    %v4839 = vsel %vm4794, %v4838, %v4825
    %v4840 = vsel %vm4796, %v4839, %v4829
    %v4841 = vsel %vm4798, %v4840, %v4833
    %v4842 = vld [vmem:[%s5] sm:$0xff]
    %v4843 = vld [vmem:[%s5 + $0x8] sm:$0xff]
    %v4844 = vld [vmem:[%s5 + $0x10] sm:$0xff]
    %v4845 = vld [vmem:[%s5 + $0x18] sm:$0xff]
    %v4846 = vld [vmem:[%s5 + $0x20] sm:$0xff]
    %v4847 = vld [vmem:[%s5 + $0x28] sm:$0xff]
    %v4848 = vld [vmem:[%s5 + $0x30] sm:$0xff]
    %v4849 = vld [vmem:[%s5 + $0x38] sm:$0xff]
    %v4850 = vld [vmem:[%s5 + $0x40] sm:$0xff]
    %v4851 = vld [vmem:[%s5 + $0x48] sm:$0xff]
    %v4852 = vld [vmem:[%s5 + $0x50] sm:$0xff]
    %v4853 = vld [vmem:[%s5 + $0x58] sm:$0xff]
    %v4854 = vld [vmem:[%s5 + $0x60] sm:$0xff]
    %v4855 = vld [vmem:[%s5 + $0x68] sm:$0xff]
    %v4856 = vld [vmem:[%s5 + $0x70] sm:$0xff]
    %v4857 = vld [vmem:[%s5 + $0x78] sm:$0xff]
    %v4858 = vld [vmem:[%s5 + $0x80] sm:$0xff]
    %v4859 = vld [vmem:[%s5 + $0x88] sm:$0xff]
    %v4860 = vld [vmem:[%s5 + $0x90] sm:$0xff]
    %v4861 = vld [vmem:[%s5 + $0x98] sm:$0xff]
    %v4862 = vld [vmem:[%s5 + $0xa0] sm:$0xff]
    %v4863 = vld [vmem:[%s5 + $0xa8] sm:$0xff]
    %v4864 = vld [vmem:[%s5 + $0xb0] sm:$0xff]
    %v4865 = vld [vmem:[%s5 + $0xb8] sm:$0xff]
    %v4866 = vld [vmem:[%s5 + $0xc0] sm:$0xff]
    %v4867 = vld [vmem:[%s5 + $0xc8] sm:$0xff]
    %v4868 = vld [vmem:[%s5 + $0xd0] sm:$0xff]
    %v4869 = vld [vmem:[%s5 + $0xd8] sm:$0xff]
    %v4870 = vld [vmem:[%s5 + $0xe0] sm:$0xff]
    %v4871 = vld [vmem:[%s5 + $0xe8] sm:$0xff]
    %v4872 = vld [vmem:[%s5 + $0xf0] sm:$0xff]
    %v4873 = vld [vmem:[%s5 + $0xf8] sm:$0xff]
    %v4874 = vld [vmem:[%s5 + $0x100] sm:$0xff]
    %v4875 = vld [vmem:[%s5 + $0x108] sm:$0xff]
    %v4876 = vld [vmem:[%s5 + $0x110] sm:$0xff]
    %v4877 = vld [vmem:[%s5 + $0x118] sm:$0xff]
    %v4878 = vld [vmem:[%s5 + $0x120] sm:$0xff]
    %v4879 = vld [vmem:[%s5 + $0x128] sm:$0xff]
    %v4880 = vld [vmem:[%s5 + $0x130] sm:$0xff]
    %v4881 = vld [vmem:[%s5 + $0x138] sm:$0xff]
    %v4882 = vld [vmem:[%s5 + $0x140] sm:$0xff]
    %v4883 = vld [vmem:[%s5 + $0x148] sm:$0xff]
    %v4884 = vld [vmem:[%s5 + $0x150] sm:$0xff]
    %v4885 = vld [vmem:[%s5 + $0x158] sm:$0xff]
    %v4886 = vld [vmem:[%s5 + $0x160] sm:$0xff]
    %v4887 = vld [vmem:[%s5 + $0x168] sm:$0xff]
    %v4888 = vld [vmem:[%s5 + $0x170] sm:$0xff]
    %v4889 = vld [vmem:[%s5 + $0x178] sm:$0xff]
    %v4890 = vld [vmem:[%s5 + $0x180] sm:$0xff]
    %v4891 = vld [vmem:[%s5 + $0x188] sm:$0xff]
    %v4892 = vld [vmem:[%s6] sm:$0x1]
    %v4894 = vlaneseq
    %v4895 = vshrl.u32 %v4894, 7
    %v4896 = vsub.s32 0, %v4895
    %v4897 = vrot.slane %v4892, %v4896
    %v4900 = vsel %vm2567, %v4733, 0
    %4902 = vmatprep.subr.mxu0 0.0
    %4903 = vmatpush1.msra.mxu0 %v4842
    %4904 = vmatprep.subr.mxu0 0.0
    %4905 = vmatpush1.msra.mxu0 %v4843
    %4906 = vmatprep.subr.mxu0 0.0
    %4907 = vmatpush1.msra.mxu0 %v4844
    %4908 = vmatprep.subr.mxu0 0.0
    %4909 = vmatpush1.msra.mxu0 %v4845
    %4910 = vmatprep.subr.mxu0 0.0
    %4911 = vmatpush1.msra.mxu0 %v4846
    %4912 = vmatprep.subr.mxu0 0.0
    %4913 = vmatpush1.msra.mxu0 %v4847
    %4914 = vmatprep.subr.mxu0 0.0
    %4915 = vmatpush1.msra.mxu0 %v4848
    %4916 = vmatprep.subr.mxu0 0.0
    %4917 = vmatpush1.msra.mxu0 %v4849
    %4918 = vmatprep.subr.mxu0 0.0
    %4919 = vmatpush1.msra.mxu0 %v4850
    %4920 = vmatprep.subr.mxu0 0.0
    %4921 = vmatpush1.msra.mxu0 %v4851
    %4922 = vmatprep.subr.mxu0 0.0
    %4923 = vmatpush1.msra.mxu0 %v4852
    %4924 = vmatprep.subr.mxu0 0.0
    %4925 = vmatpush1.msra.mxu0 %v4853
    %4926 = vmatprep.subr.mxu0 0.0
    %4927 = vmatpush1.msra.mxu0 %v4854
    %4928 = vmatprep.subr.mxu0 0.0
    %4929 = vmatpush1.msra.mxu0 %v4855
    %4930 = vmatprep.subr.mxu0 0.0
    %4931 = vmatpush1.msra.mxu0 %v4856
    %4932 = vmatprep.subr.mxu0 0.0
    %4933 = vmatpush1.msra.mxu0 %v4857
    %4934 = vmatprep.subr.mxu0 0.0
    %4935 = vmatpush1.msra.mxu0 %v4858
    %4936 = vmatprep.subr.mxu0 0.0
    %4937 = vmatpush1.msra.mxu0 %v4859
    %4938 = vmatprep.subr.mxu0 0.0
    %4939 = vmatpush1.msra.mxu0 %v4860
    %4940 = vmatprep.subr.mxu0 0.0
    %4941 = vmatpush1.msra.mxu0 %v4861
    %4942 = vmatprep.subr.mxu0 0.0
    %4943 = vmatpush1.msra.mxu0 %v4862
    %4944 = vmatprep.subr.mxu0 0.0
    %4945 = vmatpush1.msra.mxu0 %v4863
    %4946 = vmatprep.subr.mxu0 0.0
    %4947 = vmatpush1.msra.mxu0 %v4864
    %4948 = vmatprep.subr.mxu0 0.0
    %4949 = vmatpush1.msra.mxu0 %v4865
    %4950 = vmatprep.subr.mxu0 0.0
    %4951 = vmatpush1.msra.mxu0 %v4866
    %4952 = vmatprep.subr.mxu0 0.0
    %4953 = vmatpush1.msra.mxu0 %v4867
    %4954 = vmatprep.subr.mxu0 0.0
    %4955 = vmatpush1.msra.mxu0 %v4868
    %4956 = vmatprep.subr.mxu0 0.0
    %4957 = vmatpush1.msra.mxu0 %v4869
    %4958 = vmatprep.subr.mxu0 0.0
    %4959 = vmatpush1.msra.mxu0 %v4870
    %4960 = vmatprep.subr.mxu0 0.0
    %4961 = vmatpush1.msra.mxu0 %v4871
    %4962 = vmatprep.subr.mxu0 0.0
    %4963 = vmatpush1.msra.mxu0 %v4872
    %4964 = vmatprep.subr.mxu0 0.0
    %4965 = vmatpush1.msra.mxu0 %v4873
    %4966 = vmatprep.mubr.f32.mxu0 %v4806
    %4967 = vmatmul.mubr.f32.gmra.mrb[0].mxu0 %v4799
    %v4968 = vpop.f32.mrb[0].mxu0
    %v4969 = vadd.f32 %v4897, %v4968
    %v4970 = vpop.f32.mrb[0].mxu0
    %4971 = vdwg.mxu0
    %4972 = vmatprep.subr.mxu0 0.0
    %4973 = vmatpush1.msra.mxu0 %v4874
    %4974 = vmatprep.subr.mxu0 0.0
    %4975 = vmatpush1.msra.mxu0 %v4875
    %4976 = vmatprep.subr.mxu0 0.0
    %4977 = vmatpush1.msra.mxu0 %v4876
    %4978 = vmatprep.subr.mxu0 0.0
    %4979 = vmatpush1.msra.mxu0 %v4877
    %4980 = vmatprep.subr.mxu0 0.0
    %4981 = vmatpush1.msra.mxu0 %v4878
    %4982 = vmatprep.subr.mxu0 0.0
    %4983 = vmatpush1.msra.mxu0 %v4879
    %4984 = vmatprep.subr.mxu0 0.0
    %4985 = vmatpush1.msra.mxu0 %v4880
    %4986 = vmatprep.subr.mxu0 0.0
    %4987 = vmatpush1.msra.mxu0 %v4881
    %4988 = vmatprep.subr.mxu0 0.0
    %4989 = vmatpush1.msra.mxu0 %v4882
    %4990 = vmatprep.subr.mxu0 0.0
    %4991 = vmatpush1.msra.mxu0 %v4883
    %4992 = vmatprep.subr.mxu0 0.0
    %4993 = vmatpush1.msra.mxu0 %v4884
    %4994 = vmatprep.subr.mxu0 0.0
    %4995 = vmatpush1.msra.mxu0 %v4885
    %4996 = vmatprep.subr.mxu0 0.0
    %4997 = vmatpush1.msra.mxu0 %v4886
    %4998 = vmatprep.subr.mxu0 0.0
    %4999 = vmatpush1.msra.mxu0 %v4887
    %5000 = vmatprep.subr.mxu0 0.0
    %5001 = vmatpush1.msra.mxu0 %v4888
    %5002 = vmatprep.subr.mxu0 0.0
    %5003 = vmatpush1.msra.mxu0 %v4889
    %5004 = vmatprep.subr.mxu0 0.0
    %5005 = vmatpush1.msra.mxu0 %v4890
    %5006 = vmatprep.subr.mxu0 0.0
    %5007 = vmatpush1.msra.mxu0 %v4891
    %5008 = vmatprep.subr.mxu0 0.0
    %5009 = vmatpush1.msra.mxu0 0.0
    %5010 = vmatprep.subr.mxu0 0.0
    %5011 = vmatpush1.msra.mxu0 0.0
    %5012 = vmatprep.subr.mxu0 0.0
    %5013 = vmatpush1.msra.mxu0 0.0
    %5014 = vmatprep.subr.mxu0 0.0
    %5015 = vmatpush1.msra.mxu0 0.0
    %5016 = vmatprep.subr.mxu0 0.0
    %5017 = vmatpush1.msra.mxu0 0.0
    %5018 = vmatprep.subr.mxu0 0.0
    %5019 = vmatpush1.msra.mxu0 0.0
    %5020 = vmatprep.subr.mxu0 0.0
    %5021 = vmatpush1.msra.mxu0 0.0
    %5022 = vmatprep.subr.mxu0 0.0
    %5023 = vmatpush1.msra.mxu0 0.0
    %5024 = vmatprep.subr.mxu0 0.0
    %5025 = vmatpush1.msra.mxu0 0.0
    %5026 = vmatprep.subr.mxu0 0.0
    %5027 = vmatpush1.msra.mxu0 0.0
    %5028 = vmatprep.subr.mxu0 0.0
    %5029 = vmatpush1.msra.mxu0 0.0
    %5030 = vmatprep.subr.mxu0 0.0
    %5031 = vmatpush1.msra.mxu0 0.0
    %5032 = vmatprep.subr.mxu0 0.0
    %5033 = vmatpush1.msra.mxu0 0.0
    %5034 = vmatprep.subr.mxu0 0.0
    %5035 = vmatpush1.msra.mxu0 0.0
    %5036 = vmatprep.mubr.f32.mxu0 %v4900
    %5037 = vmatmul.mubr.f32.gmra.mrb[0].mxu0 %v4841
    %v5038 = vpop.f32.mrb[0].mxu0
    %v5039 = vadd.f32 %v4969, %v5038
    %v5040 = vpop.f32.mrb[0].mxu0
    %5041 = vdwg.mxu0
    %v5042 = vmax.f32 %v5039, 0.0
    %vm5043 = vcmask 257024
    %v5044 = vsel %vm5043, %v5042, -inf
    %v5045 = vrot.slane %v5044, 4
    %v5046 = vmax.f32 %v5044, %v5045
    %v5047 = vrot.slane %v5046, 2
    %v5048 = vmax.f32 %v5046, %v5047
    %v5049 = vrot.slane %v5048, 1
    %v5050 = vmax.f32 %v5048, %v5049
    %vm5051 = vcmask 261124
    %v5052 = vsel %vm5051, %v5042, -inf
    %v5053 = vrot.slane %v5052, 4
    %v5054 = vmax.f32 %v5052, %v5053
    %v5055 = vrot.slane %v5054, 2
    %v5056 = vmax.f32 %v5054, %v5055
    %v5057 = vrot.slane %v5056, 1
    %v5058 = vmax.f32 %v5056, %v5057
    %v5059 = vsel %vm2991, %v5050, %v5058
    %v5061 = vrot.slane %v5059, 1
    %5062 = vrot.lane.b32.xlu0 %v5061, 16
    %v5063 = vpop.permute.xlu0 %5062
    %v5065 = vsel %vm2567, %v5059, %v5063
    %5066 = vrot.lane.b32.xlu0 %v5059, 112
    %v5067 = vpop.permute.xlu0 %5066
    %v5070 = vsel %vm2567, %v5067, %v5061
    %v5072 = vrot.slane %v5070, 7
    %v5074 = vsel %vm2991, %v5065, %v5072
    %v5075 = vld [vmem:[%s7] sm:$0xff]
    %v5076 = vld [vmem:[%s7 + $0x8] sm:$0xff]
    %v5077 = vld [vmem:[%s7 + $0x10] sm:$0xff]
    %v5078 = vld [vmem:[%s7 + $0x18] sm:$0xff]
    %v5079 = vld [vmem:[%s8] sm:$0x1]
    %v5081 = vlaneseq
    %v5082 = vshrl.u32 %v5081, 7
    %v5083 = vsub.s32 0, %v5082
    %v5084 = vrot.slane %v5079, %v5083
    %v5087 = vsel %vm75, %v5074, 0
    %5089 = vmatprep.subr.mxu0 0.0
    %5090 = vmatpush1.msra.mxu0 %v5075
    %5091 = vmatprep.subr.mxu0 0.0
    %5092 = vmatpush1.msra.mxu0 %v5076
    %5093 = vmatprep.subr.mxu0 0.0
    %5094 = vmatpush1.msra.mxu0 %v5077
    %5095 = vmatprep.subr.mxu0 0.0
    %5096 = vmatpush1.msra.mxu0 %v5078
    %5097 = vmatprep.subr.mxu0 0.0
    %5098 = vmatpush1.msra.mxu0 0.0
    %5099 = vmatprep.subr.mxu0 0.0
    %5100 = vmatpush1.msra.mxu0 0.0
    %5101 = vmatprep.subr.mxu0 0.0
    %5102 = vmatpush1.msra.mxu0 0.0
    %5103 = vmatprep.subr.mxu0 0.0
    %5104 = vmatpush1.msra.mxu0 0.0
    %5105 = vmatprep.subr.mxu0 0.0
    %5106 = vmatpush1.msra.mxu0 0.0
    %5107 = vmatprep.subr.mxu0 0.0
    %5108 = vmatpush1.msra.mxu0 0.0
    %5109 = vmatprep.subr.mxu0 0.0
    %5110 = vmatpush1.msra.mxu0 0.0
    %5111 = vmatprep.subr.mxu0 0.0
    %5112 = vmatpush1.msra.mxu0 0.0
    %5113 = vmatprep.subr.mxu0 0.0
    %5114 = vmatpush1.msra.mxu0 0.0
    %5115 = vmatprep.subr.mxu0 0.0
    %5116 = vmatpush1.msra.mxu0 0.0
    %5117 = vmatprep.subr.mxu0 0.0
    %5118 = vmatpush1.msra.mxu0 0.0
    %5119 = vmatprep.subr.mxu0 0.0
    %5120 = vmatpush1.msra.mxu0 0.0
    %5121 = vmatprep.subr.mxu0 0.0
    %5122 = vmatpush1.msra.mxu0 0.0
    %5123 = vmatprep.subr.mxu0 0.0
    %5124 = vmatpush1.msra.mxu0 0.0
    %5125 = vmatprep.subr.mxu0 0.0
    %5126 = vmatpush1.msra.mxu0 0.0
    %5127 = vmatprep.subr.mxu0 0.0
    %5128 = vmatpush1.msra.mxu0 0.0
    %5129 = vmatprep.subr.mxu0 0.0
    %5130 = vmatpush1.msra.mxu0 0.0
    %5131 = vmatprep.subr.mxu0 0.0
    %5132 = vmatpush1.msra.mxu0 0.0
    %5133 = vmatprep.subr.mxu0 0.0
    %5134 = vmatpush1.msra.mxu0 0.0
    %5135 = vmatprep.subr.mxu0 0.0
    %5136 = vmatpush1.msra.mxu0 0.0
    %5137 = vmatprep.subr.mxu0 0.0
    %5138 = vmatpush1.msra.mxu0 0.0
    %5139 = vmatprep.subr.mxu0 0.0
    %5140 = vmatpush1.msra.mxu0 0.0
    %5141 = vmatprep.subr.mxu0 0.0
    %5142 = vmatpush1.msra.mxu0 0.0
    %5143 = vmatprep.subr.mxu0 0.0
    %5144 = vmatpush1.msra.mxu0 0.0
    %5145 = vmatprep.subr.mxu0 0.0
    %5146 = vmatpush1.msra.mxu0 0.0
    %5147 = vmatprep.subr.mxu0 0.0
    %5148 = vmatpush1.msra.mxu0 0.0
    %5149 = vmatprep.subr.mxu0 0.0
    %5150 = vmatpush1.msra.mxu0 0.0
    %5151 = vmatprep.subr.mxu0 0.0
    %5152 = vmatpush1.msra.mxu0 0.0
    %5153 = vmatprep.mubr.f32.mxu0 0.0
    %5154 = vmatmul.mubr.f32.gmra.mrb[0].mxu0 %v5087
    %v5155 = vpop.f32.mrb[0].mxu0
    %v5156 = vadd.f32 %v5084, %v5155
    %v5157 = vpop.f32.mrb[0].mxu0
    %5158 = vdwg.mxu0
    %v5159 = vmax.f32 %v5156, 0.0
    %v5160 = vld [vmem:[%s9] sm:$0x3]
    %v5161 = vmul.f32 %v5159, %v5160
    %v5162 = vld [vmem:[%s10] sm:$0xff]
    %v5163 = vld [vmem:[%s11] sm:$0x1]
    %v5165 = vlaneseq
    %v5166 = vshrl.u32 %v5165, 7
    %v5167 = vsub.s32 0, %v5166
    %v5168 = vrot.slane %v5163, %v5167
    %v5171 = vsel %vm2557, %v5161, 0
    %5173 = vmatprep.subr.mxu0 0.0
    %5174 = vmatpush1.msra.mxu0 %v5162
    %5175 = vmatprep.subr.mxu0 0.0
    %5176 = vmatpush1.msra.mxu0 0.0
    %5177 = vmatprep.subr.mxu0 0.0
    %5178 = vmatpush1.msra.mxu0 0.0
    %5179 = vmatprep.subr.mxu0 0.0
    %5180 = vmatpush1.msra.mxu0 0.0
    %5181 = vmatprep.subr.mxu0 0.0
    %5182 = vmatpush1.msra.mxu0 0.0
    %5183 = vmatprep.subr.mxu0 0.0
    %5184 = vmatpush1.msra.mxu0 0.0
    %5185 = vmatprep.subr.mxu0 0.0
    %5186 = vmatpush1.msra.mxu0 0.0
    %5187 = vmatprep.subr.mxu0 0.0
    %5188 = vmatpush1.msra.mxu0 0.0
    %5189 = vmatprep.subr.mxu0 0.0
    %5190 = vmatpush1.msra.mxu0 0.0
    %5191 = vmatprep.subr.mxu0 0.0
    %5192 = vmatpush1.msra.mxu0 0.0
    %5193 = vmatprep.subr.mxu0 0.0
    %5194 = vmatpush1.msra.mxu0 0.0
    %5195 = vmatprep.subr.mxu0 0.0
    %5196 = vmatpush1.msra.mxu0 0.0
    %5197 = vmatprep.subr.mxu0 0.0
    %5198 = vmatpush1.msra.mxu0 0.0
    %5199 = vmatprep.subr.mxu0 0.0
    %5200 = vmatpush1.msra.mxu0 0.0
    %5201 = vmatprep.subr.mxu0 0.0
    %5202 = vmatpush1.msra.mxu0 0.0
    %5203 = vmatprep.subr.mxu0 0.0
    %5204 = vmatpush1.msra.mxu0 0.0
    %5205 = vmatprep.subr.mxu0 0.0
    %5206 = vmatpush1.msra.mxu0 0.0
    %5207 = vmatprep.subr.mxu0 0.0
    %5208 = vmatpush1.msra.mxu0 0.0
    %5209 = vmatprep.subr.mxu0 0.0
    %5210 = vmatpush1.msra.mxu0 0.0
    %5211 = vmatprep.subr.mxu0 0.0
    %5212 = vmatpush1.msra.mxu0 0.0
    %5213 = vmatprep.subr.mxu0 0.0
    %5214 = vmatpush1.msra.mxu0 0.0
    %5215 = vmatprep.subr.mxu0 0.0
    %5216 = vmatpush1.msra.mxu0 0.0
    %5217 = vmatprep.subr.mxu0 0.0
    %5218 = vmatpush1.msra.mxu0 0.0
    %5219 = vmatprep.subr.mxu0 0.0
    %5220 = vmatpush1.msra.mxu0 0.0
    %5221 = vmatprep.subr.mxu0 0.0
    %5222 = vmatpush1.msra.mxu0 0.0
    %5223 = vmatprep.subr.mxu0 0.0
    %5224 = vmatpush1.msra.mxu0 0.0
    %5225 = vmatprep.subr.mxu0 0.0
    %5226 = vmatpush1.msra.mxu0 0.0
    %5227 = vmatprep.subr.mxu0 0.0
    %5228 = vmatpush1.msra.mxu0 0.0
    %5229 = vmatprep.subr.mxu0 0.0
    %5230 = vmatpush1.msra.mxu0 0.0
    %5231 = vmatprep.subr.mxu0 0.0
    %5232 = vmatpush1.msra.mxu0 0.0
    %5233 = vmatprep.subr.mxu0 0.0
    %5234 = vmatpush1.msra.mxu0 0.0
    %5235 = vmatprep.subr.mxu0 0.0
    %5236 = vmatpush1.msra.mxu0 0.0
    %5237 = vmatprep.mubr.f32.mxu0 0.0
    %5238 = vmatmul.mubr.f32.gmra.mrb[0].mxu0 %v5171
    %v5239 = vpop.f32.mrb[0].mxu0
    %v5240 = vadd.f32 %v5168, %v5239
    %v5241 = vpop.f32.mrb[0].mxu0
    %5242 = vdwg.mxu0
    %vm5243 = vcmask 9216
    %5244 = vst.msk [vmem:[#allocation2] sm:$0x3] %vm5243, %v5240
    // Predicated region
    $region50: #{tpu_custom_call.1} parent=1 // pred_check
      _
    $region51: #{tpu_custom_call.1} parent=1 // pred_check_branch
      %5246 = sbr.rel (0) target = $region53
    $region52: #{tpu_custom_call.1} parent=1 // pred_region
      %s5248 = ssub.s32 32, 32
      %5249 = vsyncadd [#allocation3], %s5248
      %s5251 = sshll.u32 [#allocation2], 4
      %s5252 = int_to_ptr.vmem [resolvable:$true] %s5251
      %5254 = dma.vmem_to_hbm [thread:$0]  %s5252, 32, %s12, [#allocation3]
    $region53: #{tpu_custom_call.1} parent=1 // pred_fallthru
      _
    // Predicated region
    $region54: #{tpu_custom_call.1} parent=1 // pred_check
      _
    $region55: #{tpu_custom_call.1} parent=1 // pred_check_branch
      %5256 = sbr.rel (0) target = $region57
    $region56: #{tpu_custom_call.1} parent=1 // pred_region
      %5257 = dma.done [#allocation3], 32
    $region57: #{tpu_custom_call.1} parent=1 // pred_fallthru
      _
    %5258 = vsyncpa [#allocation3], 1

</llo_original>
